<compile_context>
chip_gen: v7x
topology: tpu7x:2x2x1
jax: 0.10.0
libtpu: 0.0.40
codegen_flags: <defaults>
</compile_context>

<pallas_src>
import math
import functools

import jax
import jax.numpy as jnp
from jax.experimental import pallas as pl
from jax.experimental.pallas import tpu as pltpu

# ----------------------------- model hyperparams -----------------------------
VOCAB_SIZE = 64
HIDDEN = 32
SEQ_LEN = 8
N_HEADS = 4
N_CLASSES = 4
TRANS_DEPTH = 2
BATCH = 2

CLASS_PAD = 128          # lane-dense width for the projection output
OUT_ROWS = 8             # sublane-dense height for the projection output

SELU_ALPHA = 1.6732632423543772
SELU_SCALE = 1.0507009873554805
LN_EPS = 1e-5


def _layernorm(x, gamma, beta):
    mu = jnp.mean(x, axis=-1, keepdims=True)
    var = jnp.mean((x - mu) ** 2, axis=-1, keepdims=True)
    return (x - mu) * jax.lax.rsqrt(var + LN_EPS) * gamma + beta


# ------------------------------ fused Pallas kernel ---------------------------
def fused_forward_kernel(ids_ref, a_ref, b_ref, m_ref, o_ref, *,
                         batch, seq, n_heads, depth, hidden, vocab):
    bs = batch * seq
    hd = hidden // n_heads
    h4 = 4 * hidden

    # ---- unpack slab A (last-dim = H matrices), static sublane-aligned slices ----
    A = a_ref[...]
    off = 0
    embed = A[off:off + vocab]; off += vocab          # (V, H)
    pos = A[off:off + bs]; off += bs                  # (bs, H)  batch-tiled pos enc
    wq = A[off:off + hidden]; off += hidden           # (H, H)   pre-scaled by 1/sqrt(hd)
    wk = A[off:off + hidden]; off += hidden
    wv = A[off:off + hidden]; off += hidden
    wo = A[off:off + hidden]; off += hidden
    w2 = A[off:off + h4]; off += h4                   # (4H, H)

    # ---- unpack slab B (last-dim = 128): w1, wp, bias / LN rows ------------------
    Bm = b_ref[...]
    w1 = Bm[0:hidden, :]                              # (H, 4H)
    wp = Bm[hidden:2 * hidden, :]                     # (H, 128) lane-padded proj
    r = 2 * hidden
    bq = Bm[r + 0:r + 1, :hidden]                     # pre-scaled by 1/sqrt(hd)
    bk = Bm[r + 1:r + 2, :hidden]
    bv = Bm[r + 2:r + 3, :hidden]
    bo = Bm[r + 3:r + 4, :hidden]
    g1 = Bm[r + 4:r + 5, :hidden]
    be1 = Bm[r + 5:r + 6, :hidden]
    b1 = Bm[r + 6:r + 7, :]                           # (1, 4H)
    b2 = Bm[r + 7:r + 8, :hidden]
    g2 = Bm[r + 8:r + 9, :hidden]
    be2 = Bm[r + 9:r + 10, :hidden]
    bp = Bm[r + 10:r + 11, :]                         # (1, 128) lane-padded

    # ---- unpack slab C: precomputed additive mask + mean-pool matrix -------------
    M = m_ref[...]
    neg = M[0:bs, :]                                  # (bs, bs) additive mask
    pool = M[bs:bs + OUT_ROWS, :]                     # (8, bs)  rows >= batch are 0

    # ---- 1. token embedding as one-hot matmul (MXU), + positional encoding -------
    ids = ids_ref[...]                                                   # (bs, 1) i32
    onehot = (jax.lax.broadcasted_iota(jnp.int32, (bs, vocab), 1)
              == ids).astype(jnp.float32)                                # (bs, V)
    x = jnp.dot(onehot, embed, preferred_element_type=jnp.float32) + pos  # (bs, H)

    # ---- per-head weight/bias views hoisted out of the depth loop ----------------
    wq_h = [wq[:, h * hd:(h + 1) * hd] for h in range(n_heads)]
    wv_h = [wv[:, h * hd:(h + 1) * hd] for h in range(n_heads)]
    wo_h = [wo[h * hd:(h + 1) * hd, :] for h in range(n_heads)]
    bq_h = [bq[:, h * hd:(h + 1) * hd] for h in range(n_heads)]
    bv_h = [bv[:, h * hd:(h + 1) * hd] for h in range(n_heads)]

    # ---- 2. shared transformer block applied `depth` times (static unroll) -------
    for _ in range(depth):
        k = jnp.dot(x, wk, preferred_element_type=jnp.float32) + bk     # (bs, H)
        kT = k.T                                                        # (H, bs), once/depth
        attn = None
        for h in range(n_heads):                                        # static unroll
            q_h = jnp.dot(x, wq_h[h], preferred_element_type=jnp.float32) + bq_h[h]
            s = jnp.dot(q_h, kT[h * hd:(h + 1) * hd, :],
                        preferred_element_type=jnp.float32) + neg       # scale folded in wq
            s = s - jnp.max(s, axis=-1, keepdims=True)
            p = jnp.exp(s)
            p = p * pl.reciprocal(jnp.sum(p, axis=-1, keepdims=True), approx=True)
            v_h = jnp.dot(x, wv_h[h], preferred_element_type=jnp.float32) + bv_h[h]
            ctx = jnp.dot(p, v_h, preferred_element_type=jnp.float32)   # (bs, hd)
            part = jnp.dot(ctx, wo_h[h], preferred_element_type=jnp.float32)
            attn = part if attn is None else attn + part
        attn = attn + bo
        # TODO(synk): attention/residual dropout omitted (eval mode -> identity).

        h1 = _layernorm(x + attn, g1, be1)
        ff = jnp.maximum(jnp.dot(h1, w1, preferred_element_type=jnp.float32) + b1, 0.0)
        ff = jnp.dot(ff, w2, preferred_element_type=jnp.float32) + b2
        x = _layernorm(h1 + ff, g2, be2)

    # ---- 3. mean pool via constant pooling matrix (MXU), includes padded rows ----
    pooled = jnp.dot(pool, x, preferred_element_type=jnp.float32)       # (8, H)

    # ---- 4. SELU ------------------------------------------------------------------
    act = SELU_SCALE * jnp.where(
        pooled > 0.0, pooled,
        SELU_ALPHA * (jnp.exp(jnp.minimum(pooled, 0.0)) - 1.0))
    # TODO(synk): nn.Dropout(0.3) on pooled features omitted (eval mode -> identity).

    # ---- 5. output projection, fully dense (8, 128) store --------------------------
    o_ref[...] = (jnp.dot(act, wp, preferred_element_type=jnp.float32) + bp
                  ).astype(o_ref.dtype)


# ------------------------------ wrapper ----------------------------------------
def sentence_classifier_forward(params, sentences, pad_mask):
    B, S = sentences.shape
    H, V, C = HIDDEN, VOCAB_SIZE, N_CLASSES
    bs = B * S
    hd = H // N_HEADS
    scale = 1.0 / math.sqrt(hd)

    ids = sentences.reshape(bs, 1).astype(jnp.int32)

    def pad128(row):  # (1, n) -> (1, 128)
        return jnp.pad(row, ((0, 0), (0, CLASS_PAD - row.shape[1])))

    # slab A: everything whose natural last dim is H (all offsets multiples of 8)
    pos_bs = jnp.tile(params["pos_enc"], (B, 1))                          # (bs, H)
    slab_a = jnp.concatenate(
        [params["embed"], pos_bs,
         params["wq"] * scale, params["wk"], params["wv"], params["wo"],
         params["w2"]], axis=0).astype(jnp.float32)                      # (336, H)

    # slab B: lane-dense (., 128) weights + bias/LN rows
    wp_pad = jnp.pad(params["wp"], ((0, 0), (0, CLASS_PAD - C)))
    bias_rows = jnp.concatenate(
        [pad128(params["bq"] * scale), pad128(params["bk"]), pad128(params["bv"]),
         pad128(params["bo"]), pad128(params["ln1_g"]), pad128(params["ln1_b"]),
         pad128(params["b1"]), pad128(params["b2"]),
         pad128(params["ln2_g"]), pad128(params["ln2_b"]),
         pad128(params["bp"])], axis=0)                                   # (11, 128)
    slab_b = jnp.concatenate([params["w1"], wp_pad, bias_rows],
                             axis=0).astype(jnp.float32)                  # (75, 128)

    # slab C: precomputed additive attention mask + mean-pool matrix
    maskf = pad_mask.astype(jnp.float32).reshape(bs)
    bdiag = jnp.kron(jnp.eye(B, dtype=jnp.float32), jnp.ones((S, S), jnp.float32))
    valid = jnp.logical_and(bdiag > 0.5, maskf[None, :] > 0.5)
    neg = jnp.where(valid, 0.0, -1e9).astype(jnp.float32)                 # (bs, bs)
    pool = jnp.zeros((OUT_ROWS, bs), jnp.float32)
    for b in range(B):
        pool = pool.at[b, b * S:(b + 1) * S].set(1.0 / S)
    slab_c = jnp.concatenate([neg, pool], axis=0)                         # (bs+8, bs)

    inputs = [ids, slab_a, slab_b, slab_c]

    out = pl.pallas_call(
        functools.partial(fused_forward_kernel, batch=B, seq=S, n_heads=N_HEADS,
                          depth=TRANS_DEPTH, hidden=H, vocab=V),
        out_shape=jax.ShapeDtypeStruct((OUT_ROWS, CLASS_PAD), jnp.float32),
        grid_spec=pltpu.PrefetchScalarGridSpec(
            num_scalar_prefetch=0,
            grid=(1,),
            in_specs=[pl.BlockSpec(a.shape, lambda i: (0, 0)) for a in inputs],
            out_specs=pl.BlockSpec((OUT_ROWS, CLASS_PAD), lambda i: (0, 0)),
        ),
        compiler_params=pltpu.CompilerParams(
            dimension_semantics=("arbitrary",)),
    )(*inputs)
    return out[:B, :C]


# ------------------------------ parameter init ----------------------------------
def sinusoidal_pos_enc(seq_len, hidden):
    pos = jnp.arange(seq_len, dtype=jnp.float32)[:, None]
    i = jnp.arange(hidden // 2, dtype=jnp.float32)[None, :]
    div = jnp.exp(-math.log(10000.0) * (2.0 * i) / hidden)
    pe = jnp.zeros((seq_len, hidden), dtype=jnp.float32)
    pe = pe.at[:, 0::2].set(jnp.sin(pos * div))
    pe = pe.at[:, 1::2].set(jnp.cos(pos * div))
    return pe


def init_params(key):
    keys = jax.random.split(key, 12)
    H, C, V = HIDDEN, N_CLASSES, VOCAB_SIZE
    s = 0.05
    return {
        "embed": jax.random.normal(keys[0], (V, H), jnp.float32) * s,
        "pos_enc": sinusoidal_pos_enc(SEQ_LEN, H),
        "wq": jax.random.normal(keys[1], (H, H), jnp.float32) * s,
        "bq": jnp.zeros((1, H), jnp.float32),
        "wk": jax.random.normal(keys[2], (H, H), jnp.float32) * s,
        "bk": jnp.zeros((1, H), jnp.float32),
        "wv": jax.random.normal(keys[3], (H, H), jnp.float32) * s,
        "bv": jnp.zeros((1, H), jnp.float32),
        "wo": jax.random.normal(keys[4], (H, H), jnp.float32) * s,
        "bo": jnp.zeros((1, H), jnp.float32),
        "ln1_g": jnp.ones((1, H), jnp.float32),
        "ln1_b": jnp.zeros((1, H), jnp.float32),
        "w1": jax.random.normal(keys[5], (H, 4 * H), jnp.float32) * s,
        "b1": jnp.zeros((1, 4 * H), jnp.float32),
        "w2": jax.random.normal(keys[6], (4 * H, H), jnp.float32) * s,
        "b2": jnp.zeros((1, H), jnp.float32),
        "ln2_g": jnp.ones((1, H), jnp.float32),
        "ln2_b": jnp.zeros((1, H), jnp.float32),
        "wp": jax.random.normal(keys[7], (H, C), jnp.float32) * s,
        "bp": jnp.zeros((1, C), jnp.float32),
    }


# ------------------------------ main --------------------------------------------
if __name__ == "__main__":
    key = jax.random.PRNGKey(0)
    params = init_params(key)

    k_tok, _ = jax.random.split(key)
    sentences = jax.random.randint(k_tok, (BATCH, SEQ_LEN), 0, VOCAB_SIZE, jnp.int32)
    # pad_mask: 1 = valid token, 0 = padding (last 2 positions of batch 1 padded)
    pad_mask = jnp.ones((BATCH, SEQ_LEN), jnp.float32).at[1, -2:].set(0.0)

    logits = jax.jit(sentence_classifier_forward)(params, sentences, pad_mask)
    jax.block_until_ready(logits)
    assert logits.shape == (BATCH, N_CLASSES)
    assert bool(jnp.all(jnp.isfinite(logits)))
    print("KERNEL_OK")
</pallas_src>

<mosaic_0001>
module attributes {stable_mosaic.version = 11 : i64} {
  func.func @fused_forward_kernel(%arg0: i32, %arg1: memref<16x1xi32, #tpu.memory_space<vmem>>, %arg2: memref<336x32xf32, #tpu.memory_space<vmem>>, %arg3: memref<75x128xf32, #tpu.memory_space<vmem>>, %arg4: memref<24x16xf32, #tpu.memory_space<vmem>>, %arg5: memref<8x128xf32, #tpu.memory_space<vmem>>) attributes {dimension_semantics = [#tpu.dimension_semantics<arbitrary>], iteration_bounds = array<i64: 1>, scalar_prefetch = 0 : i64, scratch_operands = 0 : i64, tpu.core_type = #tpu.core_type<tc>, window_params = [{pipeline_mode = #tpu.pipeline_mode<synchronous>, transform_indices = @transform_0, window_bounds = array<i64: 16, 1>}, {pipeline_mode = #tpu.pipeline_mode<synchronous>, transform_indices = @transform_1, window_bounds = array<i64: 336, 32>}, {pipeline_mode = #tpu.pipeline_mode<synchronous>, transform_indices = @transform_2, window_bounds = array<i64: 75, 128>}, {pipeline_mode = #tpu.pipeline_mode<synchronous>, transform_indices = @transform_3, window_bounds = array<i64: 24, 16>}, {pipeline_mode = #tpu.pipeline_mode<synchronous>, transform_indices = @transform_4, window_bounds = array<i64: 8, 128>}]} {
    %c0 = arith.constant 0 : index
    %c0_0 = arith.constant 0 : index
    %0 = vector.load %arg2[%c0, %c0_0] : memref<336x32xf32, #tpu.memory_space<vmem>>, vector<336x32xf32>
    %1 = vector.extract_strided_slice %0 {offsets = [0, 0], sizes = [64, 32], strides = [1, 1]} : vector<336x32xf32> to vector<64x32xf32>
    %2 = vector.extract_strided_slice %0 {offsets = [64, 0], sizes = [16, 32], strides = [1, 1]} : vector<336x32xf32> to vector<16x32xf32>
    %3 = vector.extract_strided_slice %0 {offsets = [80, 0], sizes = [32, 32], strides = [1, 1]} : vector<336x32xf32> to vector<32x32xf32>
    %4 = vector.extract_strided_slice %0 {offsets = [112, 0], sizes = [32, 32], strides = [1, 1]} : vector<336x32xf32> to vector<32x32xf32>
    %5 = vector.extract_strided_slice %0 {offsets = [144, 0], sizes = [32, 32], strides = [1, 1]} : vector<336x32xf32> to vector<32x32xf32>
    %6 = vector.extract_strided_slice %0 {offsets = [176, 0], sizes = [32, 32], strides = [1, 1]} : vector<336x32xf32> to vector<32x32xf32>
    %7 = vector.extract_strided_slice %0 {offsets = [208, 0], sizes = [128, 32], strides = [1, 1]} : vector<336x32xf32> to vector<128x32xf32>
    %c0_1 = arith.constant 0 : index
    %c0_2 = arith.constant 0 : index
    %8 = vector.load %arg3[%c0_1, %c0_2] : memref<75x128xf32, #tpu.memory_space<vmem>>, vector<75x128xf32>
    %9 = vector.extract_strided_slice %8 {offsets = [0, 0], sizes = [32, 128], strides = [1, 1]} : vector<75x128xf32> to vector<32x128xf32>
    %10 = vector.extract_strided_slice %8 {offsets = [32, 0], sizes = [32, 128], strides = [1, 1]} : vector<75x128xf32> to vector<32x128xf32>
    %11 = vector.extract_strided_slice %8 {offsets = [64, 0], sizes = [1, 32], strides = [1, 1]} : vector<75x128xf32> to vector<1x32xf32>
    %12 = vector.extract_strided_slice %8 {offsets = [65, 0], sizes = [1, 32], strides = [1, 1]} : vector<75x128xf32> to vector<1x32xf32>
    %13 = vector.extract_strided_slice %8 {offsets = [66, 0], sizes = [1, 32], strides = [1, 1]} : vector<75x128xf32> to vector<1x32xf32>
    %14 = vector.extract_strided_slice %8 {offsets = [67, 0], sizes = [1, 32], strides = [1, 1]} : vector<75x128xf32> to vector<1x32xf32>
    %15 = vector.extract_strided_slice %8 {offsets = [68, 0], sizes = [1, 32], strides = [1, 1]} : vector<75x128xf32> to vector<1x32xf32>
    %16 = vector.extract_strided_slice %8 {offsets = [69, 0], sizes = [1, 32], strides = [1, 1]} : vector<75x128xf32> to vector<1x32xf32>
    %17 = vector.extract_strided_slice %8 {offsets = [70, 0], sizes = [1, 128], strides = [1, 1]} : vector<75x128xf32> to vector<1x128xf32>
    %18 = vector.extract_strided_slice %8 {offsets = [71, 0], sizes = [1, 32], strides = [1, 1]} : vector<75x128xf32> to vector<1x32xf32>
    %19 = vector.extract_strided_slice %8 {offsets = [72, 0], sizes = [1, 32], strides = [1, 1]} : vector<75x128xf32> to vector<1x32xf32>
    %20 = vector.extract_strided_slice %8 {offsets = [73, 0], sizes = [1, 32], strides = [1, 1]} : vector<75x128xf32> to vector<1x32xf32>
    %21 = vector.extract_strided_slice %8 {offsets = [74, 0], sizes = [1, 128], strides = [1, 1]} : vector<75x128xf32> to vector<1x128xf32>
    %c0_3 = arith.constant 0 : index
    %c0_4 = arith.constant 0 : index
    %22 = vector.load %arg4[%c0_3, %c0_4] : memref<24x16xf32, #tpu.memory_space<vmem>>, vector<24x16xf32>
    %23 = vector.extract_strided_slice %22 {offsets = [0, 0], sizes = [16, 16], strides = [1, 1]} : vector<24x16xf32> to vector<16x16xf32>
    %24 = vector.extract_strided_slice %22 {offsets = [16, 0], sizes = [8, 16], strides = [1, 1]} : vector<24x16xf32> to vector<8x16xf32>
    %c0_5 = arith.constant 0 : index
    %c0_6 = arith.constant 0 : index
    %25 = vector.load %arg1[%c0_5, %c0_6] : memref<16x1xi32, #tpu.memory_space<vmem>>, vector<16x1xi32>
    %26 = tpu.iota {dimensions = array<i32: 1>} : vector<16x64xi32>
    %27 = vector.broadcast %25 : vector<16x1xi32> to vector<16x64xi32>
    %28 = arith.cmpi eq, %26, %27 : vector<16x64xi32>
    %29 = arith.extui %28 : vector<16x64xi1> to vector<16x64xi32>
    %30 = arith.sitofp %29 : vector<16x64xi32> to vector<16x64xf32>
    %cst = arith.constant dense<0.000000e+00> : vector<16x32xf32>
    %31 = tpu.matmul %30, %1, %cst {dimension_numbers = #tpu.dot_dimension_numbers<[1], [0], [0], [1], [0, 0, 1, 1], [], []>} : vector<16x64xf32>, vector<64x32xf32>, vector<16x32xf32> -> vector<16x32xf32>
    %32 = arith.addf %31, %2 : vector<16x32xf32>
    %33 = vector.extract_strided_slice %3 {offsets = [0, 0], sizes = [32, 8], strides = [1, 1]} : vector<32x32xf32> to vector<32x8xf32>
    %34 = vector.extract_strided_slice %3 {offsets = [0, 8], sizes = [32, 8], strides = [1, 1]} : vector<32x32xf32> to vector<32x8xf32>
    %35 = vector.extract_strided_slice %3 {offsets = [0, 16], sizes = [32, 8], strides = [1, 1]} : vector<32x32xf32> to vector<32x8xf32>
    %36 = vector.extract_strided_slice %3 {offsets = [0, 24], sizes = [32, 8], strides = [1, 1]} : vector<32x32xf32> to vector<32x8xf32>
    %37 = vector.extract_strided_slice %5 {offsets = [0, 0], sizes = [32, 8], strides = [1, 1]} : vector<32x32xf32> to vector<32x8xf32>
    %38 = vector.extract_strided_slice %5 {offsets = [0, 8], sizes = [32, 8], strides = [1, 1]} : vector<32x32xf32> to vector<32x8xf32>
    %39 = vector.extract_strided_slice %5 {offsets = [0, 16], sizes = [32, 8], strides = [1, 1]} : vector<32x32xf32> to vector<32x8xf32>
    %40 = vector.extract_strided_slice %5 {offsets = [0, 24], sizes = [32, 8], strides = [1, 1]} : vector<32x32xf32> to vector<32x8xf32>
    %41 = vector.extract_strided_slice %6 {offsets = [0, 0], sizes = [8, 32], strides = [1, 1]} : vector<32x32xf32> to vector<8x32xf32>
    %42 = vector.extract_strided_slice %6 {offsets = [8, 0], sizes = [8, 32], strides = [1, 1]} : vector<32x32xf32> to vector<8x32xf32>
    %43 = vector.extract_strided_slice %6 {offsets = [16, 0], sizes = [8, 32], strides = [1, 1]} : vector<32x32xf32> to vector<8x32xf32>
    %44 = vector.extract_strided_slice %6 {offsets = [24, 0], sizes = [8, 32], strides = [1, 1]} : vector<32x32xf32> to vector<8x32xf32>
    %45 = vector.extract_strided_slice %11 {offsets = [0, 0], sizes = [1, 8], strides = [1, 1]} : vector<1x32xf32> to vector<1x8xf32>
    %46 = vector.extract_strided_slice %11 {offsets = [0, 8], sizes = [1, 8], strides = [1, 1]} : vector<1x32xf32> to vector<1x8xf32>
    %47 = vector.extract_strided_slice %11 {offsets = [0, 16], sizes = [1, 8], strides = [1, 1]} : vector<1x32xf32> to vector<1x8xf32>
    %48 = vector.extract_strided_slice %11 {offsets = [0, 24], sizes = [1, 8], strides = [1, 1]} : vector<1x32xf32> to vector<1x8xf32>
    %49 = vector.extract_strided_slice %13 {offsets = [0, 0], sizes = [1, 8], strides = [1, 1]} : vector<1x32xf32> to vector<1x8xf32>
    %50 = vector.extract_strided_slice %13 {offsets = [0, 8], sizes = [1, 8], strides = [1, 1]} : vector<1x32xf32> to vector<1x8xf32>
    %51 = vector.extract_strided_slice %13 {offsets = [0, 16], sizes = [1, 8], strides = [1, 1]} : vector<1x32xf32> to vector<1x8xf32>
    %52 = vector.extract_strided_slice %13 {offsets = [0, 24], sizes = [1, 8], strides = [1, 1]} : vector<1x32xf32> to vector<1x8xf32>
    %cst_7 = arith.constant dense<0.000000e+00> : vector<16x32xf32>
    %53 = tpu.matmul %32, %4, %cst_7 {dimension_numbers = #tpu.dot_dimension_numbers<[1], [0], [0], [1], [0, 0, 1, 1], [], []>} : vector<16x32xf32>, vector<32x32xf32>, vector<16x32xf32> -> vector<16x32xf32>
    %54 = vector.broadcast %12 : vector<1x32xf32> to vector<16x32xf32>
    %55 = arith.addf %53, %54 : vector<16x32xf32>
    %56 = tpu.transpose %55, [1, 0] : vector<16x32xf32> -> vector<32x16xf32>
    %cst_8 = arith.constant dense<0.000000e+00> : vector<16x8xf32>
    %57 = tpu.matmul %32, %33, %cst_8 {dimension_numbers = #tpu.dot_dimension_numbers<[1], [0], [0], [1], [0, 0, 1, 1], [], []>} : vector<16x32xf32>, vector<32x8xf32>, vector<16x8xf32> -> vector<16x8xf32>
    %58 = vector.broadcast %45 : vector<1x8xf32> to vector<16x8xf32>
    %59 = arith.addf %57, %58 : vector<16x8xf32>
    %60 = vector.extract_strided_slice %56 {offsets = [0, 0], sizes = [8, 16], strides = [1, 1]} : vector<32x16xf32> to vector<8x16xf32>
    %cst_9 = arith.constant dense<0.000000e+00> : vector<16x16xf32>
    %61 = tpu.matmul %59, %60, %cst_9 {dimension_numbers = #tpu.dot_dimension_numbers<[1], [0], [0], [1], [0, 0, 1, 1], [], []>} : vector<16x8xf32>, vector<8x16xf32>, vector<16x16xf32> -> vector<16x16xf32>
    %62 = arith.addf %61, %23 : vector<16x16xf32>
    %cst_10 = arith.constant dense<0xFF800000> : vector<16xf32>
    %63 = vector.multi_reduction <maximumf>, %62, %cst_10 [1] : vector<16x16xf32> to vector<16xf32>
    %64 = vector.shape_cast %63 : vector<16xf32> to vector<16x1xf32>
    %65 = vector.broadcast %64 : vector<16x1xf32> to vector<16x16xf32>
    %66 = arith.subf %62, %65 : vector<16x16xf32>
    %67 = math.exp %66 : vector<16x16xf32>
    %cst_11 = arith.constant dense<0.000000e+00> : vector<16xf32>
    %68 = vector.multi_reduction <add>, %67, %cst_11 [1] : vector<16x16xf32> to vector<16xf32>
    %69 = vector.shape_cast %68 : vector<16xf32> to vector<16x1xf32>
    %70 = tpu.reciprocal %69 {approx = true} : vector<16x1xf32> -> vector<16x1xf32>
    %71 = vector.broadcast %70 : vector<16x1xf32> to vector<16x16xf32>
    %72 = arith.mulf %67, %71 : vector<16x16xf32>
    %cst_12 = arith.constant dense<0.000000e+00> : vector<16x8xf32>
    %73 = tpu.matmul %32, %37, %cst_12 {dimension_numbers = #tpu.dot_dimension_numbers<[1], [0], [0], [1], [0, 0, 1, 1], [], []>} : vector<16x32xf32>, vector<32x8xf32>, vector<16x8xf32> -> vector<16x8xf32>
    %74 = vector.broadcast %49 : vector<1x8xf32> to vector<16x8xf32>
    %75 = arith.addf %73, %74 : vector<16x8xf32>
    %cst_13 = arith.constant dense<0.000000e+00> : vector<16x8xf32>
    %76 = tpu.matmul %72, %75, %cst_13 {dimension_numbers = #tpu.dot_dimension_numbers<[1], [0], [0], [1], [0, 0, 1, 1], [], []>} : vector<16x16xf32>, vector<16x8xf32>, vector<16x8xf32> -> vector<16x8xf32>
    %cst_14 = arith.constant dense<0.000000e+00> : vector<16x32xf32>
    %77 = tpu.matmul %76, %41, %cst_14 {dimension_numbers = #tpu.dot_dimension_numbers<[1], [0], [0], [1], [0, 0, 1, 1], [], []>} : vector<16x8xf32>, vector<8x32xf32>, vector<16x32xf32> -> vector<16x32xf32>
    %cst_15 = arith.constant dense<0.000000e+00> : vector<16x8xf32>
    %78 = tpu.matmul %32, %34, %cst_15 {dimension_numbers = #tpu.dot_dimension_numbers<[1], [0], [0], [1], [0, 0, 1, 1], [], []>} : vector<16x32xf32>, vector<32x8xf32>, vector<16x8xf32> -> vector<16x8xf32>
    %79 = vector.broadcast %46 : vector<1x8xf32> to vector<16x8xf32>
    %80 = arith.addf %78, %79 : vector<16x8xf32>
    %81 = vector.extract_strided_slice %56 {offsets = [8, 0], sizes = [8, 16], strides = [1, 1]} : vector<32x16xf32> to vector<8x16xf32>
    %cst_16 = arith.constant dense<0.000000e+00> : vector<16x16xf32>
    %82 = tpu.matmul %80, %81, %cst_16 {dimension_numbers = #tpu.dot_dimension_numbers<[1], [0], [0], [1], [0, 0, 1, 1], [], []>} : vector<16x8xf32>, vector<8x16xf32>, vector<16x16xf32> -> vector<16x16xf32>
    %83 = arith.addf %82, %23 : vector<16x16xf32>
    %cst_17 = arith.constant dense<0xFF800000> : vector<16xf32>
    %84 = vector.multi_reduction <maximumf>, %83, %cst_17 [1] : vector<16x16xf32> to vector<16xf32>
    %85 = vector.shape_cast %84 : vector<16xf32> to vector<16x1xf32>
    %86 = vector.broadcast %85 : vector<16x1xf32> to vector<16x16xf32>
    %87 = arith.subf %83, %86 : vector<16x16xf32>
    %88 = math.exp %87 : vector<16x16xf32>
    %cst_18 = arith.constant dense<0.000000e+00> : vector<16xf32>
    %89 = vector.multi_reduction <add>, %88, %cst_18 [1] : vector<16x16xf32> to vector<16xf32>
    %90 = vector.shape_cast %89 : vector<16xf32> to vector<16x1xf32>
    %91 = tpu.reciprocal %90 {approx = true} : vector<16x1xf32> -> vector<16x1xf32>
    %92 = vector.broadcast %91 : vector<16x1xf32> to vector<16x16xf32>
    %93 = arith.mulf %88, %92 : vector<16x16xf32>
    %cst_19 = arith.constant dense<0.000000e+00> : vector<16x8xf32>
    %94 = tpu.matmul %32, %38, %cst_19 {dimension_numbers = #tpu.dot_dimension_numbers<[1], [0], [0], [1], [0, 0, 1, 1], [], []>} : vector<16x32xf32>, vector<32x8xf32>, vector<16x8xf32> -> vector<16x8xf32>
    %95 = vector.broadcast %50 : vector<1x8xf32> to vector<16x8xf32>
    %96 = arith.addf %94, %95 : vector<16x8xf32>
    %cst_20 = arith.constant dense<0.000000e+00> : vector<16x8xf32>
    %97 = tpu.matmul %93, %96, %cst_20 {dimension_numbers = #tpu.dot_dimension_numbers<[1], [0], [0], [1], [0, 0, 1, 1], [], []>} : vector<16x16xf32>, vector<16x8xf32>, vector<16x8xf32> -> vector<16x8xf32>
    %cst_21 = arith.constant dense<0.000000e+00> : vector<16x32xf32>
    %98 = tpu.matmul %97, %42, %cst_21 {dimension_numbers = #tpu.dot_dimension_numbers<[1], [0], [0], [1], [0, 0, 1, 1], [], []>} : vector<16x8xf32>, vector<8x32xf32>, vector<16x32xf32> -> vector<16x32xf32>
    %99 = arith.addf %77, %98 : vector<16x32xf32>
    %cst_22 = arith.constant dense<0.000000e+00> : vector<16x8xf32>
    %100 = tpu.matmul %32, %35, %cst_22 {dimension_numbers = #tpu.dot_dimension_numbers<[1], [0], [0], [1], [0, 0, 1, 1], [], []>} : vector<16x32xf32>, vector<32x8xf32>, vector<16x8xf32> -> vector<16x8xf32>
    %101 = vector.broadcast %47 : vector<1x8xf32> to vector<16x8xf32>
    %102 = arith.addf %100, %101 : vector<16x8xf32>
    %103 = vector.extract_strided_slice %56 {offsets = [16, 0], sizes = [8, 16], strides = [1, 1]} : vector<32x16xf32> to vector<8x16xf32>
    %cst_23 = arith.constant dense<0.000000e+00> : vector<16x16xf32>
    %104 = tpu.matmul %102, %103, %cst_23 {dimension_numbers = #tpu.dot_dimension_numbers<[1], [0], [0], [1], [0, 0, 1, 1], [], []>} : vector<16x8xf32>, vector<8x16xf32>, vector<16x16xf32> -> vector<16x16xf32>
    %105 = arith.addf %104, %23 : vector<16x16xf32>
    %cst_24 = arith.constant dense<0xFF800000> : vector<16xf32>
    %106 = vector.multi_reduction <maximumf>, %105, %cst_24 [1] : vector<16x16xf32> to vector<16xf32>
    %107 = vector.shape_cast %106 : vector<16xf32> to vector<16x1xf32>
    %108 = vector.broadcast %107 : vector<16x1xf32> to vector<16x16xf32>
    %109 = arith.subf %105, %108 : vector<16x16xf32>
    %110 = math.exp %109 : vector<16x16xf32>
    %cst_25 = arith.constant dense<0.000000e+00> : vector<16xf32>
    %111 = vector.multi_reduction <add>, %110, %cst_25 [1] : vector<16x16xf32> to vector<16xf32>
    %112 = vector.shape_cast %111 : vector<16xf32> to vector<16x1xf32>
    %113 = tpu.reciprocal %112 {approx = true} : vector<16x1xf32> -> vector<16x1xf32>
    %114 = vector.broadcast %113 : vector<16x1xf32> to vector<16x16xf32>
    %115 = arith.mulf %110, %114 : vector<16x16xf32>
    %cst_26 = arith.constant dense<0.000000e+00> : vector<16x8xf32>
    %116 = tpu.matmul %32, %39, %cst_26 {dimension_numbers = #tpu.dot_dimension_numbers<[1], [0], [0], [1], [0, 0, 1, 1], [], []>} : vector<16x32xf32>, vector<32x8xf32>, vector<16x8xf32> -> vector<16x8xf32>
    %117 = vector.broadcast %51 : vector<1x8xf32> to vector<16x8xf32>
    %118 = arith.addf %116, %117 : vector<16x8xf32>
    %cst_27 = arith.constant dense<0.000000e+00> : vector<16x8xf32>
    %119 = tpu.matmul %115, %118, %cst_27 {dimension_numbers = #tpu.dot_dimension_numbers<[1], [0], [0], [1], [0, 0, 1, 1], [], []>} : vector<16x16xf32>, vector<16x8xf32>, vector<16x8xf32> -> vector<16x8xf32>
    %cst_28 = arith.constant dense<0.000000e+00> : vector<16x32xf32>
    %120 = tpu.matmul %119, %43, %cst_28 {dimension_numbers = #tpu.dot_dimension_numbers<[1], [0], [0], [1], [0, 0, 1, 1], [], []>} : vector<16x8xf32>, vector<8x32xf32>, vector<16x32xf32> -> vector<16x32xf32>
    %121 = arith.addf %99, %120 : vector<16x32xf32>
    %cst_29 = arith.constant dense<0.000000e+00> : vector<16x8xf32>
    %122 = tpu.matmul %32, %36, %cst_29 {dimension_numbers = #tpu.dot_dimension_numbers<[1], [0], [0], [1], [0, 0, 1, 1], [], []>} : vector<16x32xf32>, vector<32x8xf32>, vector<16x8xf32> -> vector<16x8xf32>
    %123 = vector.broadcast %48 : vector<1x8xf32> to vector<16x8xf32>
    %124 = arith.addf %122, %123 : vector<16x8xf32>
    %125 = vector.extract_strided_slice %56 {offsets = [24, 0], sizes = [8, 16], strides = [1, 1]} : vector<32x16xf32> to vector<8x16xf32>
    %cst_30 = arith.constant dense<0.000000e+00> : vector<16x16xf32>
    %126 = tpu.matmul %124, %125, %cst_30 {dimension_numbers = #tpu.dot_dimension_numbers<[1], [0], [0], [1], [0, 0, 1, 1], [], []>} : vector<16x8xf32>, vector<8x16xf32>, vector<16x16xf32> -> vector<16x16xf32>
    %127 = arith.addf %126, %23 : vector<16x16xf32>
    %cst_31 = arith.constant dense<0xFF800000> : vector<16xf32>
    %128 = vector.multi_reduction <maximumf>, %127, %cst_31 [1] : vector<16x16xf32> to vector<16xf32>
    %129 = vector.shape_cast %128 : vector<16xf32> to vector<16x1xf32>
    %130 = vector.broadcast %129 : vector<16x1xf32> to vector<16x16xf32>
    %131 = arith.subf %127, %130 : vector<16x16xf32>
    %132 = math.exp %131 : vector<16x16xf32>
    %cst_32 = arith.constant dense<0.000000e+00> : vector<16xf32>
    %133 = vector.multi_reduction <add>, %132, %cst_32 [1] : vector<16x16xf32> to vector<16xf32>
    %134 = vector.shape_cast %133 : vector<16xf32> to vector<16x1xf32>
    %135 = tpu.reciprocal %134 {approx = true} : vector<16x1xf32> -> vector<16x1xf32>
    %136 = vector.broadcast %135 : vector<16x1xf32> to vector<16x16xf32>
    %137 = arith.mulf %132, %136 : vector<16x16xf32>
    %cst_33 = arith.constant dense<0.000000e+00> : vector<16x8xf32>
    %138 = tpu.matmul %32, %40, %cst_33 {dimension_numbers = #tpu.dot_dimension_numbers<[1], [0], [0], [1], [0, 0, 1, 1], [], []>} : vector<16x32xf32>, vector<32x8xf32>, vector<16x8xf32> -> vector<16x8xf32>
    %139 = vector.broadcast %52 : vector<1x8xf32> to vector<16x8xf32>
    %140 = arith.addf %138, %139 : vector<16x8xf32>
    %cst_34 = arith.constant dense<0.000000e+00> : vector<16x8xf32>
    %141 = tpu.matmul %137, %140, %cst_34 {dimension_numbers = #tpu.dot_dimension_numbers<[1], [0], [0], [1], [0, 0, 1, 1], [], []>} : vector<16x16xf32>, vector<16x8xf32>, vector<16x8xf32> -> vector<16x8xf32>
    %cst_35 = arith.constant dense<0.000000e+00> : vector<16x32xf32>
    %142 = tpu.matmul %141, %44, %cst_35 {dimension_numbers = #tpu.dot_dimension_numbers<[1], [0], [0], [1], [0, 0, 1, 1], [], []>} : vector<16x8xf32>, vector<8x32xf32>, vector<16x32xf32> -> vector<16x32xf32>
    %143 = arith.addf %121, %142 : vector<16x32xf32>
    %144 = vector.broadcast %14 : vector<1x32xf32> to vector<16x32xf32>
    %145 = arith.addf %143, %144 : vector<16x32xf32>
    %146 = arith.addf %32, %145 : vector<16x32xf32>
    %cst_36 = arith.constant dense<0.000000e+00> : vector<16xf32>
    %147 = vector.multi_reduction <add>, %146, %cst_36 [1] : vector<16x32xf32> to vector<16xf32>
    %148 = vector.shape_cast %147 : vector<16xf32> to vector<16x1xf32>
    %cst_37 = arith.constant 3.200000e+01 : f32
    %149 = vector.broadcast %cst_37 : f32 to vector<16x1xf32>
    %150 = arith.divf %148, %149 : vector<16x1xf32>
    %151 = vector.broadcast %150 : vector<16x1xf32> to vector<16x32xf32>
    %152 = arith.subf %146, %151 : vector<16x32xf32>
    %153 = arith.mulf %152, %152 : vector<16x32xf32>
    %cst_38 = arith.constant dense<0.000000e+00> : vector<16xf32>
    %154 = vector.multi_reduction <add>, %153, %cst_38 [1] : vector<16x32xf32> to vector<16xf32>
    %155 = vector.shape_cast %154 : vector<16xf32> to vector<16x1xf32>
    %cst_39 = arith.constant 3.200000e+01 : f32
    %156 = vector.broadcast %cst_39 : f32 to vector<16x1xf32>
    %157 = arith.divf %155, %156 : vector<16x1xf32>
    %158 = vector.broadcast %150 : vector<16x1xf32> to vector<16x32xf32>
    %159 = arith.subf %146, %158 : vector<16x32xf32>
    %cst_40 = arith.constant 9.99999974E-6 : f32
    %160 = vector.broadcast %cst_40 : f32 to vector<16x1xf32>
    %161 = arith.addf %157, %160 : vector<16x1xf32>
    %162 = math.rsqrt %161 : vector<16x1xf32>
    %163 = vector.broadcast %162 : vector<16x1xf32> to vector<16x32xf32>
    %164 = arith.mulf %159, %163 : vector<16x32xf32>
    %165 = vector.broadcast %15 : vector<1x32xf32> to vector<16x32xf32>
    %166 = arith.mulf %164, %165 : vector<16x32xf32>
    %167 = vector.broadcast %16 : vector<1x32xf32> to vector<16x32xf32>
    %168 = arith.addf %166, %167 : vector<16x32xf32>
    %cst_41 = arith.constant dense<0.000000e+00> : vector<16x128xf32>
    %169 = tpu.matmul %168, %9, %cst_41 {dimension_numbers = #tpu.dot_dimension_numbers<[1], [0], [0], [1], [0, 0, 1, 1], [], []>} : vector<16x32xf32>, vector<32x128xf32>, vector<16x128xf32> -> vector<16x128xf32>
    %170 = vector.broadcast %17 : vector<1x128xf32> to vector<16x128xf32>
    %171 = arith.addf %169, %170 : vector<16x128xf32>
    %cst_42 = arith.constant 0.000000e+00 : f32
    %172 = vector.broadcast %cst_42 : f32 to vector<16x128xf32>
    %173 = arith.maximumf %171, %172 : vector<16x128xf32>
    %cst_43 = arith.constant dense<0.000000e+00> : vector<16x32xf32>
    %174 = tpu.matmul %173, %7, %cst_43 {dimension_numbers = #tpu.dot_dimension_numbers<[1], [0], [0], [1], [0, 0, 1, 1], [], []>} : vector<16x128xf32>, vector<128x32xf32>, vector<16x32xf32> -> vector<16x32xf32>
    %175 = vector.broadcast %18 : vector<1x32xf32> to vector<16x32xf32>
    %176 = arith.addf %174, %175 : vector<16x32xf32>
    %177 = arith.addf %168, %176 : vector<16x32xf32>
    %cst_44 = arith.constant dense<0.000000e+00> : vector<16xf32>
    %178 = vector.multi_reduction <add>, %177, %cst_44 [1] : vector<16x32xf32> to vector<16xf32>
    %179 = vector.shape_cast %178 : vector<16xf32> to vector<16x1xf32>
    %cst_45 = arith.constant 3.200000e+01 : f32
    %180 = vector.broadcast %cst_45 : f32 to vector<16x1xf32>
    %181 = arith.divf %179, %180 : vector<16x1xf32>
    %182 = vector.broadcast %181 : vector<16x1xf32> to vector<16x32xf32>
    %183 = arith.subf %177, %182 : vector<16x32xf32>
    %184 = arith.mulf %183, %183 : vector<16x32xf32>
    %cst_46 = arith.constant dense<0.000000e+00> : vector<16xf32>
    %185 = vector.multi_reduction <add>, %184, %cst_46 [1] : vector<16x32xf32> to vector<16xf32>
    %186 = vector.shape_cast %185 : vector<16xf32> to vector<16x1xf32>
    %cst_47 = arith.constant 3.200000e+01 : f32
    %187 = vector.broadcast %cst_47 : f32 to vector<16x1xf32>
    %188 = arith.divf %186, %187 : vector<16x1xf32>
    %189 = vector.broadcast %181 : vector<16x1xf32> to vector<16x32xf32>
    %190 = arith.subf %177, %189 : vector<16x32xf32>
    %cst_48 = arith.constant 9.99999974E-6 : f32
    %191 = vector.broadcast %cst_48 : f32 to vector<16x1xf32>
    %192 = arith.addf %188, %191 : vector<16x1xf32>
    %193 = math.rsqrt %192 : vector<16x1xf32>
    %194 = vector.broadcast %193 : vector<16x1xf32> to vector<16x32xf32>
    %195 = arith.mulf %190, %194 : vector<16x32xf32>
    %196 = vector.broadcast %19 : vector<1x32xf32> to vector<16x32xf32>
    %197 = arith.mulf %195, %196 : vector<16x32xf32>
    %198 = vector.broadcast %20 : vector<1x32xf32> to vector<16x32xf32>
    %199 = arith.addf %197, %198 : vector<16x32xf32>
    %cst_49 = arith.constant dense<0.000000e+00> : vector<16x32xf32>
    %200 = tpu.matmul %199, %4, %cst_49 {dimension_numbers = #tpu.dot_dimension_numbers<[1], [0], [0], [1], [0, 0, 1, 1], [], []>} : vector<16x32xf32>, vector<32x32xf32>, vector<16x32xf32> -> vector<16x32xf32>
    %201 = vector.broadcast %12 : vector<1x32xf32> to vector<16x32xf32>
    %202 = arith.addf %200, %201 : vector<16x32xf32>
    %203 = tpu.transpose %202, [1, 0] : vector<16x32xf32> -> vector<32x16xf32>
    %cst_50 = arith.constant dense<0.000000e+00> : vector<16x8xf32>
    %204 = tpu.matmul %199, %33, %cst_50 {dimension_numbers = #tpu.dot_dimension_numbers<[1], [0], [0], [1], [0, 0, 1, 1], [], []>} : vector<16x32xf32>, vector<32x8xf32>, vector<16x8xf32> -> vector<16x8xf32>
    %205 = vector.broadcast %45 : vector<1x8xf32> to vector<16x8xf32>
    %206 = arith.addf %204, %205 : vector<16x8xf32>
    %207 = vector.extract_strided_slice %203 {offsets = [0, 0], sizes = [8, 16], strides = [1, 1]} : vector<32x16xf32> to vector<8x16xf32>
    %cst_51 = arith.constant dense<0.000000e+00> : vector<16x16xf32>
    %208 = tpu.matmul %206, %207, %cst_51 {dimension_numbers = #tpu.dot_dimension_numbers<[1], [0], [0], [1], [0, 0, 1, 1], [], []>} : vector<16x8xf32>, vector<8x16xf32>, vector<16x16xf32> -> vector<16x16xf32>
    %209 = arith.addf %208, %23 : vector<16x16xf32>
    %cst_52 = arith.constant dense<0xFF800000> : vector<16xf32>
    %210 = vector.multi_reduction <maximumf>, %209, %cst_52 [1] : vector<16x16xf32> to vector<16xf32>
    %211 = vector.shape_cast %210 : vector<16xf32> to vector<16x1xf32>
    %212 = vector.broadcast %211 : vector<16x1xf32> to vector<16x16xf32>
    %213 = arith.subf %209, %212 : vector<16x16xf32>
    %214 = math.exp %213 : vector<16x16xf32>
    %cst_53 = arith.constant dense<0.000000e+00> : vector<16xf32>
    %215 = vector.multi_reduction <add>, %214, %cst_53 [1] : vector<16x16xf32> to vector<16xf32>
    %216 = vector.shape_cast %215 : vector<16xf32> to vector<16x1xf32>
    %217 = tpu.reciprocal %216 {approx = true} : vector<16x1xf32> -> vector<16x1xf32>
    %218 = vector.broadcast %217 : vector<16x1xf32> to vector<16x16xf32>
    %219 = arith.mulf %214, %218 : vector<16x16xf32>
    %cst_54 = arith.constant dense<0.000000e+00> : vector<16x8xf32>
    %220 = tpu.matmul %199, %37, %cst_54 {dimension_numbers = #tpu.dot_dimension_numbers<[1], [0], [0], [1], [0, 0, 1, 1], [], []>} : vector<16x32xf32>, vector<32x8xf32>, vector<16x8xf32> -> vector<16x8xf32>
    %221 = vector.broadcast %49 : vector<1x8xf32> to vector<16x8xf32>
    %222 = arith.addf %220, %221 : vector<16x8xf32>
    %cst_55 = arith.constant dense<0.000000e+00> : vector<16x8xf32>
    %223 = tpu.matmul %219, %222, %cst_55 {dimension_numbers = #tpu.dot_dimension_numbers<[1], [0], [0], [1], [0, 0, 1, 1], [], []>} : vector<16x16xf32>, vector<16x8xf32>, vector<16x8xf32> -> vector<16x8xf32>
    %cst_56 = arith.constant dense<0.000000e+00> : vector<16x32xf32>
    %224 = tpu.matmul %223, %41, %cst_56 {dimension_numbers = #tpu.dot_dimension_numbers<[1], [0], [0], [1], [0, 0, 1, 1], [], []>} : vector<16x8xf32>, vector<8x32xf32>, vector<16x32xf32> -> vector<16x32xf32>
    %cst_57 = arith.constant dense<0.000000e+00> : vector<16x8xf32>
    %225 = tpu.matmul %199, %34, %cst_57 {dimension_numbers = #tpu.dot_dimension_numbers<[1], [0], [0], [1], [0, 0, 1, 1], [], []>} : vector<16x32xf32>, vector<32x8xf32>, vector<16x8xf32> -> vector<16x8xf32>
    %226 = vector.broadcast %46 : vector<1x8xf32> to vector<16x8xf32>
    %227 = arith.addf %225, %226 : vector<16x8xf32>
    %228 = vector.extract_strided_slice %203 {offsets = [8, 0], sizes = [8, 16], strides = [1, 1]} : vector<32x16xf32> to vector<8x16xf32>
    %cst_58 = arith.constant dense<0.000000e+00> : vector<16x16xf32>
    %229 = tpu.matmul %227, %228, %cst_58 {dimension_numbers = #tpu.dot_dimension_numbers<[1], [0], [0], [1], [0, 0, 1, 1], [], []>} : vector<16x8xf32>, vector<8x16xf32>, vector<16x16xf32> -> vector<16x16xf32>
    %230 = arith.addf %229, %23 : vector<16x16xf32>
    %cst_59 = arith.constant dense<0xFF800000> : vector<16xf32>
    %231 = vector.multi_reduction <maximumf>, %230, %cst_59 [1] : vector<16x16xf32> to vector<16xf32>
    %232 = vector.shape_cast %231 : vector<16xf32> to vector<16x1xf32>
    %233 = vector.broadcast %232 : vector<16x1xf32> to vector<16x16xf32>
    %234 = arith.subf %230, %233 : vector<16x16xf32>
    %235 = math.exp %234 : vector<16x16xf32>
    %cst_60 = arith.constant dense<0.000000e+00> : vector<16xf32>
    %236 = vector.multi_reduction <add>, %235, %cst_60 [1] : vector<16x16xf32> to vector<16xf32>
    %237 = vector.shape_cast %236 : vector<16xf32> to vector<16x1xf32>
    %238 = tpu.reciprocal %237 {approx = true} : vector<16x1xf32> -> vector<16x1xf32>
    %239 = vector.broadcast %238 : vector<16x1xf32> to vector<16x16xf32>
    %240 = arith.mulf %235, %239 : vector<16x16xf32>
    %cst_61 = arith.constant dense<0.000000e+00> : vector<16x8xf32>
    %241 = tpu.matmul %199, %38, %cst_61 {dimension_numbers = #tpu.dot_dimension_numbers<[1], [0], [0], [1], [0, 0, 1, 1], [], []>} : vector<16x32xf32>, vector<32x8xf32>, vector<16x8xf32> -> vector<16x8xf32>
    %242 = vector.broadcast %50 : vector<1x8xf32> to vector<16x8xf32>
    %243 = arith.addf %241, %242 : vector<16x8xf32>
    %cst_62 = arith.constant dense<0.000000e+00> : vector<16x8xf32>
    %244 = tpu.matmul %240, %243, %cst_62 {dimension_numbers = #tpu.dot_dimension_numbers<[1], [0], [0], [1], [0, 0, 1, 1], [], []>} : vector<16x16xf32>, vector<16x8xf32>, vector<16x8xf32> -> vector<16x8xf32>
    %cst_63 = arith.constant dense<0.000000e+00> : vector<16x32xf32>
    %245 = tpu.matmul %244, %42, %cst_63 {dimension_numbers = #tpu.dot_dimension_numbers<[1], [0], [0], [1], [0, 0, 1, 1], [], []>} : vector<16x8xf32>, vector<8x32xf32>, vector<16x32xf32> -> vector<16x32xf32>
    %246 = arith.addf %224, %245 : vector<16x32xf32>
    %cst_64 = arith.constant dense<0.000000e+00> : vector<16x8xf32>
    %247 = tpu.matmul %199, %35, %cst_64 {dimension_numbers = #tpu.dot_dimension_numbers<[1], [0], [0], [1], [0, 0, 1, 1], [], []>} : vector<16x32xf32>, vector<32x8xf32>, vector<16x8xf32> -> vector<16x8xf32>
    %248 = vector.broadcast %47 : vector<1x8xf32> to vector<16x8xf32>
    %249 = arith.addf %247, %248 : vector<16x8xf32>
    %250 = vector.extract_strided_slice %203 {offsets = [16, 0], sizes = [8, 16], strides = [1, 1]} : vector<32x16xf32> to vector<8x16xf32>
    %cst_65 = arith.constant dense<0.000000e+00> : vector<16x16xf32>
    %251 = tpu.matmul %249, %250, %cst_65 {dimension_numbers = #tpu.dot_dimension_numbers<[1], [0], [0], [1], [0, 0, 1, 1], [], []>} : vector<16x8xf32>, vector<8x16xf32>, vector<16x16xf32> -> vector<16x16xf32>
    %252 = arith.addf %251, %23 : vector<16x16xf32>
    %cst_66 = arith.constant dense<0xFF800000> : vector<16xf32>
    %253 = vector.multi_reduction <maximumf>, %252, %cst_66 [1] : vector<16x16xf32> to vector<16xf32>
    %254 = vector.shape_cast %253 : vector<16xf32> to vector<16x1xf32>
    %255 = vector.broadcast %254 : vector<16x1xf32> to vector<16x16xf32>
    %256 = arith.subf %252, %255 : vector<16x16xf32>
    %257 = math.exp %256 : vector<16x16xf32>
    %cst_67 = arith.constant dense<0.000000e+00> : vector<16xf32>
    %258 = vector.multi_reduction <add>, %257, %cst_67 [1] : vector<16x16xf32> to vector<16xf32>
    %259 = vector.shape_cast %258 : vector<16xf32> to vector<16x1xf32>
    %260 = tpu.reciprocal %259 {approx = true} : vector<16x1xf32> -> vector<16x1xf32>
    %261 = vector.broadcast %260 : vector<16x1xf32> to vector<16x16xf32>
    %262 = arith.mulf %257, %261 : vector<16x16xf32>
    %cst_68 = arith.constant dense<0.000000e+00> : vector<16x8xf32>
    %263 = tpu.matmul %199, %39, %cst_68 {dimension_numbers = #tpu.dot_dimension_numbers<[1], [0], [0], [1], [0, 0, 1, 1], [], []>} : vector<16x32xf32>, vector<32x8xf32>, vector<16x8xf32> -> vector<16x8xf32>
    %264 = vector.broadcast %51 : vector<1x8xf32> to vector<16x8xf32>
    %265 = arith.addf %263, %264 : vector<16x8xf32>
    %cst_69 = arith.constant dense<0.000000e+00> : vector<16x8xf32>
    %266 = tpu.matmul %262, %265, %cst_69 {dimension_numbers = #tpu.dot_dimension_numbers<[1], [0], [0], [1], [0, 0, 1, 1], [], []>} : vector<16x16xf32>, vector<16x8xf32>, vector<16x8xf32> -> vector<16x8xf32>
    %cst_70 = arith.constant dense<0.000000e+00> : vector<16x32xf32>
    %267 = tpu.matmul %266, %43, %cst_70 {dimension_numbers = #tpu.dot_dimension_numbers<[1], [0], [0], [1], [0, 0, 1, 1], [], []>} : vector<16x8xf32>, vector<8x32xf32>, vector<16x32xf32> -> vector<16x32xf32>
    %268 = arith.addf %246, %267 : vector<16x32xf32>
    %cst_71 = arith.constant dense<0.000000e+00> : vector<16x8xf32>
    %269 = tpu.matmul %199, %36, %cst_71 {dimension_numbers = #tpu.dot_dimension_numbers<[1], [0], [0], [1], [0, 0, 1, 1], [], []>} : vector<16x32xf32>, vector<32x8xf32>, vector<16x8xf32> -> vector<16x8xf32>
    %270 = vector.broadcast %48 : vector<1x8xf32> to vector<16x8xf32>
    %271 = arith.addf %269, %270 : vector<16x8xf32>
    %272 = vector.extract_strided_slice %203 {offsets = [24, 0], sizes = [8, 16], strides = [1, 1]} : vector<32x16xf32> to vector<8x16xf32>
    %cst_72 = arith.constant dense<0.000000e+00> : vector<16x16xf32>
    %273 = tpu.matmul %271, %272, %cst_72 {dimension_numbers = #tpu.dot_dimension_numbers<[1], [0], [0], [1], [0, 0, 1, 1], [], []>} : vector<16x8xf32>, vector<8x16xf32>, vector<16x16xf32> -> vector<16x16xf32>
    %274 = arith.addf %273, %23 : vector<16x16xf32>
    %cst_73 = arith.constant dense<0xFF800000> : vector<16xf32>
    %275 = vector.multi_reduction <maximumf>, %274, %cst_73 [1] : vector<16x16xf32> to vector<16xf32>
    %276 = vector.shape_cast %275 : vector<16xf32> to vector<16x1xf32>
    %277 = vector.broadcast %276 : vector<16x1xf32> to vector<16x16xf32>
    %278 = arith.subf %274, %277 : vector<16x16xf32>
    %279 = math.exp %278 : vector<16x16xf32>
    %cst_74 = arith.constant dense<0.000000e+00> : vector<16xf32>
    %280 = vector.multi_reduction <add>, %279, %cst_74 [1] : vector<16x16xf32> to vector<16xf32>
    %281 = vector.shape_cast %280 : vector<16xf32> to vector<16x1xf32>
    %282 = tpu.reciprocal %281 {approx = true} : vector<16x1xf32> -> vector<16x1xf32>
    %283 = vector.broadcast %282 : vector<16x1xf32> to vector<16x16xf32>
    %284 = arith.mulf %279, %283 : vector<16x16xf32>
    %cst_75 = arith.constant dense<0.000000e+00> : vector<16x8xf32>
    %285 = tpu.matmul %199, %40, %cst_75 {dimension_numbers = #tpu.dot_dimension_numbers<[1], [0], [0], [1], [0, 0, 1, 1], [], []>} : vector<16x32xf32>, vector<32x8xf32>, vector<16x8xf32> -> vector<16x8xf32>
    %286 = vector.broadcast %52 : vector<1x8xf32> to vector<16x8xf32>
    %287 = arith.addf %285, %286 : vector<16x8xf32>
    %cst_76 = arith.constant dense<0.000000e+00> : vector<16x8xf32>
    %288 = tpu.matmul %284, %287, %cst_76 {dimension_numbers = #tpu.dot_dimension_numbers<[1], [0], [0], [1], [0, 0, 1, 1], [], []>} : vector<16x16xf32>, vector<16x8xf32>, vector<16x8xf32> -> vector<16x8xf32>
    %cst_77 = arith.constant dense<0.000000e+00> : vector<16x32xf32>
    %289 = tpu.matmul %288, %44, %cst_77 {dimension_numbers = #tpu.dot_dimension_numbers<[1], [0], [0], [1], [0, 0, 1, 1], [], []>} : vector<16x8xf32>, vector<8x32xf32>, vector<16x32xf32> -> vector<16x32xf32>
    %290 = arith.addf %268, %289 : vector<16x32xf32>
    %291 = vector.broadcast %14 : vector<1x32xf32> to vector<16x32xf32>
    %292 = arith.addf %290, %291 : vector<16x32xf32>
    %293 = arith.addf %199, %292 : vector<16x32xf32>
    %cst_78 = arith.constant dense<0.000000e+00> : vector<16xf32>
    %294 = vector.multi_reduction <add>, %293, %cst_78 [1] : vector<16x32xf32> to vector<16xf32>
    %295 = vector.shape_cast %294 : vector<16xf32> to vector<16x1xf32>
    %cst_79 = arith.constant 3.200000e+01 : f32
    %296 = vector.broadcast %cst_79 : f32 to vector<16x1xf32>
    %297 = arith.divf %295, %296 : vector<16x1xf32>
    %298 = vector.broadcast %297 : vector<16x1xf32> to vector<16x32xf32>
    %299 = arith.subf %293, %298 : vector<16x32xf32>
    %300 = arith.mulf %299, %299 : vector<16x32xf32>
    %cst_80 = arith.constant dense<0.000000e+00> : vector<16xf32>
    %301 = vector.multi_reduction <add>, %300, %cst_80 [1] : vector<16x32xf32> to vector<16xf32>
    %302 = vector.shape_cast %301 : vector<16xf32> to vector<16x1xf32>
    %cst_81 = arith.constant 3.200000e+01 : f32
    %303 = vector.broadcast %cst_81 : f32 to vector<16x1xf32>
    %304 = arith.divf %302, %303 : vector<16x1xf32>
    %305 = vector.broadcast %297 : vector<16x1xf32> to vector<16x32xf32>
    %306 = arith.subf %293, %305 : vector<16x32xf32>
    %cst_82 = arith.constant 9.99999974E-6 : f32
    %307 = vector.broadcast %cst_82 : f32 to vector<16x1xf32>
    %308 = arith.addf %304, %307 : vector<16x1xf32>
    %309 = math.rsqrt %308 : vector<16x1xf32>
    %310 = vector.broadcast %309 : vector<16x1xf32> to vector<16x32xf32>
    %311 = arith.mulf %306, %310 : vector<16x32xf32>
    %312 = vector.broadcast %15 : vector<1x32xf32> to vector<16x32xf32>
    %313 = arith.mulf %311, %312 : vector<16x32xf32>
    %314 = vector.broadcast %16 : vector<1x32xf32> to vector<16x32xf32>
    %315 = arith.addf %313, %314 : vector<16x32xf32>
    %cst_83 = arith.constant dense<0.000000e+00> : vector<16x128xf32>
    %316 = tpu.matmul %315, %9, %cst_83 {dimension_numbers = #tpu.dot_dimension_numbers<[1], [0], [0], [1], [0, 0, 1, 1], [], []>} : vector<16x32xf32>, vector<32x128xf32>, vector<16x128xf32> -> vector<16x128xf32>
    %317 = vector.broadcast %17 : vector<1x128xf32> to vector<16x128xf32>
    %318 = arith.addf %316, %317 : vector<16x128xf32>
    %cst_84 = arith.constant 0.000000e+00 : f32
    %319 = vector.broadcast %cst_84 : f32 to vector<16x128xf32>
    %320 = arith.maximumf %318, %319 : vector<16x128xf32>
    %cst_85 = arith.constant dense<0.000000e+00> : vector<16x32xf32>
    %321 = tpu.matmul %320, %7, %cst_85 {dimension_numbers = #tpu.dot_dimension_numbers<[1], [0], [0], [1], [0, 0, 1, 1], [], []>} : vector<16x128xf32>, vector<128x32xf32>, vector<16x32xf32> -> vector<16x32xf32>
    %322 = vector.broadcast %18 : vector<1x32xf32> to vector<16x32xf32>
    %323 = arith.addf %321, %322 : vector<16x32xf32>
    %324 = arith.addf %315, %323 : vector<16x32xf32>
    %cst_86 = arith.constant dense<0.000000e+00> : vector<16xf32>
    %325 = vector.multi_reduction <add>, %324, %cst_86 [1] : vector<16x32xf32> to vector<16xf32>
    %326 = vector.shape_cast %325 : vector<16xf32> to vector<16x1xf32>
    %cst_87 = arith.constant 3.200000e+01 : f32
    %327 = vector.broadcast %cst_87 : f32 to vector<16x1xf32>
    %328 = arith.divf %326, %327 : vector<16x1xf32>
    %329 = vector.broadcast %328 : vector<16x1xf32> to vector<16x32xf32>
    %330 = arith.subf %324, %329 : vector<16x32xf32>
    %331 = arith.mulf %330, %330 : vector<16x32xf32>
    %cst_88 = arith.constant dense<0.000000e+00> : vector<16xf32>
    %332 = vector.multi_reduction <add>, %331, %cst_88 [1] : vector<16x32xf32> to vector<16xf32>
    %333 = vector.shape_cast %332 : vector<16xf32> to vector<16x1xf32>
    %cst_89 = arith.constant 3.200000e+01 : f32
    %334 = vector.broadcast %cst_89 : f32 to vector<16x1xf32>
    %335 = arith.divf %333, %334 : vector<16x1xf32>
    %336 = vector.broadcast %328 : vector<16x1xf32> to vector<16x32xf32>
    %337 = arith.subf %324, %336 : vector<16x32xf32>
    %cst_90 = arith.constant 9.99999974E-6 : f32
    %338 = vector.broadcast %cst_90 : f32 to vector<16x1xf32>
    %339 = arith.addf %335, %338 : vector<16x1xf32>
    %340 = math.rsqrt %339 : vector<16x1xf32>
    %341 = vector.broadcast %340 : vector<16x1xf32> to vector<16x32xf32>
    %342 = arith.mulf %337, %341 : vector<16x32xf32>
    %343 = vector.broadcast %19 : vector<1x32xf32> to vector<16x32xf32>
    %344 = arith.mulf %342, %343 : vector<16x32xf32>
    %345 = vector.broadcast %20 : vector<1x32xf32> to vector<16x32xf32>
    %346 = arith.addf %344, %345 : vector<16x32xf32>
    %cst_91 = arith.constant dense<0.000000e+00> : vector<8x32xf32>
    %347 = tpu.matmul %24, %346, %cst_91 {dimension_numbers = #tpu.dot_dimension_numbers<[1], [0], [0], [1], [0, 0, 1, 1], [], []>} : vector<8x16xf32>, vector<16x32xf32>, vector<8x32xf32> -> vector<8x32xf32>
    %cst_92 = arith.constant 0.000000e+00 : f32
    %348 = vector.broadcast %cst_92 : f32 to vector<8x32xf32>
    %349 = arith.cmpf ogt, %347, %348 : vector<8x32xf32>
    %cst_93 = arith.constant 0.000000e+00 : f32
    %350 = vector.broadcast %cst_93 : f32 to vector<8x32xf32>
    %351 = arith.minimumf %347, %350 : vector<8x32xf32>
    %352 = math.exp %351 : vector<8x32xf32>
    %cst_94 = arith.constant 1.000000e+00 : f32
    %353 = vector.broadcast %cst_94 : f32 to vector<8x32xf32>
    %354 = arith.subf %352, %353 : vector<8x32xf32>
    %cst_95 = arith.constant 1.67326319 : f32
    %355 = vector.broadcast %cst_95 : f32 to vector<8x32xf32>
    %356 = arith.mulf %355, %354 : vector<8x32xf32>
    %357 = arith.select %349, %347, %356 : vector<8x32xi1>, vector<8x32xf32>
    %cst_96 = arith.constant 1.05070102 : f32
    %358 = vector.broadcast %cst_96 : f32 to vector<8x32xf32>
    %359 = arith.mulf %358, %357 : vector<8x32xf32>
    %cst_97 = arith.constant dense<0.000000e+00> : vector<8x128xf32>
    %360 = tpu.matmul %359, %10, %cst_97 {dimension_numbers = #tpu.dot_dimension_numbers<[1], [0], [0], [1], [0, 0, 1, 1], [], []>} : vector<8x32xf32>, vector<32x128xf32>, vector<8x128xf32> -> vector<8x128xf32>
    %361 = vector.broadcast %21 : vector<1x128xf32> to vector<8x128xf32>
    %362 = arith.addf %360, %361 : vector<8x128xf32>
    %c0_98 = arith.constant 0 : index
    %c0_99 = arith.constant 0 : index
    %363 = vector.load %arg5[%c0_98, %c0_99] : memref<8x128xf32, #tpu.memory_space<vmem>>, vector<8x128xf32>
    tpu.vector_store %arg5[%c0_98, %c0_99], %362 {strides = array<i32>} : memref<8x128xf32, #tpu.memory_space<vmem>>, vector<8x128xf32>,
    return
  }
  func.func @transform_0(%arg0: i32) -> (i32, i32) {
    %c0_i32 = arith.constant 0 : i32
    %c0_i32_0 = arith.constant 0 : i32
    %c0_i32_1 = arith.constant 0 : i32
    return %c0_i32, %c0_i32_0 : i32, i32
  }
  func.func @transform_1(%arg0: i32) -> (i32, i32) {
    %c0_i32 = arith.constant 0 : i32
    %c0_i32_0 = arith.constant 0 : i32
    %c0_i32_1 = arith.constant 0 : i32
    return %c0_i32, %c0_i32_0 : i32, i32
  }
  func.func @transform_2(%arg0: i32) -> (i32, i32) {
    %c0_i32 = arith.constant 0 : i32
    %c0_i32_0 = arith.constant 0 : i32
    %c0_i32_1 = arith.constant 0 : i32
    return %c0_i32, %c0_i32_0 : i32, i32
  }
  func.func @transform_3(%arg0: i32) -> (i32, i32) {
    %c0_i32 = arith.constant 0 : i32
    %c0_i32_0 = arith.constant 0 : i32
    %c0_i32_1 = arith.constant 0 : i32
    return %c0_i32, %c0_i32_0 : i32, i32
  }
  func.func @transform_4(%arg0: i32) -> (i32, i32) {
    %c0_i32 = arith.constant 0 : i32
    %c0_i32_0 = arith.constant 0 : i32
    %c0_i32_1 = arith.constant 0 : i32
    return %c0_i32, %c0_i32_0 : i32, i32
  }
}

</mosaic_0001>

<llo_original>
// kernel: sentence_classifier_forward.1
$region0: #{sentence_classifier_forward.1}
  #allocation0 [shape = 'u32[]', space=smem, size = 0x4, offset = 0x4, fixed_abs, tag = 'smem constant byte address 0x4 - core index']
  #allocation1 [shape = 'u32[144,128]{1,0:T(1,128)}', space=vmem, size = 0x12000, scoped, tag = 'internal scratch']
  %s0 = inlined_call_operand.vmem [shape: s32[16,1], index: 0, kind: input, shape index: {}]
  %s1 = inlined_call_operand.vmem [shape: f32[336,32], index: 1, kind: input, shape index: {}]
  %s2 = inlined_call_operand.vmem [shape: f32[75,128], index: 2, kind: input, shape index: {}]
  %s3 = inlined_call_operand.vmem [shape: f32[24,16], index: 3, kind: input, shape index: {}]
  %s4 = inlined_call_operand.vmem [shape: f32[8,128], index: 4, kind: output, shape index: {}]
  %s5 = sld [smem:[#allocation0]]
  $region26: #{sentence_classifier_forward.1} parent=0
    _
  %s7 = ssub.s32 1, %s5
  %s8 = scalar_select 0, %s7, %s5
  // Predicated region
  $region2: #{sentence_classifier_forward.1} parent=0 // pred_check
    _
  $region3: #{sentence_classifier_forward.1} parent=0 // pred_check_branch
    %10 = sbr.rel (0) target = $region5
  $region4: #{sentence_classifier_forward.1} parent=0 // pred_region
    _
  $region5: #{sentence_classifier_forward.1} parent=0 // pred_fallthru
    _
  // Predicated region
  $region6: #{sentence_classifier_forward.1} parent=0 // pred_check
    _
  $region7: #{sentence_classifier_forward.1} parent=0 // pred_check_branch
    %12 = sbr.rel (0) target = $region9
  $region8: #{sentence_classifier_forward.1} parent=0 // pred_region
    _
  $region9: #{sentence_classifier_forward.1} parent=0 // pred_fallthru
    _
  // Predicated region
  $region10: #{sentence_classifier_forward.1} parent=0 // pred_check
    _
  $region11: #{sentence_classifier_forward.1} parent=0 // pred_check_branch
    %14 = sbr.rel (0) target = $region13
  $region12: #{sentence_classifier_forward.1} parent=0 // pred_region
    _
  $region13: #{sentence_classifier_forward.1} parent=0 // pred_fallthru
    _
  // Predicated region
  $region14: #{sentence_classifier_forward.1} parent=0 // pred_check
    _
  $region15: #{sentence_classifier_forward.1} parent=0 // pred_check_branch
    %16 = sbr.rel (0) target = $region17
  $region16: #{sentence_classifier_forward.1} parent=0 // pred_region
    _
  $region17: #{sentence_classifier_forward.1} parent=0 // pred_fallthru
    _
  %v17 = vld [vmem:[%s1] sm:$0xff]
  %v18 = vld [vmem:[%s1 + $0x8] sm:$0xff]
  %v19 = vld [vmem:[%s1 + $0x10] sm:$0xff]
  %v20 = vld [vmem:[%s1 + $0x18] sm:$0xff]
  %v21 = vld [vmem:[%s1 + $0x20] sm:$0xff]
  %v22 = vld [vmem:[%s1 + $0x28] sm:$0xff]
  %v23 = vld [vmem:[%s1 + $0x30] sm:$0xff]
  %v24 = vld [vmem:[%s1 + $0x38] sm:$0xff]
  %v25 = vld [vmem:[%s1 + $0x40] sm:$0xff]
  %v26 = vld [vmem:[%s1 + $0x48] sm:$0xff]
  %v27 = vld [vmem:[%s1 + $0x50] sm:$0xff]
  %v28 = vld [vmem:[%s1 + $0x58] sm:$0xff]
  %v29 = vld [vmem:[%s1 + $0x60] sm:$0xff]
  %v30 = vld [vmem:[%s1 + $0x68] sm:$0xff]
  %v31 = vld [vmem:[%s1 + $0x70] sm:$0xff]
  %v32 = vld [vmem:[%s1 + $0x78] sm:$0xff]
  %v33 = vld [vmem:[%s1 + $0x80] sm:$0xff]
  %v34 = vld [vmem:[%s1 + $0x88] sm:$0xff]
  %v35 = vld [vmem:[%s1 + $0x90] sm:$0xff]
  %v36 = vld [vmem:[%s1 + $0x98] sm:$0xff]
  %v37 = vld [vmem:[%s1 + $0xa0] sm:$0xff]
  %v38 = vld [vmem:[%s1 + $0xa8] sm:$0xff]
  %v39 = vld [vmem:[%s1 + $0xb0] sm:$0xff]
  %v40 = vld [vmem:[%s1 + $0xb8] sm:$0xff]
  %v41 = vld [vmem:[%s1 + $0xc0] sm:$0xff]
  %v42 = vld [vmem:[%s1 + $0xc8] sm:$0xff]
  %v43 = vld [vmem:[%s1 + $0xd0] sm:$0xff]
  %v44 = vld [vmem:[%s1 + $0xd8] sm:$0xff]
  %v45 = vld [vmem:[%s1 + $0xe0] sm:$0xff]
  %v46 = vld [vmem:[%s1 + $0xe8] sm:$0xff]
  %v47 = vld [vmem:[%s1 + $0xf0] sm:$0xff]
  %v48 = vld [vmem:[%s1 + $0xf8] sm:$0xff]
  %v49 = vld [vmem:[%s1 + $0x100] sm:$0xff]
  %v50 = vld [vmem:[%s1 + $0x108] sm:$0xff]
  %v51 = vld [vmem:[%s1 + $0x110] sm:$0xff]
  %v52 = vld [vmem:[%s1 + $0x118] sm:$0xff]
  %v53 = vld [vmem:[%s1 + $0x120] sm:$0xff]
  %v54 = vld [vmem:[%s1 + $0x128] sm:$0xff]
  %v55 = vld [vmem:[%s1 + $0x130] sm:$0xff]
  %v56 = vld [vmem:[%s1 + $0x138] sm:$0xff]
  %v57 = vld [vmem:[%s1 + $0x140] sm:$0xff]
  %v58 = vld [vmem:[%s1 + $0x148] sm:$0xff]
  %v59 = vld [vmem:[%s2] sm:$0xff]
  %v60 = vld [vmem:[%s2 + $0x8] sm:$0xff]
  %v61 = vld [vmem:[%s2 + $0x10] sm:$0xff]
  %v62 = vld [vmem:[%s2 + $0x18] sm:$0xff]
  %v63 = vld [vmem:[%s2 + $0x20] sm:$0xff]
  %v64 = vld [vmem:[%s2 + $0x28] sm:$0xff]
  %v65 = vld [vmem:[%s2 + $0x30] sm:$0xff]
  %v66 = vld [vmem:[%s2 + $0x38] sm:$0xff]
  %v67 = vld [vmem:[%s2 + $0x40] sm:$0xff]
  %v68 = vld [vmem:[%s2 + $0x48] sm:$0x7]
  %v69 = vld [vmem:[%s3] sm:$0xff]
  %v70 = vld [vmem:[%s3 + $0x8] sm:$0xff]
  %v71 = vld [vmem:[%s3 + $0x10] sm:$0xff]
  %v72 = vld [vmem:[%s0] sm:$0xff]
  %v73 = vld [vmem:[%s0 + $0x8] sm:$0xff]
  %v74 = vlaneseq
  %v75 = vand.u32 %v74, 127
  %76 = vset.pattern.permute.xlu0 0
  %77 = vperm.xlu0 %76, %v72
  %v78 = vpop.permute.xlu0 %77
  %79 = vset.pattern.permute.xlu0 0
  %80 = vperm.xlu0 %79, %v73
  %v81 = vpop.permute.xlu0 %80
  %vm82 = vcmp.eq.s32.totalorder %v75, %v78
  %vm83 = vcmp.eq.s32.totalorder %v75, %v81
  %v84 = vsel %vm82, 1, 0
  %v85 = vsel %vm83, 1, 0
  %v86 = vcvt.s32.f32 %v84
  %v87 = vcvt.s32.f32 %v85
  %vm88 = vcmask 523264
  %v90 = vsel %vm88, %v86, 0
  %v93 = vsel %vm88, %v87, 0
  %95 = vmatprep.subr.mxu0 0.0
  %96 = vmatpush1.msra.mxu0 %v17
  %97 = vmatprep.subr.mxu0 0.0
  %98 = vmatpush1.msra.mxu0 %v18
  %99 = vmatprep.subr.mxu0 0.0
  %100 = vmatpush1.msra.mxu0 %v19
  %101 = vmatprep.subr.mxu0 0.0
  %102 = vmatpush1.msra.mxu0 %v20
  %103 = vmatprep.subr.mxu0 0.0
  %104 = vmatpush1.msra.mxu0 %v21
  %105 = vmatprep.subr.mxu0 0.0
  %106 = vmatpush1.msra.mxu0 %v22
  %107 = vmatprep.subr.mxu0 0.0
  %108 = vmatpush1.msra.mxu0 %v23
  %109 = vmatprep.subr.mxu0 0.0
  %110 = vmatpush1.msra.mxu0 %v24
  %111 = vmatprep.subr.mxu0 0.0
  %112 = vmatpush1.msra.mxu0 0.0
  %113 = vmatprep.subr.mxu0 0.0
  %114 = vmatpush1.msra.mxu0 0.0
  %115 = vmatprep.subr.mxu0 0.0
  %116 = vmatpush1.msra.mxu0 0.0
  %117 = vmatprep.subr.mxu0 0.0
  %118 = vmatpush1.msra.mxu0 0.0
  %119 = vmatprep.subr.mxu0 0.0
  %120 = vmatpush1.msra.mxu0 0.0
  %121 = vmatprep.subr.mxu0 0.0
  %122 = vmatpush1.msra.mxu0 0.0
  %123 = vmatprep.subr.mxu0 0.0
  %124 = vmatpush1.msra.mxu0 0.0
  %125 = vmatprep.subr.mxu0 0.0
  %126 = vmatpush1.msra.mxu0 0.0
  %127 = vmatprep.subr.mxu0 0.0
  %128 = vmatpush1.msra.mxu0 0.0
  %129 = vmatprep.subr.mxu0 0.0
  %130 = vmatpush1.msra.mxu0 0.0
  %131 = vmatprep.subr.mxu0 0.0
  %132 = vmatpush1.msra.mxu0 0.0
  %133 = vmatprep.subr.mxu0 0.0
  %134 = vmatpush1.msra.mxu0 0.0
  %135 = vmatprep.subr.mxu0 0.0
  %136 = vmatpush1.msra.mxu0 0.0
  %137 = vmatprep.subr.mxu0 0.0
  %138 = vmatpush1.msra.mxu0 0.0
  %139 = vmatprep.subr.mxu0 0.0
  %140 = vmatpush1.msra.mxu0 0.0
  %141 = vmatprep.subr.mxu0 0.0
  %142 = vmatpush1.msra.mxu0 0.0
  %143 = vmatprep.subr.mxu0 0.0
  %144 = vmatpush1.msra.mxu0 0.0
  %145 = vmatprep.subr.mxu0 0.0
  %146 = vmatpush1.msra.mxu0 0.0
  %147 = vmatprep.subr.mxu0 0.0
  %148 = vmatpush1.msra.mxu0 0.0
  %149 = vmatprep.subr.mxu0 0.0
  %150 = vmatpush1.msra.mxu0 0.0
  %151 = vmatprep.subr.mxu0 0.0
  %152 = vmatpush1.msra.mxu0 0.0
  %153 = vmatprep.subr.mxu0 0.0
  %154 = vmatpush1.msra.mxu0 0.0
  %155 = vmatprep.subr.mxu0 0.0
  %156 = vmatpush1.msra.mxu0 0.0
  %157 = vmatprep.subr.mxu0 0.0
  %158 = vmatpush1.msra.mxu0 0.0
  %159 = vmatprep.mubr.f32.mxu0 0.0
  %160 = vmatmul.mubr.f32.gmra.mrb[0].mxu0 %v90
  %v161 = vpop.f32.mrb[0].mxu0
  %v162 = vadd.f32 %v25, %v161
  %v163 = vpop.f32.mrb[0].mxu0
  %164 = vmatprep.mubr.f32.mxu0 0.0
  %165 = vmatmul.mubr.f32.gmra.mrb[0].mxu0 %v93
  %v166 = vpop.f32.mrb[0].mxu0
  %v167 = vadd.f32 %v26, %v166
  %v168 = vpop.f32.mrb[0].mxu0
  %169 = vdwg.mxu0
  %v170 = vlaneseq
  %v171 = vshrl.u32 %v170, 7
  %v172 = vsub.s32 1, %v171
  %v173 = vrot.slane %v67, %v172
  %vm174 = vcmask 261120
  %v176 = vsel %vm174, %v162, 0
  %v179 = vsel %vm174, %v167, 0
  %181 = vmatprep.subr.mxu0 0.0
  %182 = vmatpush1.msra.mxu0 %v31
  %183 = vmatprep.subr.mxu0 0.0
  %184 = vmatpush1.msra.mxu0 %v32
  %185 = vmatprep.subr.mxu0 0.0
  %186 = vmatpush1.msra.mxu0 %v33
  %187 = vmatprep.subr.mxu0 0.0
  %188 = vmatpush1.msra.mxu0 %v34
  %189 = vmatprep.subr.mxu0 0.0
  %190 = vmatpush1.msra.mxu0 0.0
  %191 = vmatprep.subr.mxu0 0.0
  %192 = vmatpush1.msra.mxu0 0.0
  %193 = vmatprep.subr.mxu0 0.0
  %194 = vmatpush1.msra.mxu0 0.0
  %195 = vmatprep.subr.mxu0 0.0
  %196 = vmatpush1.msra.mxu0 0.0
  %197 = vmatprep.subr.mxu0 0.0
  %198 = vmatpush1.msra.mxu0 0.0
  %199 = vmatprep.subr.mxu0 0.0
  %200 = vmatpush1.msra.mxu0 0.0
  %201 = vmatprep.subr.mxu0 0.0
  %202 = vmatpush1.msra.mxu0 0.0
  %203 = vmatprep.subr.mxu0 0.0
  %204 = vmatpush1.msra.mxu0 0.0
  %205 = vmatprep.subr.mxu0 0.0
  %206 = vmatpush1.msra.mxu0 0.0
  %207 = vmatprep.subr.mxu0 0.0
  %208 = vmatpush1.msra.mxu0 0.0
  %209 = vmatprep.subr.mxu0 0.0
  %210 = vmatpush1.msra.mxu0 0.0
  %211 = vmatprep.subr.mxu0 0.0
  %212 = vmatpush1.msra.mxu0 0.0
  %213 = vmatprep.subr.mxu0 0.0
  %214 = vmatpush1.msra.mxu0 0.0
  %215 = vmatprep.subr.mxu0 0.0
  %216 = vmatpush1.msra.mxu0 0.0
  %217 = vmatprep.subr.mxu0 0.0
  %218 = vmatpush1.msra.mxu0 0.0
  %219 = vmatprep.subr.mxu0 0.0
  %220 = vmatpush1.msra.mxu0 0.0
  %221 = vmatprep.subr.mxu0 0.0
  %222 = vmatpush1.msra.mxu0 0.0
  %223 = vmatprep.subr.mxu0 0.0
  %224 = vmatpush1.msra.mxu0 0.0
  %225 = vmatprep.subr.mxu0 0.0
  %226 = vmatpush1.msra.mxu0 0.0
  %227 = vmatprep.subr.mxu0 0.0
  %228 = vmatpush1.msra.mxu0 0.0
  %229 = vmatprep.subr.mxu0 0.0
  %230 = vmatpush1.msra.mxu0 0.0
  %231 = vmatprep.subr.mxu0 0.0
  %232 = vmatpush1.msra.mxu0 0.0
  %233 = vmatprep.subr.mxu0 0.0
  %234 = vmatpush1.msra.mxu0 0.0
  %235 = vmatprep.subr.mxu0 0.0
  %236 = vmatpush1.msra.mxu0 0.0
  %237 = vmatprep.subr.mxu0 0.0
  %238 = vmatpush1.msra.mxu0 0.0
  %239 = vmatprep.subr.mxu0 0.0
  %240 = vmatpush1.msra.mxu0 0.0
  %241 = vmatprep.subr.mxu0 0.0
  %242 = vmatpush1.msra.mxu0 0.0
  %243 = vmatprep.subr.mxu0 0.0
  %244 = vmatpush1.msra.mxu0 0.0
  %245 = vmatprep.mubr.f32.mxu0 0.0
  %246 = vmatmul.mubr.f32.gmra.mrb[0].mxu0 %v176
  %v247 = vpop.f32.mrb[0].mxu0
  %v248 = vadd.f32 %v173, %v247
  %v249 = vpop.f32.mrb[0].mxu0
  %250 = vmatprep.mubr.f32.mxu0 0.0
  %251 = vmatmul.mubr.f32.gmra.mrb[0].mxu0 %v179
  %v252 = vpop.f32.mrb[0].mxu0
  %v253 = vadd.f32 %v173, %v252
  %v254 = vpop.f32.mrb[0].mxu0
  %255 = vdwg.mxu0
  %v256 = vlaneseq
  %v257 = vshrl.u32 %v256, 7
  %v258 = vsub.s32 0, %v257
  %v259 = vrot.slane %v67, %v258
  %260 = vmatprep.subr.mxu0 0.0
  %261 = vmatpush1.msra.mxu0 %v27
  %262 = vmatprep.subr.mxu0 0.0
  %263 = vmatpush1.msra.mxu0 %v28
  %264 = vmatprep.subr.mxu0 0.0
  %265 = vmatpush1.msra.mxu0 %v29
  %266 = vmatprep.subr.mxu0 0.0
  %267 = vmatpush1.msra.mxu0 %v30
  %268 = vmatprep.subr.mxu0 0.0
  %269 = vmatpush1.msra.mxu0 0.0
  %270 = vmatprep.subr.mxu0 0.0
  %271 = vmatpush1.msra.mxu0 0.0
  %272 = vmatprep.subr.mxu0 0.0
  %273 = vmatpush1.msra.mxu0 0.0
  %274 = vmatprep.subr.mxu0 0.0
  %275 = vmatpush1.msra.mxu0 0.0
  %276 = vmatprep.subr.mxu0 0.0
  %277 = vmatpush1.msra.mxu0 0.0
  %278 = vmatprep.subr.mxu0 0.0
  %279 = vmatpush1.msra.mxu0 0.0
  %280 = vmatprep.subr.mxu0 0.0
  %281 = vmatpush1.msra.mxu0 0.0
  %282 = vmatprep.subr.mxu0 0.0
  %283 = vmatpush1.msra.mxu0 0.0
  %284 = vmatprep.subr.mxu0 0.0
  %285 = vmatpush1.msra.mxu0 0.0
  %286 = vmatprep.subr.mxu0 0.0
  %287 = vmatpush1.msra.mxu0 0.0
  %288 = vmatprep.subr.mxu0 0.0
  %289 = vmatpush1.msra.mxu0 0.0
  %290 = vmatprep.subr.mxu0 0.0
  %291 = vmatpush1.msra.mxu0 0.0
  %292 = vmatprep.subr.mxu0 0.0
  %293 = vmatpush1.msra.mxu0 0.0
  %294 = vmatprep.subr.mxu0 0.0
  %295 = vmatpush1.msra.mxu0 0.0
  %296 = vmatprep.subr.mxu0 0.0
  %297 = vmatpush1.msra.mxu0 0.0
  %298 = vmatprep.subr.mxu0 0.0
  %299 = vmatpush1.msra.mxu0 0.0
  %300 = vmatprep.subr.mxu0 0.0
  %301 = vmatpush1.msra.mxu0 0.0
  %302 = vmatprep.subr.mxu0 0.0
  %303 = vmatpush1.msra.mxu0 0.0
  %304 = vmatprep.subr.mxu0 0.0
  %305 = vmatpush1.msra.mxu0 0.0
  %306 = vmatprep.subr.mxu0 0.0
  %307 = vmatpush1.msra.mxu0 0.0
  %308 = vmatprep.subr.mxu0 0.0
  %309 = vmatpush1.msra.mxu0 0.0
  %310 = vmatprep.subr.mxu0 0.0
  %311 = vmatpush1.msra.mxu0 0.0
  %312 = vmatprep.subr.mxu0 0.0
  %313 = vmatpush1.msra.mxu0 0.0
  %314 = vmatprep.subr.mxu0 0.0
  %315 = vmatpush1.msra.mxu0 0.0
  %316 = vmatprep.subr.mxu0 0.0
  %317 = vmatpush1.msra.mxu0 0.0
  %318 = vmatprep.subr.mxu0 0.0
  %319 = vmatpush1.msra.mxu0 0.0
  %320 = vmatprep.subr.mxu0 0.0
  %321 = vmatpush1.msra.mxu0 0.0
  %322 = vmatprep.subr.mxu0 0.0
  %323 = vmatpush1.msra.mxu0 0.0
  %324 = vmatprep.mubr.f32.mxu0 0.0
  %325 = vmatmul.mubr.f32.gmra.mrb[0].mxu0 %v176
  %v326 = vpop.f32.mrb[0].mxu0
  %v327 = vadd.f32 %v259, %v326
  %v328 = vpop.f32.mrb[0].mxu0
  %329 = vmatprep.mubr.f32.mxu0 0.0
  %330 = vmatmul.mubr.f32.gmra.mrb[0].mxu0 %v179
  %v331 = vpop.f32.mrb[0].mxu0
  %v332 = vadd.f32 %v259, %v331
  %v333 = vpop.f32.mrb[0].mxu0
  %334 = vdwg.mxu0
  %vm335 = vcmask 64512
  %v337 = vsel %vm335, %v327, 0
  %v340 = vsel %vm335, %v332, 0
  %v343 = vsel %vm335, %v248, 0
  %v346 = vsel %vm335, %v253, 0
  %348 = vmatprep.subr.mxu0 0.0
  %349 = vmatpush1.xpose.msra.mxu0 %v343
  %350 = vmatprep.subr.mxu0 0.0
  %351 = vmatpush1.xpose.msra.mxu0 %v346
  %352 = vmatprep.subr.mxu0 0.0
  %353 = vmatpush1.xpose.msra.mxu0 0.0
  %354 = vmatprep.subr.mxu0 0.0
  %355 = vmatpush1.xpose.msra.mxu0 0.0
  %356 = vmatprep.subr.mxu0 0.0
  %357 = vmatpush1.xpose.msra.mxu0 0.0
  %358 = vmatprep.subr.mxu0 0.0
  %359 = vmatpush1.xpose.msra.mxu0 0.0
  %360 = vmatprep.subr.mxu0 0.0
  %361 = vmatpush1.xpose.msra.mxu0 0.0
  %362 = vmatprep.subr.mxu0 0.0
  %363 = vmatpush1.xpose.msra.mxu0 0.0
  %364 = vmatprep.subr.mxu0 0.0
  %365 = vmatpush1.xpose.msra.mxu0 0.0
  %366 = vmatprep.subr.mxu0 0.0
  %367 = vmatpush1.xpose.msra.mxu0 0.0
  %368 = vmatprep.subr.mxu0 0.0
  %369 = vmatpush1.xpose.msra.mxu0 0.0
  %370 = vmatprep.subr.mxu0 0.0
  %371 = vmatpush1.xpose.msra.mxu0 0.0
  %372 = vmatprep.subr.mxu0 0.0
  %373 = vmatpush1.xpose.msra.mxu0 0.0
  %374 = vmatprep.subr.mxu0 0.0
  %375 = vmatpush1.xpose.msra.mxu0 0.0
  %376 = vmatprep.subr.mxu0 0.0
  %377 = vmatpush1.xpose.msra.mxu0 0.0
  %378 = vmatprep.subr.mxu0 0.0
  %379 = vmatpush1.xpose.msra.mxu0 0.0
  %380 = vmatprep.subr.mxu0 0.0
  %381 = vmatpush1.xpose.msra.mxu0 0.0
  %382 = vmatprep.subr.mxu0 0.0
  %383 = vmatpush1.xpose.msra.mxu0 0.0
  %384 = vmatprep.subr.mxu0 0.0
  %385 = vmatpush1.xpose.msra.mxu0 0.0
  %386 = vmatprep.subr.mxu0 0.0
  %387 = vmatpush1.xpose.msra.mxu0 0.0
  %388 = vmatprep.subr.mxu0 0.0
  %389 = vmatpush1.xpose.msra.mxu0 0.0
  %390 = vmatprep.subr.mxu0 0.0
  %391 = vmatpush1.xpose.msra.mxu0 0.0
  %392 = vmatprep.subr.mxu0 0.0
  %393 = vmatpush1.xpose.msra.mxu0 0.0
  %394 = vmatprep.subr.mxu0 0.0
  %395 = vmatpush1.xpose.msra.mxu0 0.0
  %396 = vmatprep.subr.mxu0 0.0
  %397 = vmatpush1.xpose.msra.mxu0 0.0
  %398 = vmatprep.subr.mxu0 0.0
  %399 = vmatpush1.xpose.msra.mxu0 0.0
  %400 = vmatprep.subr.mxu0 0.0
  %401 = vmatpush1.xpose.msra.mxu0 0.0
  %402 = vmatprep.subr.mxu0 0.0
  %403 = vmatpush1.xpose.msra.mxu0 0.0
  %404 = vmatprep.subr.mxu0 0.0
  %405 = vmatpush1.xpose.msra.mxu0 0.0
  %406 = vmatprep.subr.mxu0 0.0
  %407 = vmatpush1.xpose.msra.mxu0 0.0
  %408 = vmatprep.subr.mxu0 0.0
  %409 = vmatpush1.xpose.msra.mxu0 0.0
  %410 = vmatprep.subr.mxu0 0.0
  %411 = vmatpush1.xpose.msra.mxu0 0.0
  %412 = vmatprep.mubr.f32.mxu0 0.0
  %413 = vmatmul.mubr.f32.gmra.mrb[0].mxu0 %v337
  %v414 = vpop.f32.mrb[0].mxu0
  %v415 = vadd.f32 %v69, %v414
  %v416 = vpop.f32.mrb[0].mxu0
  %417 = vmatprep.mubr.f32.mxu0 0.0
  %418 = vmatmul.mubr.f32.gmra.mrb[0].mxu0 %v340
  %v419 = vpop.f32.mrb[0].mxu0
  %v420 = vadd.f32 %v70, %v419
  %v421 = vpop.f32.mrb[0].mxu0
  %422 = vdwg.mxu0
  %vm423 = vcmask 130048
  %v424 = vsel %vm423, %v415, -inf
  %425 = vmax.xlane.f32.xlu0 %v424
  %v426 = vpop.xlane.xlu0 %425
  %v427 = vsel %vm423, %v420, -inf
  %428 = vmax.xlane.f32.xlu0 %v427
  %v429 = vpop.xlane.xlu0 %428
  %v430 = vsub.f32 %v415, %v426
  %v431 = vsub.f32 %v420, %v429
  %v432 = vmul.f32 %v430, 1.442695
  %v433 = vpow.pop %v432
  %v434 = vmul.f32 %v431, 1.442695
  %v435 = vpow.pop %v434
  %v436 = vsel %vm423, %v433, 0.0
  %437 = vadd.xlane.f32.xlu0 %v436
  %v438 = vpop.xlane.xlu0 %437
  %v439 = vsel %vm423, %v435, 0.0
  %440 = vadd.xlane.f32.xlu0 %v439
  %v441 = vpop.xlane.xlu0 %440
  %v442 = vrcp.pop %v438
  %v443 = vrcp.pop %v441
  %v444 = vmul.f32 %v433, %v442
  %v445 = vmul.f32 %v435, %v443
  %v446 = vlaneseq
  %v447 = vshrl.u32 %v446, 7
  %v448 = vsub.s32 2, %v447
  %v449 = vrot.slane %v67, %v448
  %450 = vmatprep.subr.mxu0 0.0
  %451 = vmatpush1.msra.mxu0 %v35
  %452 = vmatprep.subr.mxu0 0.0
  %453 = vmatpush1.msra.mxu0 %v36
  %454 = vmatprep.subr.mxu0 0.0
  %455 = vmatpush1.msra.mxu0 %v37
  %456 = vmatprep.subr.mxu0 0.0
  %457 = vmatpush1.msra.mxu0 %v38
  %458 = vmatprep.subr.mxu0 0.0
  %459 = vmatpush1.msra.mxu0 0.0
  %460 = vmatprep.subr.mxu0 0.0
  %461 = vmatpush1.msra.mxu0 0.0
  %462 = vmatprep.subr.mxu0 0.0
  %463 = vmatpush1.msra.mxu0 0.0
  %464 = vmatprep.subr.mxu0 0.0
  %465 = vmatpush1.msra.mxu0 0.0
  %466 = vmatprep.subr.mxu0 0.0
  %467 = vmatpush1.msra.mxu0 0.0
  %468 = vmatprep.subr.mxu0 0.0
  %469 = vmatpush1.msra.mxu0 0.0
  %470 = vmatprep.subr.mxu0 0.0
  %471 = vmatpush1.msra.mxu0 0.0
  %472 = vmatprep.subr.mxu0 0.0
  %473 = vmatpush1.msra.mxu0 0.0
  %474 = vmatprep.subr.mxu0 0.0
  %475 = vmatpush1.msra.mxu0 0.0
  %476 = vmatprep.subr.mxu0 0.0
  %477 = vmatpush1.msra.mxu0 0.0
  %478 = vmatprep.subr.mxu0 0.0
  %479 = vmatpush1.msra.mxu0 0.0
  %480 = vmatprep.subr.mxu0 0.0
  %481 = vmatpush1.msra.mxu0 0.0
  %482 = vmatprep.subr.mxu0 0.0
  %483 = vmatpush1.msra.mxu0 0.0
  %484 = vmatprep.subr.mxu0 0.0
  %485 = vmatpush1.msra.mxu0 0.0
  %486 = vmatprep.subr.mxu0 0.0
  %487 = vmatpush1.msra.mxu0 0.0
  %488 = vmatprep.subr.mxu0 0.0
  %489 = vmatpush1.msra.mxu0 0.0
  %490 = vmatprep.subr.mxu0 0.0
  %491 = vmatpush1.msra.mxu0 0.0
  %492 = vmatprep.subr.mxu0 0.0
  %493 = vmatpush1.msra.mxu0 0.0
  %494 = vmatprep.subr.mxu0 0.0
  %495 = vmatpush1.msra.mxu0 0.0
  %496 = vmatprep.subr.mxu0 0.0
  %497 = vmatpush1.msra.mxu0 0.0
  %498 = vmatprep.subr.mxu0 0.0
  %499 = vmatpush1.msra.mxu0 0.0
  %500 = vmatprep.subr.mxu0 0.0
  %501 = vmatpush1.msra.mxu0 0.0
  %502 = vmatprep.subr.mxu0 0.0
  %503 = vmatpush1.msra.mxu0 0.0
  %504 = vmatprep.subr.mxu0 0.0
  %505 = vmatpush1.msra.mxu0 0.0
  %506 = vmatprep.subr.mxu0 0.0
  %507 = vmatpush1.msra.mxu0 0.0
  %508 = vmatprep.subr.mxu0 0.0
  %509 = vmatpush1.msra.mxu0 0.0
  %510 = vmatprep.subr.mxu0 0.0
  %511 = vmatpush1.msra.mxu0 0.0
  %512 = vmatprep.subr.mxu0 0.0
  %513 = vmatpush1.msra.mxu0 0.0
  %514 = vmatprep.mubr.f32.mxu0 0.0
  %515 = vmatmul.mubr.f32.gmra.mrb[0].mxu0 %v176
  %v516 = vpop.f32.mrb[0].mxu0
  %v517 = vadd.f32 %v449, %v516
  %v518 = vpop.f32.mrb[0].mxu0
  %519 = vmatprep.mubr.f32.mxu0 0.0
  %520 = vmatmul.mubr.f32.gmra.mrb[0].mxu0 %v179
  %v521 = vpop.f32.mrb[0].mxu0
  %v522 = vadd.f32 %v449, %v521
  %v523 = vpop.f32.mrb[0].mxu0
  %524 = vdwg.mxu0
  %v526 = vsel %vm423, %v444, 0
  %v529 = vsel %vm423, %v445, 0
  %531 = vmatprep.subr.mxu0 0.0
  %532 = vmatpush1.msra.mxu0 %v517
  %533 = vmatprep.subr.mxu0 0.0
  %534 = vmatpush1.msra.mxu0 %v522
  %535 = vmatprep.subr.mxu0 0.0
  %536 = vmatpush1.msra.mxu0 0.0
  %537 = vmatprep.subr.mxu0 0.0
  %538 = vmatpush1.msra.mxu0 0.0
  %539 = vmatprep.subr.mxu0 0.0
  %540 = vmatpush1.msra.mxu0 0.0
  %541 = vmatprep.subr.mxu0 0.0
  %542 = vmatpush1.msra.mxu0 0.0
  %543 = vmatprep.subr.mxu0 0.0
  %544 = vmatpush1.msra.mxu0 0.0
  %545 = vmatprep.subr.mxu0 0.0
  %546 = vmatpush1.msra.mxu0 0.0
  %547 = vmatprep.subr.mxu0 0.0
  %548 = vmatpush1.msra.mxu0 0.0
  %549 = vmatprep.subr.mxu0 0.0
  %550 = vmatpush1.msra.mxu0 0.0
  %551 = vmatprep.subr.mxu0 0.0
  %552 = vmatpush1.msra.mxu0 0.0
  %553 = vmatprep.subr.mxu0 0.0
  %554 = vmatpush1.msra.mxu0 0.0
  %555 = vmatprep.subr.mxu0 0.0
  %556 = vmatpush1.msra.mxu0 0.0
  %557 = vmatprep.subr.mxu0 0.0
  %558 = vmatpush1.msra.mxu0 0.0
  %559 = vmatprep.subr.mxu0 0.0
  %560 = vmatpush1.msra.mxu0 0.0
  %561 = vmatprep.subr.mxu0 0.0
  %562 = vmatpush1.msra.mxu0 0.0
  %563 = vmatprep.subr.mxu0 0.0
  %564 = vmatpush1.msra.mxu0 0.0
  %565 = vmatprep.subr.mxu0 0.0
  %566 = vmatpush1.msra.mxu0 0.0
  %567 = vmatprep.subr.mxu0 0.0
  %568 = vmatpush1.msra.mxu0 0.0
  %569 = vmatprep.subr.mxu0 0.0
  %570 = vmatpush1.msra.mxu0 0.0
  %571 = vmatprep.subr.mxu0 0.0
  %572 = vmatpush1.msra.mxu0 0.0
  %573 = vmatprep.subr.mxu0 0.0
  %574 = vmatpush1.msra.mxu0 0.0
  %575 = vmatprep.subr.mxu0 0.0
  %576 = vmatpush1.msra.mxu0 0.0
  %577 = vmatprep.subr.mxu0 0.0
  %578 = vmatpush1.msra.mxu0 0.0
  %579 = vmatprep.subr.mxu0 0.0
  %580 = vmatpush1.msra.mxu0 0.0
  %581 = vmatprep.subr.mxu0 0.0
  %582 = vmatpush1.msra.mxu0 0.0
  %583 = vmatprep.subr.mxu0 0.0
  %584 = vmatpush1.msra.mxu0 0.0
  %585 = vmatprep.subr.mxu0 0.0
  %586 = vmatpush1.msra.mxu0 0.0
  %587 = vmatprep.subr.mxu0 0.0
  %588 = vmatpush1.msra.mxu0 0.0
  %589 = vmatprep.subr.mxu0 0.0
  %590 = vmatpush1.msra.mxu0 0.0
  %591 = vmatprep.subr.mxu0 0.0
  %592 = vmatpush1.msra.mxu0 0.0
  %593 = vmatprep.subr.mxu0 0.0
  %594 = vmatpush1.msra.mxu0 0.0
  %595 = vmatprep.mubr.f32.mxu0 0.0
  %596 = vmatmul.mubr.f32.gmra.mrb[0].mxu0 %v526
  %v597 = vpop.f32.mrb[0].mxu0
  %v598 = vadd.f32 0.0, %v597
  %v599 = vpop.f32.mrb[0].mxu0
  %600 = vmatprep.mubr.f32.mxu0 0.0
  %601 = vmatmul.mubr.f32.gmra.mrb[0].mxu0 %v529
  %v602 = vpop.f32.mrb[0].mxu0
  %v603 = vadd.f32 0.0, %v602
  %v604 = vpop.f32.mrb[0].mxu0
  %605 = vdwg.mxu0
  %610 = vrot.lane.b32.xlu0 %v27, 120
  %v611 = vpop.permute.xlu0 %610
  %612 = vrot.lane.b32.xlu0 %v28, 120
  %v613 = vpop.permute.xlu0 %612
  %614 = vrot.lane.b32.xlu0 %v29, 120
  %v615 = vpop.permute.xlu0 %614
  %616 = vrot.lane.b32.xlu0 %v30, 120
  %v617 = vpop.permute.xlu0 %616
  %623 = vrot.lane.b32.xlu0 %v259, 120
  %v624 = vpop.permute.xlu0 %623
  %626 = vmatprep.subr.mxu0 0.0
  %627 = vmatpush1.msra.mxu0 %v611
  %628 = vmatprep.subr.mxu0 0.0
  %629 = vmatpush1.msra.mxu0 %v613
  %630 = vmatprep.subr.mxu0 0.0
  %631 = vmatpush1.msra.mxu0 %v615
  %632 = vmatprep.subr.mxu0 0.0
  %633 = vmatpush1.msra.mxu0 %v617
  %634 = vmatprep.subr.mxu0 0.0
  %635 = vmatpush1.msra.mxu0 0.0
  %636 = vmatprep.subr.mxu0 0.0
  %637 = vmatpush1.msra.mxu0 0.0
  %638 = vmatprep.subr.mxu0 0.0
  %639 = vmatpush1.msra.mxu0 0.0
  %640 = vmatprep.subr.mxu0 0.0
  %641 = vmatpush1.msra.mxu0 0.0
  %642 = vmatprep.subr.mxu0 0.0
  %643 = vmatpush1.msra.mxu0 0.0
  %644 = vmatprep.subr.mxu0 0.0
  %645 = vmatpush1.msra.mxu0 0.0
  %646 = vmatprep.subr.mxu0 0.0
  %647 = vmatpush1.msra.mxu0 0.0
  %648 = vmatprep.subr.mxu0 0.0
  %649 = vmatpush1.msra.mxu0 0.0
  %650 = vmatprep.subr.mxu0 0.0
  %651 = vmatpush1.msra.mxu0 0.0
  %652 = vmatprep.subr.mxu0 0.0
  %653 = vmatpush1.msra.mxu0 0.0
  %654 = vmatprep.subr.mxu0 0.0
  %655 = vmatpush1.msra.mxu0 0.0
  %656 = vmatprep.subr.mxu0 0.0
  %657 = vmatpush1.msra.mxu0 0.0
  %658 = vmatprep.subr.mxu0 0.0
  %659 = vmatpush1.msra.mxu0 0.0
  %660 = vmatprep.subr.mxu0 0.0
  %661 = vmatpush1.msra.mxu0 0.0
  %662 = vmatprep.subr.mxu0 0.0
  %663 = vmatpush1.msra.mxu0 0.0
  %664 = vmatprep.subr.mxu0 0.0
  %665 = vmatpush1.msra.mxu0 0.0
  %666 = vmatprep.subr.mxu0 0.0
  %667 = vmatpush1.msra.mxu0 0.0
  %668 = vmatprep.subr.mxu0 0.0
  %669 = vmatpush1.msra.mxu0 0.0
  %670 = vmatprep.subr.mxu0 0.0
  %671 = vmatpush1.msra.mxu0 0.0
  %672 = vmatprep.subr.mxu0 0.0
  %673 = vmatpush1.msra.mxu0 0.0
  %674 = vmatprep.subr.mxu0 0.0
  %675 = vmatpush1.msra.mxu0 0.0
  %676 = vmatprep.subr.mxu0 0.0
  %677 = vmatpush1.msra.mxu0 0.0
  %678 = vmatprep.subr.mxu0 0.0
  %679 = vmatpush1.msra.mxu0 0.0
  %680 = vmatprep.subr.mxu0 0.0
  %681 = vmatpush1.msra.mxu0 0.0
  %682 = vmatprep.subr.mxu0 0.0
  %683 = vmatpush1.msra.mxu0 0.0
  %684 = vmatprep.subr.mxu0 0.0
  %685 = vmatpush1.msra.mxu0 0.0
  %686 = vmatprep.subr.mxu0 0.0
  %687 = vmatpush1.msra.mxu0 0.0
  %688 = vmatprep.subr.mxu0 0.0
  %689 = vmatpush1.msra.mxu0 0.0
  %690 = vmatprep.mubr.f32.mxu0 0.0
  %691 = vmatmul.mubr.f32.gmra.mrb[0].mxu0 %v176
  %v692 = vpop.f32.mrb[0].mxu0
  %v693 = vadd.f32 %v624, %v692
  %v694 = vpop.f32.mrb[0].mxu0
  %695 = vmatprep.mubr.f32.mxu0 0.0
  %696 = vmatmul.mubr.f32.gmra.mrb[0].mxu0 %v179
  %v697 = vpop.f32.mrb[0].mxu0
  %v698 = vadd.f32 %v624, %v697
  %v699 = vpop.f32.mrb[0].mxu0
  %700 = vdwg.mxu0
  %701 = vrot.lane.b32.xlu0 %v248, 120
  %v702 = vpop.permute.xlu0 %701
  %703 = vrot.lane.b32.xlu0 %v253, 120
  %v704 = vpop.permute.xlu0 %703
  %v706 = vsel %vm335, %v693, 0
  %v709 = vsel %vm335, %v698, 0
  %v711 = vsel %vm335, %v702, 0
  %v713 = vsel %vm335, %v704, 0
  %715 = vmatprep.subr.mxu0 0.0
  %716 = vmatpush1.xpose.msra.mxu0 %v711
  %717 = vmatprep.subr.mxu0 0.0
  %718 = vmatpush1.xpose.msra.mxu0 %v713
  %719 = vmatprep.subr.mxu0 0.0
  %720 = vmatpush1.xpose.msra.mxu0 0.0
  %721 = vmatprep.subr.mxu0 0.0
  %722 = vmatpush1.xpose.msra.mxu0 0.0
  %723 = vmatprep.subr.mxu0 0.0
  %724 = vmatpush1.xpose.msra.mxu0 0.0
  %725 = vmatprep.subr.mxu0 0.0
  %726 = vmatpush1.xpose.msra.mxu0 0.0
  %727 = vmatprep.subr.mxu0 0.0
  %728 = vmatpush1.xpose.msra.mxu0 0.0
  %729 = vmatprep.subr.mxu0 0.0
  %730 = vmatpush1.xpose.msra.mxu0 0.0
  %731 = vmatprep.subr.mxu0 0.0
  %732 = vmatpush1.xpose.msra.mxu0 0.0
  %733 = vmatprep.subr.mxu0 0.0
  %734 = vmatpush1.xpose.msra.mxu0 0.0
  %735 = vmatprep.subr.mxu0 0.0
  %736 = vmatpush1.xpose.msra.mxu0 0.0
  %737 = vmatprep.subr.mxu0 0.0
  %738 = vmatpush1.xpose.msra.mxu0 0.0
  %739 = vmatprep.subr.mxu0 0.0
  %740 = vmatpush1.xpose.msra.mxu0 0.0
  %741 = vmatprep.subr.mxu0 0.0
  %742 = vmatpush1.xpose.msra.mxu0 0.0
  %743 = vmatprep.subr.mxu0 0.0
  %744 = vmatpush1.xpose.msra.mxu0 0.0
  %745 = vmatprep.subr.mxu0 0.0
  %746 = vmatpush1.xpose.msra.mxu0 0.0
  %747 = vmatprep.subr.mxu0 0.0
  %748 = vmatpush1.xpose.msra.mxu0 0.0
  %749 = vmatprep.subr.mxu0 0.0
  %750 = vmatpush1.xpose.msra.mxu0 0.0
  %751 = vmatprep.subr.mxu0 0.0
  %752 = vmatpush1.xpose.msra.mxu0 0.0
  %753 = vmatprep.subr.mxu0 0.0
  %754 = vmatpush1.xpose.msra.mxu0 0.0
  %755 = vmatprep.subr.mxu0 0.0
  %756 = vmatpush1.xpose.msra.mxu0 0.0
  %757 = vmatprep.subr.mxu0 0.0
  %758 = vmatpush1.xpose.msra.mxu0 0.0
  %759 = vmatprep.subr.mxu0 0.0
  %760 = vmatpush1.xpose.msra.mxu0 0.0
  %761 = vmatprep.subr.mxu0 0.0
  %762 = vmatpush1.xpose.msra.mxu0 0.0
  %763 = vmatprep.subr.mxu0 0.0
  %764 = vmatpush1.xpose.msra.mxu0 0.0
  %765 = vmatprep.subr.mxu0 0.0
  %766 = vmatpush1.xpose.msra.mxu0 0.0
  %767 = vmatprep.subr.mxu0 0.0
  %768 = vmatpush1.xpose.msra.mxu0 0.0
  %769 = vmatprep.subr.mxu0 0.0
  %770 = vmatpush1.xpose.msra.mxu0 0.0
  %771 = vmatprep.subr.mxu0 0.0
  %772 = vmatpush1.xpose.msra.mxu0 0.0
  %773 = vmatprep.subr.mxu0 0.0
  %774 = vmatpush1.xpose.msra.mxu0 0.0
  %775 = vmatprep.subr.mxu0 0.0
  %776 = vmatpush1.xpose.msra.mxu0 0.0
  %777 = vmatprep.subr.mxu0 0.0
  %778 = vmatpush1.xpose.msra.mxu0 0.0
  %779 = vmatprep.mubr.f32.mxu0 0.0
  %780 = vmatmul.mubr.f32.gmra.mrb[0].mxu0 %v706
  %v781 = vpop.f32.mrb[0].mxu0
  %v782 = vadd.f32 %v69, %v781
  %v783 = vpop.f32.mrb[0].mxu0
  %784 = vmatprep.mubr.f32.mxu0 0.0
  %785 = vmatmul.mubr.f32.gmra.mrb[0].mxu0 %v709
  %v786 = vpop.f32.mrb[0].mxu0
  %v787 = vadd.f32 %v70, %v786
  %v788 = vpop.f32.mrb[0].mxu0
  %789 = vdwg.mxu0
  %v790 = vsel %vm423, %v782, -inf
  %791 = vmax.xlane.f32.xlu0 %v790
  %v792 = vpop.xlane.xlu0 %791
  %v793 = vsel %vm423, %v787, -inf
  %794 = vmax.xlane.f32.xlu0 %v793
  %v795 = vpop.xlane.xlu0 %794
  %v796 = vsub.f32 %v782, %v792
  %v797 = vsub.f32 %v787, %v795
  %v798 = vmul.f32 %v796, 1.442695
  %v799 = vpow.pop %v798
  %v800 = vmul.f32 %v797, 1.442695
  %v801 = vpow.pop %v800
  %v802 = vsel %vm423, %v799, 0.0
  %803 = vadd.xlane.f32.xlu0 %v802
  %v804 = vpop.xlane.xlu0 %803
  %v805 = vsel %vm423, %v801, 0.0
  %806 = vadd.xlane.f32.xlu0 %v805
  %v807 = vpop.xlane.xlu0 %806
  %v808 = vrcp.pop %v804
  %v809 = vrcp.pop %v807
  %v810 = vmul.f32 %v799, %v808
  %v811 = vmul.f32 %v801, %v809
  %816 = vrot.lane.b32.xlu0 %v35, 120
  %v817 = vpop.permute.xlu0 %816
  %818 = vrot.lane.b32.xlu0 %v36, 120
  %v819 = vpop.permute.xlu0 %818
  %820 = vrot.lane.b32.xlu0 %v37, 120
  %v821 = vpop.permute.xlu0 %820
  %822 = vrot.lane.b32.xlu0 %v38, 120
  %v823 = vpop.permute.xlu0 %822
  %829 = vrot.lane.b32.xlu0 %v449, 120
  %v830 = vpop.permute.xlu0 %829
  %832 = vmatprep.subr.mxu0 0.0
  %833 = vmatpush1.msra.mxu0 %v817
  %834 = vmatprep.subr.mxu0 0.0
  %835 = vmatpush1.msra.mxu0 %v819
  %836 = vmatprep.subr.mxu0 0.0
  %837 = vmatpush1.msra.mxu0 %v821
  %838 = vmatprep.subr.mxu0 0.0
  %839 = vmatpush1.msra.mxu0 %v823
  %840 = vmatprep.subr.mxu0 0.0
  %841 = vmatpush1.msra.mxu0 0.0
  %842 = vmatprep.subr.mxu0 0.0
  %843 = vmatpush1.msra.mxu0 0.0
  %844 = vmatprep.subr.mxu0 0.0
  %845 = vmatpush1.msra.mxu0 0.0
  %846 = vmatprep.subr.mxu0 0.0
  %847 = vmatpush1.msra.mxu0 0.0
  %848 = vmatprep.subr.mxu0 0.0
  %849 = vmatpush1.msra.mxu0 0.0
  %850 = vmatprep.subr.mxu0 0.0
  %851 = vmatpush1.msra.mxu0 0.0
  %852 = vmatprep.subr.mxu0 0.0
  %853 = vmatpush1.msra.mxu0 0.0
  %854 = vmatprep.subr.mxu0 0.0
  %855 = vmatpush1.msra.mxu0 0.0
  %856 = vmatprep.subr.mxu0 0.0
  %857 = vmatpush1.msra.mxu0 0.0
  %858 = vmatprep.subr.mxu0 0.0
  %859 = vmatpush1.msra.mxu0 0.0
  %860 = vmatprep.subr.mxu0 0.0
  %861 = vmatpush1.msra.mxu0 0.0
  %862 = vmatprep.subr.mxu0 0.0
  %863 = vmatpush1.msra.mxu0 0.0
  %864 = vmatprep.subr.mxu0 0.0
  %865 = vmatpush1.msra.mxu0 0.0
  %866 = vmatprep.subr.mxu0 0.0
  %867 = vmatpush1.msra.mxu0 0.0
  %868 = vmatprep.subr.mxu0 0.0
  %869 = vmatpush1.msra.mxu0 0.0
  %870 = vmatprep.subr.mxu0 0.0
  %871 = vmatpush1.msra.mxu0 0.0
  %872 = vmatprep.subr.mxu0 0.0
  %873 = vmatpush1.msra.mxu0 0.0
  %874 = vmatprep.subr.mxu0 0.0
  %875 = vmatpush1.msra.mxu0 0.0
  %876 = vmatprep.subr.mxu0 0.0
  %877 = vmatpush1.msra.mxu0 0.0
  %878 = vmatprep.subr.mxu0 0.0
  %879 = vmatpush1.msra.mxu0 0.0
  %880 = vmatprep.subr.mxu0 0.0
  %881 = vmatpush1.msra.mxu0 0.0
  %882 = vmatprep.subr.mxu0 0.0
  %883 = vmatpush1.msra.mxu0 0.0
  %884 = vmatprep.subr.mxu0 0.0
  %885 = vmatpush1.msra.mxu0 0.0
  %886 = vmatprep.subr.mxu0 0.0
  %887 = vmatpush1.msra.mxu0 0.0
  %888 = vmatprep.subr.mxu0 0.0
  %889 = vmatpush1.msra.mxu0 0.0
  %890 = vmatprep.subr.mxu0 0.0
  %891 = vmatpush1.msra.mxu0 0.0
  %892 = vmatprep.subr.mxu0 0.0
  %893 = vmatpush1.msra.mxu0 0.0
  %894 = vmatprep.subr.mxu0 0.0
  %895 = vmatpush1.msra.mxu0 0.0
  %896 = vmatprep.mubr.f32.mxu0 0.0
  %897 = vmatmul.mubr.f32.gmra.mrb[0].mxu0 %v176
  %v898 = vpop.f32.mrb[0].mxu0
  %v899 = vadd.f32 %v830, %v898
  %v900 = vpop.f32.mrb[0].mxu0
  %901 = vmatprep.mubr.f32.mxu0 0.0
  %902 = vmatmul.mubr.f32.gmra.mrb[0].mxu0 %v179
  %v903 = vpop.f32.mrb[0].mxu0
  %v904 = vadd.f32 %v830, %v903
  %v905 = vpop.f32.mrb[0].mxu0
  %906 = vdwg.mxu0
  %v908 = vsel %vm423, %v810, 0
  %v911 = vsel %vm423, %v811, 0
  %913 = vmatprep.subr.mxu0 0.0
  %914 = vmatpush1.msra.mxu0 %v899
  %915 = vmatprep.subr.mxu0 0.0
  %916 = vmatpush1.msra.mxu0 %v904
  %917 = vmatprep.subr.mxu0 0.0
  %918 = vmatpush1.msra.mxu0 0.0
  %919 = vmatprep.subr.mxu0 0.0
  %920 = vmatpush1.msra.mxu0 0.0
  %921 = vmatprep.subr.mxu0 0.0
  %922 = vmatpush1.msra.mxu0 0.0
  %923 = vmatprep.subr.mxu0 0.0
  %924 = vmatpush1.msra.mxu0 0.0
  %925 = vmatprep.subr.mxu0 0.0
  %926 = vmatpush1.msra.mxu0 0.0
  %927 = vmatprep.subr.mxu0 0.0
  %928 = vmatpush1.msra.mxu0 0.0
  %929 = vmatprep.subr.mxu0 0.0
  %930 = vmatpush1.msra.mxu0 0.0
  %931 = vmatprep.subr.mxu0 0.0
  %932 = vmatpush1.msra.mxu0 0.0
  %933 = vmatprep.subr.mxu0 0.0
  %934 = vmatpush1.msra.mxu0 0.0
  %935 = vmatprep.subr.mxu0 0.0
  %936 = vmatpush1.msra.mxu0 0.0
  %937 = vmatprep.subr.mxu0 0.0
  %938 = vmatpush1.msra.mxu0 0.0
  %939 = vmatprep.subr.mxu0 0.0
  %940 = vmatpush1.msra.mxu0 0.0
  %941 = vmatprep.subr.mxu0 0.0
  %942 = vmatpush1.msra.mxu0 0.0
  %943 = vmatprep.subr.mxu0 0.0
  %944 = vmatpush1.msra.mxu0 0.0
  %945 = vmatprep.subr.mxu0 0.0
  %946 = vmatpush1.msra.mxu0 0.0
  %947 = vmatprep.subr.mxu0 0.0
  %948 = vmatpush1.msra.mxu0 0.0
  %949 = vmatprep.subr.mxu0 0.0
  %950 = vmatpush1.msra.mxu0 0.0
  %951 = vmatprep.subr.mxu0 0.0
  %952 = vmatpush1.msra.mxu0 0.0
  %953 = vmatprep.subr.mxu0 0.0
  %954 = vmatpush1.msra.mxu0 0.0
  %955 = vmatprep.subr.mxu0 0.0
  %956 = vmatpush1.msra.mxu0 0.0
  %957 = vmatprep.subr.mxu0 0.0
  %958 = vmatpush1.msra.mxu0 0.0
  %959 = vmatprep.subr.mxu0 0.0
  %960 = vmatpush1.msra.mxu0 0.0
  %961 = vmatprep.subr.mxu0 0.0
  %962 = vmatpush1.msra.mxu0 0.0
  %963 = vmatprep.subr.mxu0 0.0
  %964 = vmatpush1.msra.mxu0 0.0
  %965 = vmatprep.subr.mxu0 0.0
  %966 = vmatpush1.msra.mxu0 0.0
  %967 = vmatprep.subr.mxu0 0.0
  %968 = vmatpush1.msra.mxu0 0.0
  %969 = vmatprep.subr.mxu0 0.0
  %970 = vmatpush1.msra.mxu0 0.0
  %971 = vmatprep.subr.mxu0 0.0
  %972 = vmatpush1.msra.mxu0 0.0
  %973 = vmatprep.subr.mxu0 0.0
  %974 = vmatpush1.msra.mxu0 0.0
  %975 = vmatprep.subr.mxu0 0.0
  %976 = vmatpush1.msra.mxu0 0.0
  %977 = vmatprep.mubr.f32.mxu0 0.0
  %978 = vmatmul.mubr.f32.gmra.mrb[0].mxu0 %v908
  %v979 = vpop.f32.mrb[0].mxu0
  %v980 = vadd.f32 0.0, %v979
  %v981 = vpop.f32.mrb[0].mxu0
  %982 = vmatprep.mubr.f32.mxu0 0.0
  %983 = vmatmul.mubr.f32.gmra.mrb[0].mxu0 %v911
  %v984 = vpop.f32.mrb[0].mxu0
  %v985 = vadd.f32 0.0, %v984
  %v986 = vpop.f32.mrb[0].mxu0
  %987 = vdwg.mxu0
  %v989 = vsel %vm335, %v980, 0
  %v992 = vsel %vm335, %v985, 0
  %994 = vmatprep.subr.mxu0 0.0
  %995 = vmatpush1.msra.mxu0 %v40
  %996 = vmatprep.subr.mxu0 0.0
  %997 = vmatpush1.msra.mxu0 0.0
  %998 = vmatprep.subr.mxu0 0.0
  %999 = vmatpush1.msra.mxu0 0.0
  %1000 = vmatprep.subr.mxu0 0.0
  %1001 = vmatpush1.msra.mxu0 0.0
  %1002 = vmatprep.subr.mxu0 0.0
  %1003 = vmatpush1.msra.mxu0 0.0
  %1004 = vmatprep.subr.mxu0 0.0
  %1005 = vmatpush1.msra.mxu0 0.0
  %1006 = vmatprep.subr.mxu0 0.0
  %1007 = vmatpush1.msra.mxu0 0.0
  %1008 = vmatprep.subr.mxu0 0.0
  %1009 = vmatpush1.msra.mxu0 0.0
  %1010 = vmatprep.subr.mxu0 0.0
  %1011 = vmatpush1.msra.mxu0 0.0
  %1012 = vmatprep.subr.mxu0 0.0
  %1013 = vmatpush1.msra.mxu0 0.0
  %1014 = vmatprep.subr.mxu0 0.0
  %1015 = vmatpush1.msra.mxu0 0.0
  %1016 = vmatprep.subr.mxu0 0.0
  %1017 = vmatpush1.msra.mxu0 0.0
  %1018 = vmatprep.subr.mxu0 0.0
  %1019 = vmatpush1.msra.mxu0 0.0
  %1020 = vmatprep.subr.mxu0 0.0
  %1021 = vmatpush1.msra.mxu0 0.0
  %1022 = vmatprep.subr.mxu0 0.0
  %1023 = vmatpush1.msra.mxu0 0.0
  %1024 = vmatprep.subr.mxu0 0.0
  %1025 = vmatpush1.msra.mxu0 0.0
  %1026 = vmatprep.subr.mxu0 0.0
  %1027 = vmatpush1.msra.mxu0 0.0
  %1028 = vmatprep.subr.mxu0 0.0
  %1029 = vmatpush1.msra.mxu0 0.0
  %1030 = vmatprep.subr.mxu0 0.0
  %1031 = vmatpush1.msra.mxu0 0.0
  %1032 = vmatprep.subr.mxu0 0.0
  %1033 = vmatpush1.msra.mxu0 0.0
  %1034 = vmatprep.subr.mxu0 0.0
  %1035 = vmatpush1.msra.mxu0 0.0
  %1036 = vmatprep.subr.mxu0 0.0
  %1037 = vmatpush1.msra.mxu0 0.0
  %1038 = vmatprep.subr.mxu0 0.0
  %1039 = vmatpush1.msra.mxu0 0.0
  %1040 = vmatprep.subr.mxu0 0.0
  %1041 = vmatpush1.msra.mxu0 0.0
  %1042 = vmatprep.subr.mxu0 0.0
  %1043 = vmatpush1.msra.mxu0 0.0
  %1044 = vmatprep.subr.mxu0 0.0
  %1045 = vmatpush1.msra.mxu0 0.0
  %1046 = vmatprep.subr.mxu0 0.0
  %1047 = vmatpush1.msra.mxu0 0.0
  %1048 = vmatprep.subr.mxu0 0.0
  %1049 = vmatpush1.msra.mxu0 0.0
  %1050 = vmatprep.subr.mxu0 0.0
  %1051 = vmatpush1.msra.mxu0 0.0
  %1052 = vmatprep.subr.mxu0 0.0
  %1053 = vmatpush1.msra.mxu0 0.0
  %1054 = vmatprep.subr.mxu0 0.0
  %1055 = vmatpush1.msra.mxu0 0.0
  %1056 = vmatprep.subr.mxu0 0.0
  %1057 = vmatpush1.msra.mxu0 0.0
  %1058 = vmatprep.mubr.f32.mxu0 0.0
  %1059 = vmatmul.mubr.f32.gmra.mrb[0].mxu0 %v989
  %v1060 = vpop.f32.mrb[0].mxu0
  %v1061 = vadd.f32 0.0, %v1060
  %v1062 = vpop.f32.mrb[0].mxu0
  %1063 = vmatprep.mubr.f32.mxu0 0.0
  %1064 = vmatmul.mubr.f32.gmra.mrb[0].mxu0 %v992
  %v1065 = vpop.f32.mrb[0].mxu0
  %v1066 = vadd.f32 0.0, %v1065
  %v1067 = vpop.f32.mrb[0].mxu0
  %1068 = vdwg.mxu0
  %v1070 = vsel %vm335, %v598, 0
  %v1073 = vsel %vm335, %v603, 0
  %1075 = vmatprep.subr.mxu0 0.0
  %1076 = vmatpush1.msra.mxu0 %v39
  %1077 = vmatprep.subr.mxu0 0.0
  %1078 = vmatpush1.msra.mxu0 0.0
  %1079 = vmatprep.subr.mxu0 0.0
  %1080 = vmatpush1.msra.mxu0 0.0
  %1081 = vmatprep.subr.mxu0 0.0
  %1082 = vmatpush1.msra.mxu0 0.0
  %1083 = vmatprep.subr.mxu0 0.0
  %1084 = vmatpush1.msra.mxu0 0.0
  %1085 = vmatprep.subr.mxu0 0.0
  %1086 = vmatpush1.msra.mxu0 0.0
  %1087 = vmatprep.subr.mxu0 0.0
  %1088 = vmatpush1.msra.mxu0 0.0
  %1089 = vmatprep.subr.mxu0 0.0
  %1090 = vmatpush1.msra.mxu0 0.0
  %1091 = vmatprep.subr.mxu0 0.0
  %1092 = vmatpush1.msra.mxu0 0.0
  %1093 = vmatprep.subr.mxu0 0.0
  %1094 = vmatpush1.msra.mxu0 0.0
  %1095 = vmatprep.subr.mxu0 0.0
  %1096 = vmatpush1.msra.mxu0 0.0
  %1097 = vmatprep.subr.mxu0 0.0
  %1098 = vmatpush1.msra.mxu0 0.0
  %1099 = vmatprep.subr.mxu0 0.0
  %1100 = vmatpush1.msra.mxu0 0.0
  %1101 = vmatprep.subr.mxu0 0.0
  %1102 = vmatpush1.msra.mxu0 0.0
  %1103 = vmatprep.subr.mxu0 0.0
  %1104 = vmatpush1.msra.mxu0 0.0
  %1105 = vmatprep.subr.mxu0 0.0
  %1106 = vmatpush1.msra.mxu0 0.0
  %1107 = vmatprep.subr.mxu0 0.0
  %1108 = vmatpush1.msra.mxu0 0.0
  %1109 = vmatprep.subr.mxu0 0.0
  %1110 = vmatpush1.msra.mxu0 0.0
  %1111 = vmatprep.subr.mxu0 0.0
  %1112 = vmatpush1.msra.mxu0 0.0
  %1113 = vmatprep.subr.mxu0 0.0
  %1114 = vmatpush1.msra.mxu0 0.0
  %1115 = vmatprep.subr.mxu0 0.0
  %1116 = vmatpush1.msra.mxu0 0.0
  %1117 = vmatprep.subr.mxu0 0.0
  %1118 = vmatpush1.msra.mxu0 0.0
  %1119 = vmatprep.subr.mxu0 0.0
  %1120 = vmatpush1.msra.mxu0 0.0
  %1121 = vmatprep.subr.mxu0 0.0
  %1122 = vmatpush1.msra.mxu0 0.0
  %1123 = vmatprep.subr.mxu0 0.0
  %1124 = vmatpush1.msra.mxu0 0.0
  %1125 = vmatprep.subr.mxu0 0.0
  %1126 = vmatpush1.msra.mxu0 0.0
  %1127 = vmatprep.subr.mxu0 0.0
  %1128 = vmatpush1.msra.mxu0 0.0
  %1129 = vmatprep.subr.mxu0 0.0
  %1130 = vmatpush1.msra.mxu0 0.0
  %1131 = vmatprep.subr.mxu0 0.0
  %1132 = vmatpush1.msra.mxu0 0.0
  %1133 = vmatprep.subr.mxu0 0.0
  %1134 = vmatpush1.msra.mxu0 0.0
  %1135 = vmatprep.subr.mxu0 0.0
  %1136 = vmatpush1.msra.mxu0 0.0
  %1137 = vmatprep.subr.mxu0 0.0
  %1138 = vmatpush1.msra.mxu0 0.0
  %1139 = vmatprep.mubr.f32.mxu0 0.0
  %1140 = vmatmul.mubr.f32.gmra.mrb[0].mxu0 %v1070
  %v1141 = vpop.f32.mrb[0].mxu0
  %v1142 = vadd.f32 %v1061, %v1141
  %v1143 = vpop.f32.mrb[0].mxu0
  %1144 = vmatprep.mubr.f32.mxu0 0.0
  %1145 = vmatmul.mubr.f32.gmra.mrb[0].mxu0 %v1073
  %v1146 = vpop.f32.mrb[0].mxu0
  %v1147 = vadd.f32 %v1066, %v1146
  %v1148 = vpop.f32.mrb[0].mxu0
  %1149 = vdwg.mxu0
  %1150 = vrot.lane.b32.xlu0 %v27, 112
  %v1151 = vpop.permute.xlu0 %1150
  %1152 = vrot.lane.b32.xlu0 %v28, 112
  %v1153 = vpop.permute.xlu0 %1152
  %1154 = vrot.lane.b32.xlu0 %v29, 112
  %v1155 = vpop.permute.xlu0 %1154
  %1156 = vrot.lane.b32.xlu0 %v30, 112
  %v1157 = vpop.permute.xlu0 %1156
  %1162 = vrot.lane.b32.xlu0 %v259, 112
  %v1163 = vpop.permute.xlu0 %1162
  %1165 = vmatprep.subr.mxu0 0.0
  %1166 = vmatpush1.msra.mxu0 %v1151
  %1167 = vmatprep.subr.mxu0 0.0
  %1168 = vmatpush1.msra.mxu0 %v1153
  %1169 = vmatprep.subr.mxu0 0.0
  %1170 = vmatpush1.msra.mxu0 %v1155
  %1171 = vmatprep.subr.mxu0 0.0
  %1172 = vmatpush1.msra.mxu0 %v1157
  %1173 = vmatprep.subr.mxu0 0.0
  %1174 = vmatpush1.msra.mxu0 0.0
  %1175 = vmatprep.subr.mxu0 0.0
  %1176 = vmatpush1.msra.mxu0 0.0
  %1177 = vmatprep.subr.mxu0 0.0
  %1178 = vmatpush1.msra.mxu0 0.0
  %1179 = vmatprep.subr.mxu0 0.0
  %1180 = vmatpush1.msra.mxu0 0.0
  %1181 = vmatprep.subr.mxu0 0.0
  %1182 = vmatpush1.msra.mxu0 0.0
  %1183 = vmatprep.subr.mxu0 0.0
  %1184 = vmatpush1.msra.mxu0 0.0
  %1185 = vmatprep.subr.mxu0 0.0
  %1186 = vmatpush1.msra.mxu0 0.0
  %1187 = vmatprep.subr.mxu0 0.0
  %1188 = vmatpush1.msra.mxu0 0.0
  %1189 = vmatprep.subr.mxu0 0.0
  %1190 = vmatpush1.msra.mxu0 0.0
  %1191 = vmatprep.subr.mxu0 0.0
  %1192 = vmatpush1.msra.mxu0 0.0
  %1193 = vmatprep.subr.mxu0 0.0
  %1194 = vmatpush1.msra.mxu0 0.0
  %1195 = vmatprep.subr.mxu0 0.0
  %1196 = vmatpush1.msra.mxu0 0.0
  %1197 = vmatprep.subr.mxu0 0.0
  %1198 = vmatpush1.msra.mxu0 0.0
  %1199 = vmatprep.subr.mxu0 0.0
  %1200 = vmatpush1.msra.mxu0 0.0
  %1201 = vmatprep.subr.mxu0 0.0
  %1202 = vmatpush1.msra.mxu0 0.0
  %1203 = vmatprep.subr.mxu0 0.0
  %1204 = vmatpush1.msra.mxu0 0.0
  %1205 = vmatprep.subr.mxu0 0.0
  %1206 = vmatpush1.msra.mxu0 0.0
  %1207 = vmatprep.subr.mxu0 0.0
  %1208 = vmatpush1.msra.mxu0 0.0
  %1209 = vmatprep.subr.mxu0 0.0
  %1210 = vmatpush1.msra.mxu0 0.0
  %1211 = vmatprep.subr.mxu0 0.0
  %1212 = vmatpush1.msra.mxu0 0.0
  %1213 = vmatprep.subr.mxu0 0.0
  %1214 = vmatpush1.msra.mxu0 0.0
  %1215 = vmatprep.subr.mxu0 0.0
  %1216 = vmatpush1.msra.mxu0 0.0
  %1217 = vmatprep.subr.mxu0 0.0
  %1218 = vmatpush1.msra.mxu0 0.0
  %1219 = vmatprep.subr.mxu0 0.0
  %1220 = vmatpush1.msra.mxu0 0.0
  %1221 = vmatprep.subr.mxu0 0.0
  %1222 = vmatpush1.msra.mxu0 0.0
  %1223 = vmatprep.subr.mxu0 0.0
  %1224 = vmatpush1.msra.mxu0 0.0
  %1225 = vmatprep.subr.mxu0 0.0
  %1226 = vmatpush1.msra.mxu0 0.0
  %1227 = vmatprep.subr.mxu0 0.0
  %1228 = vmatpush1.msra.mxu0 0.0
  %1229 = vmatprep.mubr.f32.mxu0 0.0
  %1230 = vmatmul.mubr.f32.gmra.mrb[0].mxu0 %v176
  %v1231 = vpop.f32.mrb[0].mxu0
  %v1232 = vadd.f32 %v1163, %v1231
  %v1233 = vpop.f32.mrb[0].mxu0
  %1234 = vmatprep.mubr.f32.mxu0 0.0
  %1235 = vmatmul.mubr.f32.gmra.mrb[0].mxu0 %v179
  %v1236 = vpop.f32.mrb[0].mxu0
  %v1237 = vadd.f32 %v1163, %v1236
  %v1238 = vpop.f32.mrb[0].mxu0
  %1239 = vdwg.mxu0
  %1240 = vrot.lane.b32.xlu0 %v248, 112
  %v1241 = vpop.permute.xlu0 %1240
  %1242 = vrot.lane.b32.xlu0 %v253, 112
  %v1243 = vpop.permute.xlu0 %1242
  %v1245 = vsel %vm335, %v1232, 0
  %v1248 = vsel %vm335, %v1237, 0
  %v1250 = vsel %vm335, %v1241, 0
  %v1252 = vsel %vm335, %v1243, 0
  %1254 = vmatprep.subr.mxu0 0.0
  %1255 = vmatpush1.xpose.msra.mxu0 %v1250
  %1256 = vmatprep.subr.mxu0 0.0
  %1257 = vmatpush1.xpose.msra.mxu0 %v1252
  %1258 = vmatprep.subr.mxu0 0.0
  %1259 = vmatpush1.xpose.msra.mxu0 0.0
  %1260 = vmatprep.subr.mxu0 0.0
  %1261 = vmatpush1.xpose.msra.mxu0 0.0
  %1262 = vmatprep.subr.mxu0 0.0
  %1263 = vmatpush1.xpose.msra.mxu0 0.0
  %1264 = vmatprep.subr.mxu0 0.0
  %1265 = vmatpush1.xpose.msra.mxu0 0.0
  %1266 = vmatprep.subr.mxu0 0.0
  %1267 = vmatpush1.xpose.msra.mxu0 0.0
  %1268 = vmatprep.subr.mxu0 0.0
  %1269 = vmatpush1.xpose.msra.mxu0 0.0
  %1270 = vmatprep.subr.mxu0 0.0
  %1271 = vmatpush1.xpose.msra.mxu0 0.0
  %1272 = vmatprep.subr.mxu0 0.0
  %1273 = vmatpush1.xpose.msra.mxu0 0.0
  %1274 = vmatprep.subr.mxu0 0.0
  %1275 = vmatpush1.xpose.msra.mxu0 0.0
  %1276 = vmatprep.subr.mxu0 0.0
  %1277 = vmatpush1.xpose.msra.mxu0 0.0
  %1278 = vmatprep.subr.mxu0 0.0
  %1279 = vmatpush1.xpose.msra.mxu0 0.0
  %1280 = vmatprep.subr.mxu0 0.0
  %1281 = vmatpush1.xpose.msra.mxu0 0.0
  %1282 = vmatprep.subr.mxu0 0.0
  %1283 = vmatpush1.xpose.msra.mxu0 0.0
  %1284 = vmatprep.subr.mxu0 0.0
  %1285 = vmatpush1.xpose.msra.mxu0 0.0
  %1286 = vmatprep.subr.mxu0 0.0
  %1287 = vmatpush1.xpose.msra.mxu0 0.0
  %1288 = vmatprep.subr.mxu0 0.0
  %1289 = vmatpush1.xpose.msra.mxu0 0.0
  %1290 = vmatprep.subr.mxu0 0.0
  %1291 = vmatpush1.xpose.msra.mxu0 0.0
  %1292 = vmatprep.subr.mxu0 0.0
  %1293 = vmatpush1.xpose.msra.mxu0 0.0
  %1294 = vmatprep.subr.mxu0 0.0
  %1295 = vmatpush1.xpose.msra.mxu0 0.0
  %1296 = vmatprep.subr.mxu0 0.0
  %1297 = vmatpush1.xpose.msra.mxu0 0.0
  %1298 = vmatprep.subr.mxu0 0.0
  %1299 = vmatpush1.xpose.msra.mxu0 0.0
  %1300 = vmatprep.subr.mxu0 0.0
  %1301 = vmatpush1.xpose.msra.mxu0 0.0
  %1302 = vmatprep.subr.mxu0 0.0
  %1303 = vmatpush1.xpose.msra.mxu0 0.0
  %1304 = vmatprep.subr.mxu0 0.0
  %1305 = vmatpush1.xpose.msra.mxu0 0.0
  %1306 = vmatprep.subr.mxu0 0.0
  %1307 = vmatpush1.xpose.msra.mxu0 0.0
  %1308 = vmatprep.subr.mxu0 0.0
  %1309 = vmatpush1.xpose.msra.mxu0 0.0
  %1310 = vmatprep.subr.mxu0 0.0
  %1311 = vmatpush1.xpose.msra.mxu0 0.0
  %1312 = vmatprep.subr.mxu0 0.0
  %1313 = vmatpush1.xpose.msra.mxu0 0.0
  %1314 = vmatprep.subr.mxu0 0.0
  %1315 = vmatpush1.xpose.msra.mxu0 0.0
  %1316 = vmatprep.subr.mxu0 0.0
  %1317 = vmatpush1.xpose.msra.mxu0 0.0
  %1318 = vmatprep.mubr.f32.mxu0 0.0
  %1319 = vmatmul.mubr.f32.gmra.mrb[0].mxu0 %v1245
  %v1320 = vpop.f32.mrb[0].mxu0
  %v1321 = vadd.f32 %v69, %v1320
  %v1322 = vpop.f32.mrb[0].mxu0
  %1323 = vmatprep.mubr.f32.mxu0 0.0
  %1324 = vmatmul.mubr.f32.gmra.mrb[0].mxu0 %v1248
  %v1325 = vpop.f32.mrb[0].mxu0
  %v1326 = vadd.f32 %v70, %v1325
  %v1327 = vpop.f32.mrb[0].mxu0
  %1328 = vdwg.mxu0
  %v1329 = vsel %vm423, %v1321, -inf
  %1330 = vmax.xlane.f32.xlu0 %v1329
  %v1331 = vpop.xlane.xlu0 %1330
  %v1332 = vsel %vm423, %v1326, -inf
  %1333 = vmax.xlane.f32.xlu0 %v1332
  %v1334 = vpop.xlane.xlu0 %1333
  %v1335 = vsub.f32 %v1321, %v1331
  %v1336 = vsub.f32 %v1326, %v1334
  %v1337 = vmul.f32 %v1335, 1.442695
  %v1338 = vpow.pop %v1337
  %v1339 = vmul.f32 %v1336, 1.442695
  %v1340 = vpow.pop %v1339
  %v1341 = vsel %vm423, %v1338, 0.0
  %1342 = vadd.xlane.f32.xlu0 %v1341
  %v1343 = vpop.xlane.xlu0 %1342
  %v1344 = vsel %vm423, %v1340, 0.0
  %1345 = vadd.xlane.f32.xlu0 %v1344
  %v1346 = vpop.xlane.xlu0 %1345
  %v1347 = vrcp.pop %v1343
  %v1348 = vrcp.pop %v1346
  %v1349 = vmul.f32 %v1338, %v1347
  %v1350 = vmul.f32 %v1340, %v1348
  %1351 = vrot.lane.b32.xlu0 %v35, 112
  %v1352 = vpop.permute.xlu0 %1351
  %1353 = vrot.lane.b32.xlu0 %v36, 112
  %v1354 = vpop.permute.xlu0 %1353
  %1355 = vrot.lane.b32.xlu0 %v37, 112
  %v1356 = vpop.permute.xlu0 %1355
  %1357 = vrot.lane.b32.xlu0 %v38, 112
  %v1358 = vpop.permute.xlu0 %1357
  %1363 = vrot.lane.b32.xlu0 %v449, 112
  %v1364 = vpop.permute.xlu0 %1363
  %1366 = vmatprep.subr.mxu0 0.0
  %1367 = vmatpush1.msra.mxu0 %v1352
  %1368 = vmatprep.subr.mxu0 0.0
  %1369 = vmatpush1.msra.mxu0 %v1354
  %1370 = vmatprep.subr.mxu0 0.0
  %1371 = vmatpush1.msra.mxu0 %v1356
  %1372 = vmatprep.subr.mxu0 0.0
  %1373 = vmatpush1.msra.mxu0 %v1358
  %1374 = vmatprep.subr.mxu0 0.0
  %1375 = vmatpush1.msra.mxu0 0.0
  %1376 = vmatprep.subr.mxu0 0.0
  %1377 = vmatpush1.msra.mxu0 0.0
  %1378 = vmatprep.subr.mxu0 0.0
  %1379 = vmatpush1.msra.mxu0 0.0
  %1380 = vmatprep.subr.mxu0 0.0
  %1381 = vmatpush1.msra.mxu0 0.0
  %1382 = vmatprep.subr.mxu0 0.0
  %1383 = vmatpush1.msra.mxu0 0.0
  %1384 = vmatprep.subr.mxu0 0.0
  %1385 = vmatpush1.msra.mxu0 0.0
  %1386 = vmatprep.subr.mxu0 0.0
  %1387 = vmatpush1.msra.mxu0 0.0
  %1388 = vmatprep.subr.mxu0 0.0
  %1389 = vmatpush1.msra.mxu0 0.0
  %1390 = vmatprep.subr.mxu0 0.0
  %1391 = vmatpush1.msra.mxu0 0.0
  %1392 = vmatprep.subr.mxu0 0.0
  %1393 = vmatpush1.msra.mxu0 0.0
  %1394 = vmatprep.subr.mxu0 0.0
  %1395 = vmatpush1.msra.mxu0 0.0
  %1396 = vmatprep.subr.mxu0 0.0
  %1397 = vmatpush1.msra.mxu0 0.0
  %1398 = vmatprep.subr.mxu0 0.0
  %1399 = vmatpush1.msra.mxu0 0.0
  %1400 = vmatprep.subr.mxu0 0.0
  %1401 = vmatpush1.msra.mxu0 0.0
  %1402 = vmatprep.subr.mxu0 0.0
  %1403 = vmatpush1.msra.mxu0 0.0
  %1404 = vmatprep.subr.mxu0 0.0
  %1405 = vmatpush1.msra.mxu0 0.0
  %1406 = vmatprep.subr.mxu0 0.0
  %1407 = vmatpush1.msra.mxu0 0.0
  %1408 = vmatprep.subr.mxu0 0.0
  %1409 = vmatpush1.msra.mxu0 0.0
  %1410 = vmatprep.subr.mxu0 0.0
  %1411 = vmatpush1.msra.mxu0 0.0
  %1412 = vmatprep.subr.mxu0 0.0
  %1413 = vmatpush1.msra.mxu0 0.0
  %1414 = vmatprep.subr.mxu0 0.0
  %1415 = vmatpush1.msra.mxu0 0.0
  %1416 = vmatprep.subr.mxu0 0.0
  %1417 = vmatpush1.msra.mxu0 0.0
  %1418 = vmatprep.subr.mxu0 0.0
  %1419 = vmatpush1.msra.mxu0 0.0
  %1420 = vmatprep.subr.mxu0 0.0
  %1421 = vmatpush1.msra.mxu0 0.0
  %1422 = vmatprep.subr.mxu0 0.0
  %1423 = vmatpush1.msra.mxu0 0.0
  %1424 = vmatprep.subr.mxu0 0.0
  %1425 = vmatpush1.msra.mxu0 0.0
  %1426 = vmatprep.subr.mxu0 0.0
  %1427 = vmatpush1.msra.mxu0 0.0
  %1428 = vmatprep.subr.mxu0 0.0
  %1429 = vmatpush1.msra.mxu0 0.0
  %1430 = vmatprep.mubr.f32.mxu0 0.0
  %1431 = vmatmul.mubr.f32.gmra.mrb[0].mxu0 %v176
  %v1432 = vpop.f32.mrb[0].mxu0
  %v1433 = vadd.f32 %v1364, %v1432
  %v1434 = vpop.f32.mrb[0].mxu0
  %1435 = vmatprep.mubr.f32.mxu0 0.0
  %1436 = vmatmul.mubr.f32.gmra.mrb[0].mxu0 %v179
  %v1437 = vpop.f32.mrb[0].mxu0
  %v1438 = vadd.f32 %v1364, %v1437
  %v1439 = vpop.f32.mrb[0].mxu0
  %1440 = vdwg.mxu0
  %v1442 = vsel %vm423, %v1349, 0
  %v1445 = vsel %vm423, %v1350, 0
  %1447 = vmatprep.subr.mxu0 0.0
  %1448 = vmatpush1.msra.mxu0 %v1433
  %1449 = vmatprep.subr.mxu0 0.0
  %1450 = vmatpush1.msra.mxu0 %v1438
  %1451 = vmatprep.subr.mxu0 0.0
  %1452 = vmatpush1.msra.mxu0 0.0
  %1453 = vmatprep.subr.mxu0 0.0
  %1454 = vmatpush1.msra.mxu0 0.0
  %1455 = vmatprep.subr.mxu0 0.0
  %1456 = vmatpush1.msra.mxu0 0.0
  %1457 = vmatprep.subr.mxu0 0.0
  %1458 = vmatpush1.msra.mxu0 0.0
  %1459 = vmatprep.subr.mxu0 0.0
  %1460 = vmatpush1.msra.mxu0 0.0
  %1461 = vmatprep.subr.mxu0 0.0
  %1462 = vmatpush1.msra.mxu0 0.0
  %1463 = vmatprep.subr.mxu0 0.0
  %1464 = vmatpush1.msra.mxu0 0.0
  %1465 = vmatprep.subr.mxu0 0.0
  %1466 = vmatpush1.msra.mxu0 0.0
  %1467 = vmatprep.subr.mxu0 0.0
  %1468 = vmatpush1.msra.mxu0 0.0
  %1469 = vmatprep.subr.mxu0 0.0
  %1470 = vmatpush1.msra.mxu0 0.0
  %1471 = vmatprep.subr.mxu0 0.0
  %1472 = vmatpush1.msra.mxu0 0.0
  %1473 = vmatprep.subr.mxu0 0.0
  %1474 = vmatpush1.msra.mxu0 0.0
  %1475 = vmatprep.subr.mxu0 0.0
  %1476 = vmatpush1.msra.mxu0 0.0
  %1477 = vmatprep.subr.mxu0 0.0
  %1478 = vmatpush1.msra.mxu0 0.0
  %1479 = vmatprep.subr.mxu0 0.0
  %1480 = vmatpush1.msra.mxu0 0.0
  %1481 = vmatprep.subr.mxu0 0.0
  %1482 = vmatpush1.msra.mxu0 0.0
  %1483 = vmatprep.subr.mxu0 0.0
  %1484 = vmatpush1.msra.mxu0 0.0
  %1485 = vmatprep.subr.mxu0 0.0
  %1486 = vmatpush1.msra.mxu0 0.0
  %1487 = vmatprep.subr.mxu0 0.0
  %1488 = vmatpush1.msra.mxu0 0.0
  %1489 = vmatprep.subr.mxu0 0.0
  %1490 = vmatpush1.msra.mxu0 0.0
  %1491 = vmatprep.subr.mxu0 0.0
  %1492 = vmatpush1.msra.mxu0 0.0
  %1493 = vmatprep.subr.mxu0 0.0
  %1494 = vmatpush1.msra.mxu0 0.0
  %1495 = vmatprep.subr.mxu0 0.0
  %1496 = vmatpush1.msra.mxu0 0.0
  %1497 = vmatprep.subr.mxu0 0.0
  %1498 = vmatpush1.msra.mxu0 0.0
  %1499 = vmatprep.subr.mxu0 0.0
  %1500 = vmatpush1.msra.mxu0 0.0
  %1501 = vmatprep.subr.mxu0 0.0
  %1502 = vmatpush1.msra.mxu0 0.0
  %1503 = vmatprep.subr.mxu0 0.0
  %1504 = vmatpush1.msra.mxu0 0.0
  %1505 = vmatprep.subr.mxu0 0.0
  %1506 = vmatpush1.msra.mxu0 0.0
  %1507 = vmatprep.subr.mxu0 0.0
  %1508 = vmatpush1.msra.mxu0 0.0
  %1509 = vmatprep.subr.mxu0 0.0
  %1510 = vmatpush1.msra.mxu0 0.0
  %1511 = vmatprep.mubr.f32.mxu0 0.0
  %1512 = vmatmul.mubr.f32.gmra.mrb[0].mxu0 %v1442
  %v1513 = vpop.f32.mrb[0].mxu0
  %v1514 = vadd.f32 0.0, %v1513
  %v1515 = vpop.f32.mrb[0].mxu0
  %1516 = vmatprep.mubr.f32.mxu0 0.0
  %1517 = vmatmul.mubr.f32.gmra.mrb[0].mxu0 %v1445
  %v1518 = vpop.f32.mrb[0].mxu0
  %v1519 = vadd.f32 0.0, %v1518
  %v1520 = vpop.f32.mrb[0].mxu0
  %1521 = vdwg.mxu0
  %v1523 = vsel %vm335, %v1514, 0
  %v1526 = vsel %vm335, %v1519, 0
  %1528 = vmatprep.subr.mxu0 0.0
  %1529 = vmatpush1.msra.mxu0 %v41
  %1530 = vmatprep.subr.mxu0 0.0
  %1531 = vmatpush1.msra.mxu0 0.0
  %1532 = vmatprep.subr.mxu0 0.0
  %1533 = vmatpush1.msra.mxu0 0.0
  %1534 = vmatprep.subr.mxu0 0.0
  %1535 = vmatpush1.msra.mxu0 0.0
  %1536 = vmatprep.subr.mxu0 0.0
  %1537 = vmatpush1.msra.mxu0 0.0
  %1538 = vmatprep.subr.mxu0 0.0
  %1539 = vmatpush1.msra.mxu0 0.0
  %1540 = vmatprep.subr.mxu0 0.0
  %1541 = vmatpush1.msra.mxu0 0.0
  %1542 = vmatprep.subr.mxu0 0.0
  %1543 = vmatpush1.msra.mxu0 0.0
  %1544 = vmatprep.subr.mxu0 0.0
  %1545 = vmatpush1.msra.mxu0 0.0
  %1546 = vmatprep.subr.mxu0 0.0
  %1547 = vmatpush1.msra.mxu0 0.0
  %1548 = vmatprep.subr.mxu0 0.0
  %1549 = vmatpush1.msra.mxu0 0.0
  %1550 = vmatprep.subr.mxu0 0.0
  %1551 = vmatpush1.msra.mxu0 0.0
  %1552 = vmatprep.subr.mxu0 0.0
  %1553 = vmatpush1.msra.mxu0 0.0
  %1554 = vmatprep.subr.mxu0 0.0
  %1555 = vmatpush1.msra.mxu0 0.0
  %1556 = vmatprep.subr.mxu0 0.0
  %1557 = vmatpush1.msra.mxu0 0.0
  %1558 = vmatprep.subr.mxu0 0.0
  %1559 = vmatpush1.msra.mxu0 0.0
  %1560 = vmatprep.subr.mxu0 0.0
  %1561 = vmatpush1.msra.mxu0 0.0
  %1562 = vmatprep.subr.mxu0 0.0
  %1563 = vmatpush1.msra.mxu0 0.0
  %1564 = vmatprep.subr.mxu0 0.0
  %1565 = vmatpush1.msra.mxu0 0.0
  %1566 = vmatprep.subr.mxu0 0.0
  %1567 = vmatpush1.msra.mxu0 0.0
  %1568 = vmatprep.subr.mxu0 0.0
  %1569 = vmatpush1.msra.mxu0 0.0
  %1570 = vmatprep.subr.mxu0 0.0
  %1571 = vmatpush1.msra.mxu0 0.0
  %1572 = vmatprep.subr.mxu0 0.0
  %1573 = vmatpush1.msra.mxu0 0.0
  %1574 = vmatprep.subr.mxu0 0.0
  %1575 = vmatpush1.msra.mxu0 0.0
  %1576 = vmatprep.subr.mxu0 0.0
  %1577 = vmatpush1.msra.mxu0 0.0
  %1578 = vmatprep.subr.mxu0 0.0
  %1579 = vmatpush1.msra.mxu0 0.0
  %1580 = vmatprep.subr.mxu0 0.0
  %1581 = vmatpush1.msra.mxu0 0.0
  %1582 = vmatprep.subr.mxu0 0.0
  %1583 = vmatpush1.msra.mxu0 0.0
  %1584 = vmatprep.subr.mxu0 0.0
  %1585 = vmatpush1.msra.mxu0 0.0
  %1586 = vmatprep.subr.mxu0 0.0
  %1587 = vmatpush1.msra.mxu0 0.0
  %1588 = vmatprep.subr.mxu0 0.0
  %1589 = vmatpush1.msra.mxu0 0.0
  %1590 = vmatprep.subr.mxu0 0.0
  %1591 = vmatpush1.msra.mxu0 0.0
  %1592 = vmatprep.mubr.f32.mxu0 0.0
  %1593 = vmatmul.mubr.f32.gmra.mrb[0].mxu0 %v1523
  %v1594 = vpop.f32.mrb[0].mxu0
  %v1595 = vadd.f32 0.0, %v1594
  %v1596 = vpop.f32.mrb[0].mxu0
  %1597 = vmatprep.mubr.f32.mxu0 0.0
  %1598 = vmatmul.mubr.f32.gmra.mrb[0].mxu0 %v1526
  %v1599 = vpop.f32.mrb[0].mxu0
  %v1600 = vadd.f32 0.0, %v1599
  %v1601 = vpop.f32.mrb[0].mxu0
  %1602 = vdwg.mxu0
  %v1603 = vadd.f32 %v1142, %v1595
  %v1604 = vadd.f32 %v1147, %v1600
  %1605 = vrot.lane.b32.xlu0 %v27, 104
  %v1606 = vpop.permute.xlu0 %1605
  %1607 = vrot.lane.b32.xlu0 %v28, 104
  %v1608 = vpop.permute.xlu0 %1607
  %1609 = vrot.lane.b32.xlu0 %v29, 104
  %v1610 = vpop.permute.xlu0 %1609
  %1611 = vrot.lane.b32.xlu0 %v30, 104
  %v1612 = vpop.permute.xlu0 %1611
  %1617 = vrot.lane.b32.xlu0 %v259, 104
  %v1618 = vpop.permute.xlu0 %1617
  %1620 = vmatprep.subr.mxu0 0.0
  %1621 = vmatpush1.msra.mxu0 %v1606
  %1622 = vmatprep.subr.mxu0 0.0
  %1623 = vmatpush1.msra.mxu0 %v1608
  %1624 = vmatprep.subr.mxu0 0.0
  %1625 = vmatpush1.msra.mxu0 %v1610
  %1626 = vmatprep.subr.mxu0 0.0
  %1627 = vmatpush1.msra.mxu0 %v1612
  %1628 = vmatprep.subr.mxu0 0.0
  %1629 = vmatpush1.msra.mxu0 0.0
  %1630 = vmatprep.subr.mxu0 0.0
  %1631 = vmatpush1.msra.mxu0 0.0
  %1632 = vmatprep.subr.mxu0 0.0
  %1633 = vmatpush1.msra.mxu0 0.0
  %1634 = vmatprep.subr.mxu0 0.0
  %1635 = vmatpush1.msra.mxu0 0.0
  %1636 = vmatprep.subr.mxu0 0.0
  %1637 = vmatpush1.msra.mxu0 0.0
  %1638 = vmatprep.subr.mxu0 0.0
  %1639 = vmatpush1.msra.mxu0 0.0
  %1640 = vmatprep.subr.mxu0 0.0
  %1641 = vmatpush1.msra.mxu0 0.0
  %1642 = vmatprep.subr.mxu0 0.0
  %1643 = vmatpush1.msra.mxu0 0.0
  %1644 = vmatprep.subr.mxu0 0.0
  %1645 = vmatpush1.msra.mxu0 0.0
  %1646 = vmatprep.subr.mxu0 0.0
  %1647 = vmatpush1.msra.mxu0 0.0
  %1648 = vmatprep.subr.mxu0 0.0
  %1649 = vmatpush1.msra.mxu0 0.0
  %1650 = vmatprep.subr.mxu0 0.0
  %1651 = vmatpush1.msra.mxu0 0.0
  %1652 = vmatprep.subr.mxu0 0.0
  %1653 = vmatpush1.msra.mxu0 0.0
  %1654 = vmatprep.subr.mxu0 0.0
  %1655 = vmatpush1.msra.mxu0 0.0
  %1656 = vmatprep.subr.mxu0 0.0
  %1657 = vmatpush1.msra.mxu0 0.0
  %1658 = vmatprep.subr.mxu0 0.0
  %1659 = vmatpush1.msra.mxu0 0.0
  %1660 = vmatprep.subr.mxu0 0.0
  %1661 = vmatpush1.msra.mxu0 0.0
  %1662 = vmatprep.subr.mxu0 0.0
  %1663 = vmatpush1.msra.mxu0 0.0
  %1664 = vmatprep.subr.mxu0 0.0
  %1665 = vmatpush1.msra.mxu0 0.0
  %1666 = vmatprep.subr.mxu0 0.0
  %1667 = vmatpush1.msra.mxu0 0.0
  %1668 = vmatprep.subr.mxu0 0.0
  %1669 = vmatpush1.msra.mxu0 0.0
  %1670 = vmatprep.subr.mxu0 0.0
  %1671 = vmatpush1.msra.mxu0 0.0
  %1672 = vmatprep.subr.mxu0 0.0
  %1673 = vmatpush1.msra.mxu0 0.0
  %1674 = vmatprep.subr.mxu0 0.0
  %1675 = vmatpush1.msra.mxu0 0.0
  %1676 = vmatprep.subr.mxu0 0.0
  %1677 = vmatpush1.msra.mxu0 0.0
  %1678 = vmatprep.subr.mxu0 0.0
  %1679 = vmatpush1.msra.mxu0 0.0
  %1680 = vmatprep.subr.mxu0 0.0
  %1681 = vmatpush1.msra.mxu0 0.0
  %1682 = vmatprep.subr.mxu0 0.0
  %1683 = vmatpush1.msra.mxu0 0.0
  %1684 = vmatprep.mubr.f32.mxu0 0.0
  %1685 = vmatmul.mubr.f32.gmra.mrb[0].mxu0 %v176
  %v1686 = vpop.f32.mrb[0].mxu0
  %v1687 = vadd.f32 %v1618, %v1686
  %v1688 = vpop.f32.mrb[0].mxu0
  %1689 = vmatprep.mubr.f32.mxu0 0.0
  %1690 = vmatmul.mubr.f32.gmra.mrb[0].mxu0 %v179
  %v1691 = vpop.f32.mrb[0].mxu0
  %v1692 = vadd.f32 %v1618, %v1691
  %v1693 = vpop.f32.mrb[0].mxu0
  %1694 = vdwg.mxu0
  %1695 = vrot.lane.b32.xlu0 %v248, 104
  %v1696 = vpop.permute.xlu0 %1695
  %1697 = vrot.lane.b32.xlu0 %v253, 104
  %v1698 = vpop.permute.xlu0 %1697
  %v1700 = vsel %vm335, %v1687, 0
  %v1703 = vsel %vm335, %v1692, 0
  %v1705 = vsel %vm335, %v1696, 0
  %v1707 = vsel %vm335, %v1698, 0
  %1709 = vmatprep.subr.mxu0 0.0
  %1710 = vmatpush1.xpose.msra.mxu0 %v1705
  %1711 = vmatprep.subr.mxu0 0.0
  %1712 = vmatpush1.xpose.msra.mxu0 %v1707
  %1713 = vmatprep.subr.mxu0 0.0
  %1714 = vmatpush1.xpose.msra.mxu0 0.0
  %1715 = vmatprep.subr.mxu0 0.0
  %1716 = vmatpush1.xpose.msra.mxu0 0.0
  %1717 = vmatprep.subr.mxu0 0.0
  %1718 = vmatpush1.xpose.msra.mxu0 0.0
  %1719 = vmatprep.subr.mxu0 0.0
  %1720 = vmatpush1.xpose.msra.mxu0 0.0
  %1721 = vmatprep.subr.mxu0 0.0
  %1722 = vmatpush1.xpose.msra.mxu0 0.0
  %1723 = vmatprep.subr.mxu0 0.0
  %1724 = vmatpush1.xpose.msra.mxu0 0.0
  %1725 = vmatprep.subr.mxu0 0.0
  %1726 = vmatpush1.xpose.msra.mxu0 0.0
  %1727 = vmatprep.subr.mxu0 0.0
  %1728 = vmatpush1.xpose.msra.mxu0 0.0
  %1729 = vmatprep.subr.mxu0 0.0
  %1730 = vmatpush1.xpose.msra.mxu0 0.0
  %1731 = vmatprep.subr.mxu0 0.0
  %1732 = vmatpush1.xpose.msra.mxu0 0.0
  %1733 = vmatprep.subr.mxu0 0.0
  %1734 = vmatpush1.xpose.msra.mxu0 0.0
  %1735 = vmatprep.subr.mxu0 0.0
  %1736 = vmatpush1.xpose.msra.mxu0 0.0
  %1737 = vmatprep.subr.mxu0 0.0
  %1738 = vmatpush1.xpose.msra.mxu0 0.0
  %1739 = vmatprep.subr.mxu0 0.0
  %1740 = vmatpush1.xpose.msra.mxu0 0.0
  %1741 = vmatprep.subr.mxu0 0.0
  %1742 = vmatpush1.xpose.msra.mxu0 0.0
  %1743 = vmatprep.subr.mxu0 0.0
  %1744 = vmatpush1.xpose.msra.mxu0 0.0
  %1745 = vmatprep.subr.mxu0 0.0
  %1746 = vmatpush1.xpose.msra.mxu0 0.0
  %1747 = vmatprep.subr.mxu0 0.0
  %1748 = vmatpush1.xpose.msra.mxu0 0.0
  %1749 = vmatprep.subr.mxu0 0.0
  %1750 = vmatpush1.xpose.msra.mxu0 0.0
  %1751 = vmatprep.subr.mxu0 0.0
  %1752 = vmatpush1.xpose.msra.mxu0 0.0
  %1753 = vmatprep.subr.mxu0 0.0
  %1754 = vmatpush1.xpose.msra.mxu0 0.0
  %1755 = vmatprep.subr.mxu0 0.0
  %1756 = vmatpush1.xpose.msra.mxu0 0.0
  %1757 = vmatprep.subr.mxu0 0.0
  %1758 = vmatpush1.xpose.msra.mxu0 0.0
  %1759 = vmatprep.subr.mxu0 0.0
  %1760 = vmatpush1.xpose.msra.mxu0 0.0
  %1761 = vmatprep.subr.mxu0 0.0
  %1762 = vmatpush1.xpose.msra.mxu0 0.0
  %1763 = vmatprep.subr.mxu0 0.0
  %1764 = vmatpush1.xpose.msra.mxu0 0.0
  %1765 = vmatprep.subr.mxu0 0.0
  %1766 = vmatpush1.xpose.msra.mxu0 0.0
  %1767 = vmatprep.subr.mxu0 0.0
  %1768 = vmatpush1.xpose.msra.mxu0 0.0
  %1769 = vmatprep.subr.mxu0 0.0
  %1770 = vmatpush1.xpose.msra.mxu0 0.0
  %1771 = vmatprep.subr.mxu0 0.0
  %1772 = vmatpush1.xpose.msra.mxu0 0.0
  %1773 = vmatprep.mubr.f32.mxu0 0.0
  %1774 = vmatmul.mubr.f32.gmra.mrb[0].mxu0 %v1700
  %v1775 = vpop.f32.mrb[0].mxu0
  %v1776 = vadd.f32 %v69, %v1775
  %v1777 = vpop.f32.mrb[0].mxu0
  %1778 = vmatprep.mubr.f32.mxu0 0.0
  %1779 = vmatmul.mubr.f32.gmra.mrb[0].mxu0 %v1703
  %v1780 = vpop.f32.mrb[0].mxu0
  %v1781 = vadd.f32 %v70, %v1780
  %v1782 = vpop.f32.mrb[0].mxu0
  %1783 = vdwg.mxu0
  %v1784 = vsel %vm423, %v1776, -inf
  %1785 = vmax.xlane.f32.xlu0 %v1784
  %v1786 = vpop.xlane.xlu0 %1785
  %v1787 = vsel %vm423, %v1781, -inf
  %1788 = vmax.xlane.f32.xlu0 %v1787
  %v1789 = vpop.xlane.xlu0 %1788
  %v1790 = vsub.f32 %v1776, %v1786
  %v1791 = vsub.f32 %v1781, %v1789
  %v1792 = vmul.f32 %v1790, 1.442695
  %v1793 = vpow.pop %v1792
  %v1794 = vmul.f32 %v1791, 1.442695
  %v1795 = vpow.pop %v1794
  %v1796 = vsel %vm423, %v1793, 0.0
  %1797 = vadd.xlane.f32.xlu0 %v1796
  %v1798 = vpop.xlane.xlu0 %1797
  %v1799 = vsel %vm423, %v1795, 0.0
  %1800 = vadd.xlane.f32.xlu0 %v1799
  %v1801 = vpop.xlane.xlu0 %1800
  %v1802 = vrcp.pop %v1798
  %v1803 = vrcp.pop %v1801
  %v1804 = vmul.f32 %v1793, %v1802
  %v1805 = vmul.f32 %v1795, %v1803
  %1806 = vrot.lane.b32.xlu0 %v35, 104
  %v1807 = vpop.permute.xlu0 %1806
  %1808 = vrot.lane.b32.xlu0 %v36, 104
  %v1809 = vpop.permute.xlu0 %1808
  %1810 = vrot.lane.b32.xlu0 %v37, 104
  %v1811 = vpop.permute.xlu0 %1810
  %1812 = vrot.lane.b32.xlu0 %v38, 104
  %v1813 = vpop.permute.xlu0 %1812
  %1818 = vrot.lane.b32.xlu0 %v449, 104
  %v1819 = vpop.permute.xlu0 %1818
  %1821 = vmatprep.subr.mxu0 0.0
  %1822 = vmatpush1.msra.mxu0 %v1807
  %1823 = vmatprep.subr.mxu0 0.0
  %1824 = vmatpush1.msra.mxu0 %v1809
  %1825 = vmatprep.subr.mxu0 0.0
  %1826 = vmatpush1.msra.mxu0 %v1811
  %1827 = vmatprep.subr.mxu0 0.0
  %1828 = vmatpush1.msra.mxu0 %v1813
  %1829 = vmatprep.subr.mxu0 0.0
  %1830 = vmatpush1.msra.mxu0 0.0
  %1831 = vmatprep.subr.mxu0 0.0
  %1832 = vmatpush1.msra.mxu0 0.0
  %1833 = vmatprep.subr.mxu0 0.0
  %1834 = vmatpush1.msra.mxu0 0.0
  %1835 = vmatprep.subr.mxu0 0.0
  %1836 = vmatpush1.msra.mxu0 0.0
  %1837 = vmatprep.subr.mxu0 0.0
  %1838 = vmatpush1.msra.mxu0 0.0
  %1839 = vmatprep.subr.mxu0 0.0
  %1840 = vmatpush1.msra.mxu0 0.0
  %1841 = vmatprep.subr.mxu0 0.0
  %1842 = vmatpush1.msra.mxu0 0.0
  %1843 = vmatprep.subr.mxu0 0.0
  %1844 = vmatpush1.msra.mxu0 0.0
  %1845 = vmatprep.subr.mxu0 0.0
  %1846 = vmatpush1.msra.mxu0 0.0
  %1847 = vmatprep.subr.mxu0 0.0
  %1848 = vmatpush1.msra.mxu0 0.0
  %1849 = vmatprep.subr.mxu0 0.0
  %1850 = vmatpush1.msra.mxu0 0.0
  %1851 = vmatprep.subr.mxu0 0.0
  %1852 = vmatpush1.msra.mxu0 0.0
  %1853 = vmatprep.subr.mxu0 0.0
  %1854 = vmatpush1.msra.mxu0 0.0
  %1855 = vmatprep.subr.mxu0 0.0
  %1856 = vmatpush1.msra.mxu0 0.0
  %1857 = vmatprep.subr.mxu0 0.0
  %1858 = vmatpush1.msra.mxu0 0.0
  %1859 = vmatprep.subr.mxu0 0.0
  %1860 = vmatpush1.msra.mxu0 0.0
  %1861 = vmatprep.subr.mxu0 0.0
  %1862 = vmatpush1.msra.mxu0 0.0
  %1863 = vmatprep.subr.mxu0 0.0
  %1864 = vmatpush1.msra.mxu0 0.0
  %1865 = vmatprep.subr.mxu0 0.0
  %1866 = vmatpush1.msra.mxu0 0.0
  %1867 = vmatprep.subr.mxu0 0.0
  %1868 = vmatpush1.msra.mxu0 0.0
  %1869 = vmatprep.subr.mxu0 0.0
  %1870 = vmatpush1.msra.mxu0 0.0
  %1871 = vmatprep.subr.mxu0 0.0
  %1872 = vmatpush1.msra.mxu0 0.0
  %1873 = vmatprep.subr.mxu0 0.0
  %1874 = vmatpush1.msra.mxu0 0.0
  %1875 = vmatprep.subr.mxu0 0.0
  %1876 = vmatpush1.msra.mxu0 0.0
  %1877 = vmatprep.subr.mxu0 0.0
  %1878 = vmatpush1.msra.mxu0 0.0
  %1879 = vmatprep.subr.mxu0 0.0
  %1880 = vmatpush1.msra.mxu0 0.0
  %1881 = vmatprep.subr.mxu0 0.0
  %1882 = vmatpush1.msra.mxu0 0.0
  %1883 = vmatprep.subr.mxu0 0.0
  %1884 = vmatpush1.msra.mxu0 0.0
  %1885 = vmatprep.mubr.f32.mxu0 0.0
  %1886 = vmatmul.mubr.f32.gmra.mrb[0].mxu0 %v176
  %v1887 = vpop.f32.mrb[0].mxu0
  %v1888 = vadd.f32 %v1819, %v1887
  %v1889 = vpop.f32.mrb[0].mxu0
  %1890 = vmatprep.mubr.f32.mxu0 0.0
  %1891 = vmatmul.mubr.f32.gmra.mrb[0].mxu0 %v179
  %v1892 = vpop.f32.mrb[0].mxu0
  %v1893 = vadd.f32 %v1819, %v1892
  %v1894 = vpop.f32.mrb[0].mxu0
  %1895 = vdwg.mxu0
  %v1897 = vsel %vm423, %v1804, 0
  %v1900 = vsel %vm423, %v1805, 0
  %1902 = vmatprep.subr.mxu0 0.0
  %1903 = vmatpush1.msra.mxu0 %v1888
  %1904 = vmatprep.subr.mxu0 0.0
  %1905 = vmatpush1.msra.mxu0 %v1893
  %1906 = vmatprep.subr.mxu0 0.0
  %1907 = vmatpush1.msra.mxu0 0.0
  %1908 = vmatprep.subr.mxu0 0.0
  %1909 = vmatpush1.msra.mxu0 0.0
  %1910 = vmatprep.subr.mxu0 0.0
  %1911 = vmatpush1.msra.mxu0 0.0
  %1912 = vmatprep.subr.mxu0 0.0
  %1913 = vmatpush1.msra.mxu0 0.0
  %1914 = vmatprep.subr.mxu0 0.0
  %1915 = vmatpush1.msra.mxu0 0.0
  %1916 = vmatprep.subr.mxu0 0.0
  %1917 = vmatpush1.msra.mxu0 0.0
  %1918 = vmatprep.subr.mxu0 0.0
  %1919 = vmatpush1.msra.mxu0 0.0
  %1920 = vmatprep.subr.mxu0 0.0
  %1921 = vmatpush1.msra.mxu0 0.0
  %1922 = vmatprep.subr.mxu0 0.0
  %1923 = vmatpush1.msra.mxu0 0.0
  %1924 = vmatprep.subr.mxu0 0.0
  %1925 = vmatpush1.msra.mxu0 0.0
  %1926 = vmatprep.subr.mxu0 0.0
  %1927 = vmatpush1.msra.mxu0 0.0
  %1928 = vmatprep.subr.mxu0 0.0
  %1929 = vmatpush1.msra.mxu0 0.0
  %1930 = vmatprep.subr.mxu0 0.0
  %1931 = vmatpush1.msra.mxu0 0.0
  %1932 = vmatprep.subr.mxu0 0.0
  %1933 = vmatpush1.msra.mxu0 0.0
  %1934 = vmatprep.subr.mxu0 0.0
  %1935 = vmatpush1.msra.mxu0 0.0
  %1936 = vmatprep.subr.mxu0 0.0
  %1937 = vmatpush1.msra.mxu0 0.0
  %1938 = vmatprep.subr.mxu0 0.0
  %1939 = vmatpush1.msra.mxu0 0.0
  %1940 = vmatprep.subr.mxu0 0.0
  %1941 = vmatpush1.msra.mxu0 0.0
  %1942 = vmatprep.subr.mxu0 0.0
  %1943 = vmatpush1.msra.mxu0 0.0
  %1944 = vmatprep.subr.mxu0 0.0
  %1945 = vmatpush1.msra.mxu0 0.0
  %1946 = vmatprep.subr.mxu0 0.0
  %1947 = vmatpush1.msra.mxu0 0.0
  %1948 = vmatprep.subr.mxu0 0.0
  %1949 = vmatpush1.msra.mxu0 0.0
  %1950 = vmatprep.subr.mxu0 0.0
  %1951 = vmatpush1.msra.mxu0 0.0
  %1952 = vmatprep.subr.mxu0 0.0
  %1953 = vmatpush1.msra.mxu0 0.0
  %1954 = vmatprep.subr.mxu0 0.0
  %1955 = vmatpush1.msra.mxu0 0.0
  %1956 = vmatprep.subr.mxu0 0.0
  %1957 = vmatpush1.msra.mxu0 0.0
  %1958 = vmatprep.subr.mxu0 0.0
  %1959 = vmatpush1.msra.mxu0 0.0
  %1960 = vmatprep.subr.mxu0 0.0
  %1961 = vmatpush1.msra.mxu0 0.0
  %1962 = vmatprep.subr.mxu0 0.0
  %1963 = vmatpush1.msra.mxu0 0.0
  %1964 = vmatprep.subr.mxu0 0.0
  %1965 = vmatpush1.msra.mxu0 0.0
  %1966 = vmatprep.mubr.f32.mxu0 0.0
  %1967 = vmatmul.mubr.f32.gmra.mrb[0].mxu0 %v1897
  %v1968 = vpop.f32.mrb[0].mxu0
  %v1969 = vadd.f32 0.0, %v1968
  %v1970 = vpop.f32.mrb[0].mxu0
  %1971 = vmatprep.mubr.f32.mxu0 0.0
  %1972 = vmatmul.mubr.f32.gmra.mrb[0].mxu0 %v1900
  %v1973 = vpop.f32.mrb[0].mxu0
  %v1974 = vadd.f32 0.0, %v1973
  %v1975 = vpop.f32.mrb[0].mxu0
  %1976 = vdwg.mxu0
  %v1978 = vsel %vm335, %v1969, 0
  %v1981 = vsel %vm335, %v1974, 0
  %1983 = vmatprep.subr.mxu0 0.0
  %1984 = vmatpush1.msra.mxu0 %v42
  %1985 = vmatprep.subr.mxu0 0.0
  %1986 = vmatpush1.msra.mxu0 0.0
  %1987 = vmatprep.subr.mxu0 0.0
  %1988 = vmatpush1.msra.mxu0 0.0
  %1989 = vmatprep.subr.mxu0 0.0
  %1990 = vmatpush1.msra.mxu0 0.0
  %1991 = vmatprep.subr.mxu0 0.0
  %1992 = vmatpush1.msra.mxu0 0.0
  %1993 = vmatprep.subr.mxu0 0.0
  %1994 = vmatpush1.msra.mxu0 0.0
  %1995 = vmatprep.subr.mxu0 0.0
  %1996 = vmatpush1.msra.mxu0 0.0
  %1997 = vmatprep.subr.mxu0 0.0
  %1998 = vmatpush1.msra.mxu0 0.0
  %1999 = vmatprep.subr.mxu0 0.0
  %2000 = vmatpush1.msra.mxu0 0.0
  %2001 = vmatprep.subr.mxu0 0.0
  %2002 = vmatpush1.msra.mxu0 0.0
  %2003 = vmatprep.subr.mxu0 0.0
  %2004 = vmatpush1.msra.mxu0 0.0
  %2005 = vmatprep.subr.mxu0 0.0
  %2006 = vmatpush1.msra.mxu0 0.0
  %2007 = vmatprep.subr.mxu0 0.0
  %2008 = vmatpush1.msra.mxu0 0.0
  %2009 = vmatprep.subr.mxu0 0.0
  %2010 = vmatpush1.msra.mxu0 0.0
  %2011 = vmatprep.subr.mxu0 0.0
  %2012 = vmatpush1.msra.mxu0 0.0
  %2013 = vmatprep.subr.mxu0 0.0
  %2014 = vmatpush1.msra.mxu0 0.0
  %2015 = vmatprep.subr.mxu0 0.0
  %2016 = vmatpush1.msra.mxu0 0.0
  %2017 = vmatprep.subr.mxu0 0.0
  %2018 = vmatpush1.msra.mxu0 0.0
  %2019 = vmatprep.subr.mxu0 0.0
  %2020 = vmatpush1.msra.mxu0 0.0
  %2021 = vmatprep.subr.mxu0 0.0
  %2022 = vmatpush1.msra.mxu0 0.0
  %2023 = vmatprep.subr.mxu0 0.0
  %2024 = vmatpush1.msra.mxu0 0.0
  %2025 = vmatprep.subr.mxu0 0.0
  %2026 = vmatpush1.msra.mxu0 0.0
  %2027 = vmatprep.subr.mxu0 0.0
  %2028 = vmatpush1.msra.mxu0 0.0
  %2029 = vmatprep.subr.mxu0 0.0
  %2030 = vmatpush1.msra.mxu0 0.0
  %2031 = vmatprep.subr.mxu0 0.0
  %2032 = vmatpush1.msra.mxu0 0.0
  %2033 = vmatprep.subr.mxu0 0.0
  %2034 = vmatpush1.msra.mxu0 0.0
  %2035 = vmatprep.subr.mxu0 0.0
  %2036 = vmatpush1.msra.mxu0 0.0
  %2037 = vmatprep.subr.mxu0 0.0
  %2038 = vmatpush1.msra.mxu0 0.0
  %2039 = vmatprep.subr.mxu0 0.0
  %2040 = vmatpush1.msra.mxu0 0.0
  %2041 = vmatprep.subr.mxu0 0.0
  %2042 = vmatpush1.msra.mxu0 0.0
  %2043 = vmatprep.subr.mxu0 0.0
  %2044 = vmatpush1.msra.mxu0 0.0
  %2045 = vmatprep.subr.mxu0 0.0
  %2046 = vmatpush1.msra.mxu0 0.0
  %2047 = vmatprep.mubr.f32.mxu0 0.0
  %2048 = vmatmul.mubr.f32.gmra.mrb[0].mxu0 %v1978
  %v2049 = vpop.f32.mrb[0].mxu0
  %v2050 = vadd.f32 0.0, %v2049
  %v2051 = vpop.f32.mrb[0].mxu0
  %2052 = vmatprep.mubr.f32.mxu0 0.0
  %2053 = vmatmul.mubr.f32.gmra.mrb[0].mxu0 %v1981
  %v2054 = vpop.f32.mrb[0].mxu0
  %v2055 = vadd.f32 0.0, %v2054
  %v2056 = vpop.f32.mrb[0].mxu0
  %2057 = vdwg.mxu0
  %v2058 = vadd.f32 %v1603, %v2050
  %v2059 = vadd.f32 %v1604, %v2055
  %v2060 = vlaneseq
  %v2061 = vshrl.u32 %v2060, 7
  %v2062 = vsub.s32 3, %v2061
  %v2063 = vrot.slane %v67, %v2062
  %v2064 = vadd.f32 %v2058, %v2063
  %v2065 = vadd.f32 %v2059, %v2063
  %v2066 = vadd.f32 %v162, %v2064
  %v2067 = vadd.f32 %v167, %v2065
  %v2068 = vsel %vm174, %v2066, 0.0
  %2069 = vadd.xlane.f32.xlu0 %v2068
  %v2070 = vpop.xlane.xlu0 %2069
  %v2071 = vsel %vm174, %v2067, 0.0
  %2072 = vadd.xlane.f32.xlu0 %v2071
  %v2073 = vpop.xlane.xlu0 %2072
  %v2074 = vrcp.pop 32.0
  %v2075 = vmul.f32 %v2070, %v2074
  %v2076 = vmul.f32 %v2073, %v2074
  %v2077 = vsub.f32 %v2066, %v2075
  %v2078 = vsub.f32 %v2067, %v2076
  %v2079 = vmul.f32 %v2077, %v2077
  %v2080 = vmul.f32 %v2078, %v2078
  %v2081 = vsel %vm174, %v2079, 0.0
  %2082 = vadd.xlane.f32.xlu0 %v2081
  %v2083 = vpop.xlane.xlu0 %2082
  %v2084 = vsel %vm174, %v2080, 0.0
  %2085 = vadd.xlane.f32.xlu0 %v2084
  %v2086 = vpop.xlane.xlu0 %2085
  %v2087 = vmul.f32 %v2083, %v2074
  %v2088 = vmul.f32 %v2086, %v2074
  %v2089 = vadd.f32 %v2087, 1e-05
  %v2090 = vadd.f32 %v2088, 1e-05
  %v2091 = vrsqrt.pop %v2089
  %v2092 = vrsqrt.pop %v2090
  %v2093 = vmul.f32 %v2077, %v2091
  %v2094 = vmul.f32 %v2078, %v2092
  %v2095 = vlaneseq
  %v2096 = vshrl.u32 %v2095, 7
  %v2097 = vsub.s32 4, %v2096
  %v2098 = vrot.slane %v67, %v2097
  %v2099 = vmul.f32 %v2093, %v2098
  %v2100 = vmul.f32 %v2094, %v2098
  %v2101 = vlaneseq
  %v2102 = vshrl.u32 %v2101, 7
  %v2103 = vsub.s32 5, %v2102
  %v2104 = vrot.slane %v67, %v2103
  %v2105 = vadd.f32 %v2099, %v2104
  %v2106 = vadd.f32 %v2100, %v2104
  %v2107 = vlaneseq
  %v2108 = vshrl.u32 %v2107, 7
  %v2109 = vsub.s32 6, %v2108
  %v2110 = vrot.slane %v67, %v2109
  %v2112 = vsel %vm174, %v2105, 0
  %v2115 = vsel %vm174, %v2106, 0
  %2117 = vmatprep.subr.mxu0 0.0
  %2118 = vmatpush1.msra.mxu0 %v59
  %2119 = vmatprep.subr.mxu0 0.0
  %2120 = vmatpush1.msra.mxu0 %v60
  %2121 = vmatprep.subr.mxu0 0.0
  %2122 = vmatpush1.msra.mxu0 %v61
  %2123 = vmatprep.subr.mxu0 0.0
  %2124 = vmatpush1.msra.mxu0 %v62
  %2125 = vmatprep.subr.mxu0 0.0
  %2126 = vmatpush1.msra.mxu0 0.0
  %2127 = vmatprep.subr.mxu0 0.0
  %2128 = vmatpush1.msra.mxu0 0.0
  %2129 = vmatprep.subr.mxu0 0.0
  %2130 = vmatpush1.msra.mxu0 0.0
  %2131 = vmatprep.subr.mxu0 0.0
  %2132 = vmatpush1.msra.mxu0 0.0
  %2133 = vmatprep.subr.mxu0 0.0
  %2134 = vmatpush1.msra.mxu0 0.0
  %2135 = vmatprep.subr.mxu0 0.0
  %2136 = vmatpush1.msra.mxu0 0.0
  %2137 = vmatprep.subr.mxu0 0.0
  %2138 = vmatpush1.msra.mxu0 0.0
  %2139 = vmatprep.subr.mxu0 0.0
  %2140 = vmatpush1.msra.mxu0 0.0
  %2141 = vmatprep.subr.mxu0 0.0
  %2142 = vmatpush1.msra.mxu0 0.0
  %2143 = vmatprep.subr.mxu0 0.0
  %2144 = vmatpush1.msra.mxu0 0.0
  %2145 = vmatprep.subr.mxu0 0.0
  %2146 = vmatpush1.msra.mxu0 0.0
  %2147 = vmatprep.subr.mxu0 0.0
  %2148 = vmatpush1.msra.mxu0 0.0
  %2149 = vmatprep.subr.mxu0 0.0
  %2150 = vmatpush1.msra.mxu0 0.0
  %2151 = vmatprep.subr.mxu0 0.0
  %2152 = vmatpush1.msra.mxu0 0.0
  %2153 = vmatprep.subr.mxu0 0.0
  %2154 = vmatpush1.msra.mxu0 0.0
  %2155 = vmatprep.subr.mxu0 0.0
  %2156 = vmatpush1.msra.mxu0 0.0
  %2157 = vmatprep.subr.mxu0 0.0
  %2158 = vmatpush1.msra.mxu0 0.0
  %2159 = vmatprep.subr.mxu0 0.0
  %2160 = vmatpush1.msra.mxu0 0.0
  %2161 = vmatprep.subr.mxu0 0.0
  %2162 = vmatpush1.msra.mxu0 0.0
  %2163 = vmatprep.subr.mxu0 0.0
  %2164 = vmatpush1.msra.mxu0 0.0
  %2165 = vmatprep.subr.mxu0 0.0
  %2166 = vmatpush1.msra.mxu0 0.0
  %2167 = vmatprep.subr.mxu0 0.0
  %2168 = vmatpush1.msra.mxu0 0.0
  %2169 = vmatprep.subr.mxu0 0.0
  %2170 = vmatpush1.msra.mxu0 0.0
  %2171 = vmatprep.subr.mxu0 0.0
  %2172 = vmatpush1.msra.mxu0 0.0
  %2173 = vmatprep.subr.mxu0 0.0
  %2174 = vmatpush1.msra.mxu0 0.0
  %2175 = vmatprep.subr.mxu0 0.0
  %2176 = vmatpush1.msra.mxu0 0.0
  %2177 = vmatprep.subr.mxu0 0.0
  %2178 = vmatpush1.msra.mxu0 0.0
  %2179 = vmatprep.subr.mxu0 0.0
  %2180 = vmatpush1.msra.mxu0 0.0
  %2181 = vmatprep.mubr.f32.mxu0 0.0
  %2182 = vmatmul.mubr.f32.gmra.mrb[0].mxu0 %v2112
  %v2183 = vpop.f32.mrb[0].mxu0
  %v2184 = vadd.f32 %v2110, %v2183
  %v2185 = vpop.f32.mrb[0].mxu0
  %2186 = vmatprep.mubr.f32.mxu0 0.0
  %2187 = vmatmul.mubr.f32.gmra.mrb[0].mxu0 %v2115
  %v2188 = vpop.f32.mrb[0].mxu0
  %v2189 = vadd.f32 %v2110, %v2188
  %v2190 = vpop.f32.mrb[0].mxu0
  %2191 = vdwg.mxu0
  %v2192 = vmax.f32 %v2184, 0.0
  %v2193 = vmax.f32 %v2189, 0.0
  %v2194 = vlaneseq
  %v2195 = vshrl.u32 %v2194, 7
  %v2196 = vsub.s32 7, %v2195
  %v2197 = vrot.slane %v67, %v2196
  %2198 = vmatprep.subr.mxu0 0.0
  %2199 = vmatpush1.msra.mxu0 %v43
  %2200 = vmatprep.subr.mxu0 0.0
  %2201 = vmatpush1.msra.mxu0 %v44
  %2202 = vmatprep.subr.mxu0 0.0
  %2203 = vmatpush1.msra.mxu0 %v45
  %2204 = vmatprep.subr.mxu0 0.0
  %2205 = vmatpush1.msra.mxu0 %v46
  %2206 = vmatprep.subr.mxu0 0.0
  %2207 = vmatpush1.msra.mxu0 %v47
  %2208 = vmatprep.subr.mxu0 0.0
  %2209 = vmatpush1.msra.mxu0 %v48
  %2210 = vmatprep.subr.mxu0 0.0
  %2211 = vmatpush1.msra.mxu0 %v49
  %2212 = vmatprep.subr.mxu0 0.0
  %2213 = vmatpush1.msra.mxu0 %v50
  %2214 = vmatprep.subr.mxu0 0.0
  %2215 = vmatpush1.msra.mxu0 %v51
  %2216 = vmatprep.subr.mxu0 0.0
  %2217 = vmatpush1.msra.mxu0 %v52
  %2218 = vmatprep.subr.mxu0 0.0
  %2219 = vmatpush1.msra.mxu0 %v53
  %2220 = vmatprep.subr.mxu0 0.0
  %2221 = vmatpush1.msra.mxu0 %v54
  %2222 = vmatprep.subr.mxu0 0.0
  %2223 = vmatpush1.msra.mxu0 %v55
  %2224 = vmatprep.subr.mxu0 0.0
  %2225 = vmatpush1.msra.mxu0 %v56
  %2226 = vmatprep.subr.mxu0 0.0
  %2227 = vmatpush1.msra.mxu0 %v57
  %2228 = vmatprep.subr.mxu0 0.0
  %2229 = vmatpush1.msra.mxu0 %v58
  %2230 = vmatprep.subr.mxu0 0.0
  %2231 = vmatpush1.msra.mxu0 0.0
  %2232 = vmatprep.subr.mxu0 0.0
  %2233 = vmatpush1.msra.mxu0 0.0
  %2234 = vmatprep.subr.mxu0 0.0
  %2235 = vmatpush1.msra.mxu0 0.0
  %2236 = vmatprep.subr.mxu0 0.0
  %2237 = vmatpush1.msra.mxu0 0.0
  %2238 = vmatprep.subr.mxu0 0.0
  %2239 = vmatpush1.msra.mxu0 0.0
  %2240 = vmatprep.subr.mxu0 0.0
  %2241 = vmatpush1.msra.mxu0 0.0
  %2242 = vmatprep.subr.mxu0 0.0
  %2243 = vmatpush1.msra.mxu0 0.0
  %2244 = vmatprep.subr.mxu0 0.0
  %2245 = vmatpush1.msra.mxu0 0.0
  %2246 = vmatprep.subr.mxu0 0.0
  %2247 = vmatpush1.msra.mxu0 0.0
  %2248 = vmatprep.subr.mxu0 0.0
  %2249 = vmatpush1.msra.mxu0 0.0
  %2250 = vmatprep.subr.mxu0 0.0
  %2251 = vmatpush1.msra.mxu0 0.0
  %2252 = vmatprep.subr.mxu0 0.0
  %2253 = vmatpush1.msra.mxu0 0.0
  %2254 = vmatprep.subr.mxu0 0.0
  %2255 = vmatpush1.msra.mxu0 0.0
  %2256 = vmatprep.subr.mxu0 0.0
  %2257 = vmatpush1.msra.mxu0 0.0
  %2258 = vmatprep.subr.mxu0 0.0
  %2259 = vmatpush1.msra.mxu0 0.0
  %2260 = vmatprep.subr.mxu0 0.0
  %2261 = vmatpush1.msra.mxu0 0.0
  %2262 = vmatprep.mubr.f32.mxu0 0.0
  %2263 = vmatmul.mubr.f32.gmra.mrb[0].mxu0 %v2192
  %v2264 = vpop.f32.mrb[0].mxu0
  %v2265 = vadd.f32 %v2197, %v2264
  %v2266 = vpop.f32.mrb[0].mxu0
  %2267 = vmatprep.mubr.f32.mxu0 0.0
  %2268 = vmatmul.mubr.f32.gmra.mrb[0].mxu0 %v2193
  %v2269 = vpop.f32.mrb[0].mxu0
  %v2270 = vadd.f32 %v2197, %v2269
  %v2271 = vpop.f32.mrb[0].mxu0
  %2272 = vdwg.mxu0
  %v2273 = vadd.f32 %v2105, %v2265
  %v2274 = vadd.f32 %v2106, %v2270
  %v2275 = vsel %vm174, %v2273, 0.0
  %2276 = vadd.xlane.f32.xlu0 %v2275
  %v2277 = vpop.xlane.xlu0 %2276
  %v2278 = vsel %vm174, %v2274, 0.0
  %2279 = vadd.xlane.f32.xlu0 %v2278
  %v2280 = vpop.xlane.xlu0 %2279
  %v2281 = vmul.f32 %v2277, %v2074
  %v2282 = vmul.f32 %v2280, %v2074
  %v2283 = vsub.f32 %v2273, %v2281
  %v2284 = vsub.f32 %v2274, %v2282
  %v2285 = vmul.f32 %v2283, %v2283
  %v2286 = vmul.f32 %v2284, %v2284
  %v2287 = vsel %vm174, %v2285, 0.0
  %2288 = vadd.xlane.f32.xlu0 %v2287
  %v2289 = vpop.xlane.xlu0 %2288
  %v2290 = vsel %vm174, %v2286, 0.0
  %2291 = vadd.xlane.f32.xlu0 %v2290
  %v2292 = vpop.xlane.xlu0 %2291
  %v2293 = vmul.f32 %v2289, %v2074
  %v2294 = vmul.f32 %v2292, %v2074
  %v2295 = vadd.f32 %v2293, 1e-05
  %v2296 = vadd.f32 %v2294, 1e-05
  %v2297 = vrsqrt.pop %v2295
  %v2298 = vrsqrt.pop %v2296
  %v2299 = vmul.f32 %v2283, %v2297
  %v2300 = vmul.f32 %v2284, %v2298
  %v2301 = vlaneseq
  %v2302 = vshrl.u32 %v2301, 7
  %v2303 = vsub.s32 0, %v2302
  %v2304 = vrot.slane %v68, %v2303
  %v2305 = vmul.f32 %v2299, %v2304
  %v2306 = vmul.f32 %v2300, %v2304
  %v2307 = vlaneseq
  %v2308 = vshrl.u32 %v2307, 7
  %v2309 = vsub.s32 1, %v2308
  %v2310 = vrot.slane %v68, %v2309
  %v2311 = vadd.f32 %v2305, %v2310
  %v2312 = vadd.f32 %v2306, %v2310
  %v2314 = vsel %vm174, %v2311, 0
  %v2317 = vsel %vm174, %v2312, 0
  %2319 = vmatprep.subr.mxu0 0.0
  %2320 = vmatpush1.msra.mxu0 %v31
  %2321 = vmatprep.subr.mxu0 0.0
  %2322 = vmatpush1.msra.mxu0 %v32
  %2323 = vmatprep.subr.mxu0 0.0
  %2324 = vmatpush1.msra.mxu0 %v33
  %2325 = vmatprep.subr.mxu0 0.0
  %2326 = vmatpush1.msra.mxu0 %v34
  %2327 = vmatprep.subr.mxu0 0.0
  %2328 = vmatpush1.msra.mxu0 0.0
  %2329 = vmatprep.subr.mxu0 0.0
  %2330 = vmatpush1.msra.mxu0 0.0
  %2331 = vmatprep.subr.mxu0 0.0
  %2332 = vmatpush1.msra.mxu0 0.0
  %2333 = vmatprep.subr.mxu0 0.0
  %2334 = vmatpush1.msra.mxu0 0.0
  %2335 = vmatprep.subr.mxu0 0.0
  %2336 = vmatpush1.msra.mxu0 0.0
  %2337 = vmatprep.subr.mxu0 0.0
  %2338 = vmatpush1.msra.mxu0 0.0
  %2339 = vmatprep.subr.mxu0 0.0
  %2340 = vmatpush1.msra.mxu0 0.0
  %2341 = vmatprep.subr.mxu0 0.0
  %2342 = vmatpush1.msra.mxu0 0.0
  %2343 = vmatprep.subr.mxu0 0.0
  %2344 = vmatpush1.msra.mxu0 0.0
  %2345 = vmatprep.subr.mxu0 0.0
  %2346 = vmatpush1.msra.mxu0 0.0
  %2347 = vmatprep.subr.mxu0 0.0
  %2348 = vmatpush1.msra.mxu0 0.0
  %2349 = vmatprep.subr.mxu0 0.0
  %2350 = vmatpush1.msra.mxu0 0.0
  %2351 = vmatprep.subr.mxu0 0.0
  %2352 = vmatpush1.msra.mxu0 0.0
  %2353 = vmatprep.subr.mxu0 0.0
  %2354 = vmatpush1.msra.mxu0 0.0
  %2355 = vmatprep.subr.mxu0 0.0
  %2356 = vmatpush1.msra.mxu0 0.0
  %2357 = vmatprep.subr.mxu0 0.0
  %2358 = vmatpush1.msra.mxu0 0.0
  %2359 = vmatprep.subr.mxu0 0.0
  %2360 = vmatpush1.msra.mxu0 0.0
  %2361 = vmatprep.subr.mxu0 0.0
  %2362 = vmatpush1.msra.mxu0 0.0
  %2363 = vmatprep.subr.mxu0 0.0
  %2364 = vmatpush1.msra.mxu0 0.0
  %2365 = vmatprep.subr.mxu0 0.0
  %2366 = vmatpush1.msra.mxu0 0.0
  %2367 = vmatprep.subr.mxu0 0.0
  %2368 = vmatpush1.msra.mxu0 0.0
  %2369 = vmatprep.subr.mxu0 0.0
  %2370 = vmatpush1.msra.mxu0 0.0
  %2371 = vmatprep.subr.mxu0 0.0
  %2372 = vmatpush1.msra.mxu0 0.0
  %2373 = vmatprep.subr.mxu0 0.0
  %2374 = vmatpush1.msra.mxu0 0.0
  %2375 = vmatprep.subr.mxu0 0.0
  %2376 = vmatpush1.msra.mxu0 0.0
  %2377 = vmatprep.subr.mxu0 0.0
  %2378 = vmatpush1.msra.mxu0 0.0
  %2379 = vmatprep.subr.mxu0 0.0
  %2380 = vmatpush1.msra.mxu0 0.0
  %2381 = vmatprep.subr.mxu0 0.0
  %2382 = vmatpush1.msra.mxu0 0.0
  %2383 = vmatprep.mubr.f32.mxu0 0.0
  %2384 = vmatmul.mubr.f32.gmra.mrb[0].mxu0 %v2314
  %v2385 = vpop.f32.mrb[0].mxu0
  %v2386 = vadd.f32 %v173, %v2385
  %v2387 = vpop.f32.mrb[0].mxu0
  %2388 = vmatprep.mubr.f32.mxu0 0.0
  %2389 = vmatmul.mubr.f32.gmra.mrb[0].mxu0 %v2317
  %v2390 = vpop.f32.mrb[0].mxu0
  %v2391 = vadd.f32 %v173, %v2390
  %v2392 = vpop.f32.mrb[0].mxu0
  %2393 = vdwg.mxu0
  %2394 = vmatprep.subr.mxu0 0.0
  %2395 = vmatpush1.msra.mxu0 %v27
  %2396 = vmatprep.subr.mxu0 0.0
  %2397 = vmatpush1.msra.mxu0 %v28
  %2398 = vmatprep.subr.mxu0 0.0
  %2399 = vmatpush1.msra.mxu0 %v29
  %2400 = vmatprep.subr.mxu0 0.0
  %2401 = vmatpush1.msra.mxu0 %v30
  %2402 = vmatprep.subr.mxu0 0.0
  %2403 = vmatpush1.msra.mxu0 0.0
  %2404 = vmatprep.subr.mxu0 0.0
  %2405 = vmatpush1.msra.mxu0 0.0
  %2406 = vmatprep.subr.mxu0 0.0
  %2407 = vmatpush1.msra.mxu0 0.0
  %2408 = vmatprep.subr.mxu0 0.0
  %2409 = vmatpush1.msra.mxu0 0.0
  %2410 = vmatprep.subr.mxu0 0.0
  %2411 = vmatpush1.msra.mxu0 0.0
  %2412 = vmatprep.subr.mxu0 0.0
  %2413 = vmatpush1.msra.mxu0 0.0
  %2414 = vmatprep.subr.mxu0 0.0
  %2415 = vmatpush1.msra.mxu0 0.0
  %2416 = vmatprep.subr.mxu0 0.0
  %2417 = vmatpush1.msra.mxu0 0.0
  %2418 = vmatprep.subr.mxu0 0.0
  %2419 = vmatpush1.msra.mxu0 0.0
  %2420 = vmatprep.subr.mxu0 0.0
  %2421 = vmatpush1.msra.mxu0 0.0
  %2422 = vmatprep.subr.mxu0 0.0
  %2423 = vmatpush1.msra.mxu0 0.0
  %2424 = vmatprep.subr.mxu0 0.0
  %2425 = vmatpush1.msra.mxu0 0.0
  %2426 = vmatprep.subr.mxu0 0.0
  %2427 = vmatpush1.msra.mxu0 0.0
  %2428 = vmatprep.subr.mxu0 0.0
  %2429 = vmatpush1.msra.mxu0 0.0
  %2430 = vmatprep.subr.mxu0 0.0
  %2431 = vmatpush1.msra.mxu0 0.0
  %2432 = vmatprep.subr.mxu0 0.0
  %2433 = vmatpush1.msra.mxu0 0.0
  %2434 = vmatprep.subr.mxu0 0.0
  %2435 = vmatpush1.msra.mxu0 0.0
  %2436 = vmatprep.subr.mxu0 0.0
  %2437 = vmatpush1.msra.mxu0 0.0
  %2438 = vmatprep.subr.mxu0 0.0
  %2439 = vmatpush1.msra.mxu0 0.0
  %2440 = vmatprep.subr.mxu0 0.0
  %2441 = vmatpush1.msra.mxu0 0.0
  %2442 = vmatprep.subr.mxu0 0.0
  %2443 = vmatpush1.msra.mxu0 0.0
  %2444 = vmatprep.subr.mxu0 0.0
  %2445 = vmatpush1.msra.mxu0 0.0
  %2446 = vmatprep.subr.mxu0 0.0
  %2447 = vmatpush1.msra.mxu0 0.0
  %2448 = vmatprep.subr.mxu0 0.0
  %2449 = vmatpush1.msra.mxu0 0.0
  %2450 = vmatprep.subr.mxu0 0.0
  %2451 = vmatpush1.msra.mxu0 0.0
  %2452 = vmatprep.subr.mxu0 0.0
  %2453 = vmatpush1.msra.mxu0 0.0
  %2454 = vmatprep.subr.mxu0 0.0
  %2455 = vmatpush1.msra.mxu0 0.0
  %2456 = vmatprep.subr.mxu0 0.0
  %2457 = vmatpush1.msra.mxu0 0.0
  %2458 = vmatprep.mubr.f32.mxu0 0.0
  %2459 = vmatmul.mubr.f32.gmra.mrb[0].mxu0 %v2314
  %v2460 = vpop.f32.mrb[0].mxu0
  %v2461 = vadd.f32 %v259, %v2460
  %v2462 = vpop.f32.mrb[0].mxu0
  %2463 = vmatprep.mubr.f32.mxu0 0.0
  %2464 = vmatmul.mubr.f32.gmra.mrb[0].mxu0 %v2317
  %v2465 = vpop.f32.mrb[0].mxu0
  %v2466 = vadd.f32 %v259, %v2465
  %v2467 = vpop.f32.mrb[0].mxu0
  %2468 = vdwg.mxu0
  %v2470 = vsel %vm335, %v2461, 0
  %v2473 = vsel %vm335, %v2466, 0
  %v2476 = vsel %vm335, %v2386, 0
  %v2479 = vsel %vm335, %v2391, 0
  %2481 = vmatprep.subr.mxu0 0.0
  %2482 = vmatpush1.xpose.msra.mxu0 %v2476
  %2483 = vmatprep.subr.mxu0 0.0
  %2484 = vmatpush1.xpose.msra.mxu0 %v2479
  %2485 = vmatprep.subr.mxu0 0.0
  %2486 = vmatpush1.xpose.msra.mxu0 0.0
  %2487 = vmatprep.subr.mxu0 0.0
  %2488 = vmatpush1.xpose.msra.mxu0 0.0
  %2489 = vmatprep.subr.mxu0 0.0
  %2490 = vmatpush1.xpose.msra.mxu0 0.0
  %2491 = vmatprep.subr.mxu0 0.0
  %2492 = vmatpush1.xpose.msra.mxu0 0.0
  %2493 = vmatprep.subr.mxu0 0.0
  %2494 = vmatpush1.xpose.msra.mxu0 0.0
  %2495 = vmatprep.subr.mxu0 0.0
  %2496 = vmatpush1.xpose.msra.mxu0 0.0
  %2497 = vmatprep.subr.mxu0 0.0
  %2498 = vmatpush1.xpose.msra.mxu0 0.0
  %2499 = vmatprep.subr.mxu0 0.0
  %2500 = vmatpush1.xpose.msra.mxu0 0.0
  %2501 = vmatprep.subr.mxu0 0.0
  %2502 = vmatpush1.xpose.msra.mxu0 0.0
  %2503 = vmatprep.subr.mxu0 0.0
  %2504 = vmatpush1.xpose.msra.mxu0 0.0
  %2505 = vmatprep.subr.mxu0 0.0
  %2506 = vmatpush1.xpose.msra.mxu0 0.0
  %2507 = vmatprep.subr.mxu0 0.0
  %2508 = vmatpush1.xpose.msra.mxu0 0.0
  %2509 = vmatprep.subr.mxu0 0.0
  %2510 = vmatpush1.xpose.msra.mxu0 0.0
  %2511 = vmatprep.subr.mxu0 0.0
  %2512 = vmatpush1.xpose.msra.mxu0 0.0
  %2513 = vmatprep.subr.mxu0 0.0
  %2514 = vmatpush1.xpose.msra.mxu0 0.0
  %2515 = vmatprep.subr.mxu0 0.0
  %2516 = vmatpush1.xpose.msra.mxu0 0.0
  %2517 = vmatprep.subr.mxu0 0.0
  %2518 = vmatpush1.xpose.msra.mxu0 0.0
  %2519 = vmatprep.subr.mxu0 0.0
  %2520 = vmatpush1.xpose.msra.mxu0 0.0
  %2521 = vmatprep.subr.mxu0 0.0
  %2522 = vmatpush1.xpose.msra.mxu0 0.0
  %2523 = vmatprep.subr.mxu0 0.0
  %2524 = vmatpush1.xpose.msra.mxu0 0.0
  %2525 = vmatprep.subr.mxu0 0.0
  %2526 = vmatpush1.xpose.msra.mxu0 0.0
  %2527 = vmatprep.subr.mxu0 0.0
  %2528 = vmatpush1.xpose.msra.mxu0 0.0
  %2529 = vmatprep.subr.mxu0 0.0
  %2530 = vmatpush1.xpose.msra.mxu0 0.0
  %2531 = vmatprep.subr.mxu0 0.0
  %2532 = vmatpush1.xpose.msra.mxu0 0.0
  %2533 = vmatprep.subr.mxu0 0.0
  %2534 = vmatpush1.xpose.msra.mxu0 0.0
  %2535 = vmatprep.subr.mxu0 0.0
  %2536 = vmatpush1.xpose.msra.mxu0 0.0
  %2537 = vmatprep.subr.mxu0 0.0
  %2538 = vmatpush1.xpose.msra.mxu0 0.0
  %2539 = vmatprep.subr.mxu0 0.0
  %2540 = vmatpush1.xpose.msra.mxu0 0.0
  %2541 = vmatprep.subr.mxu0 0.0
  %2542 = vmatpush1.xpose.msra.mxu0 0.0
  %2543 = vmatprep.subr.mxu0 0.0
  %2544 = vmatpush1.xpose.msra.mxu0 0.0
  %2545 = vmatprep.mubr.f32.mxu0 0.0
  %2546 = vmatmul.mubr.f32.gmra.mrb[0].mxu0 %v2470
  %v2547 = vpop.f32.mrb[0].mxu0
  %v2548 = vadd.f32 %v69, %v2547
  %v2549 = vpop.f32.mrb[0].mxu0
  %2550 = vmatprep.mubr.f32.mxu0 0.0
  %2551 = vmatmul.mubr.f32.gmra.mrb[0].mxu0 %v2473
  %v2552 = vpop.f32.mrb[0].mxu0
  %v2553 = vadd.f32 %v70, %v2552
  %v2554 = vpop.f32.mrb[0].mxu0
  %2555 = vdwg.mxu0
  %v2556 = vsel %vm423, %v2548, -inf
  %2557 = vmax.xlane.f32.xlu0 %v2556
  %v2558 = vpop.xlane.xlu0 %2557
  %v2559 = vsel %vm423, %v2553, -inf
  %2560 = vmax.xlane.f32.xlu0 %v2559
  %v2561 = vpop.xlane.xlu0 %2560
  %v2562 = vsub.f32 %v2548, %v2558
  %v2563 = vsub.f32 %v2553, %v2561
  %v2564 = vmul.f32 %v2562, 1.442695
  %v2565 = vpow.pop %v2564
  %v2566 = vmul.f32 %v2563, 1.442695
  %v2567 = vpow.pop %v2566
  %v2568 = vsel %vm423, %v2565, 0.0
  %2569 = vadd.xlane.f32.xlu0 %v2568
  %v2570 = vpop.xlane.xlu0 %2569
  %v2571 = vsel %vm423, %v2567, 0.0
  %2572 = vadd.xlane.f32.xlu0 %v2571
  %v2573 = vpop.xlane.xlu0 %2572
  %v2574 = vrcp.pop %v2570
  %v2575 = vrcp.pop %v2573
  %v2576 = vmul.f32 %v2565, %v2574
  %v2577 = vmul.f32 %v2567, %v2575
  %2578 = vmatprep.subr.mxu0 0.0
  %2579 = vmatpush1.msra.mxu0 %v35
  %2580 = vmatprep.subr.mxu0 0.0
  %2581 = vmatpush1.msra.mxu0 %v36
  %2582 = vmatprep.subr.mxu0 0.0
  %2583 = vmatpush1.msra.mxu0 %v37
  %2584 = vmatprep.subr.mxu0 0.0
  %2585 = vmatpush1.msra.mxu0 %v38
  %2586 = vmatprep.subr.mxu0 0.0
  %2587 = vmatpush1.msra.mxu0 0.0
  %2588 = vmatprep.subr.mxu0 0.0
  %2589 = vmatpush1.msra.mxu0 0.0
  %2590 = vmatprep.subr.mxu0 0.0
  %2591 = vmatpush1.msra.mxu0 0.0
  %2592 = vmatprep.subr.mxu0 0.0
  %2593 = vmatpush1.msra.mxu0 0.0
  %2594 = vmatprep.subr.mxu0 0.0
  %2595 = vmatpush1.msra.mxu0 0.0
  %2596 = vmatprep.subr.mxu0 0.0
  %2597 = vmatpush1.msra.mxu0 0.0
  %2598 = vmatprep.subr.mxu0 0.0
  %2599 = vmatpush1.msra.mxu0 0.0
  %2600 = vmatprep.subr.mxu0 0.0
  %2601 = vmatpush1.msra.mxu0 0.0
  %2602 = vmatprep.subr.mxu0 0.0
  %2603 = vmatpush1.msra.mxu0 0.0
  %2604 = vmatprep.subr.mxu0 0.0
  %2605 = vmatpush1.msra.mxu0 0.0
  %2606 = vmatprep.subr.mxu0 0.0
  %2607 = vmatpush1.msra.mxu0 0.0
  %2608 = vmatprep.subr.mxu0 0.0
  %2609 = vmatpush1.msra.mxu0 0.0
  %2610 = vmatprep.subr.mxu0 0.0
  %2611 = vmatpush1.msra.mxu0 0.0
  %2612 = vmatprep.subr.mxu0 0.0
  %2613 = vmatpush1.msra.mxu0 0.0
  %2614 = vmatprep.subr.mxu0 0.0
  %2615 = vmatpush1.msra.mxu0 0.0
  %2616 = vmatprep.subr.mxu0 0.0
  %2617 = vmatpush1.msra.mxu0 0.0
  %2618 = vmatprep.subr.mxu0 0.0
  %2619 = vmatpush1.msra.mxu0 0.0
  %2620 = vmatprep.subr.mxu0 0.0
  %2621 = vmatpush1.msra.mxu0 0.0
  %2622 = vmatprep.subr.mxu0 0.0
  %2623 = vmatpush1.msra.mxu0 0.0
  %2624 = vmatprep.subr.mxu0 0.0
  %2625 = vmatpush1.msra.mxu0 0.0
  %2626 = vmatprep.subr.mxu0 0.0
  %2627 = vmatpush1.msra.mxu0 0.0
  %2628 = vmatprep.subr.mxu0 0.0
  %2629 = vmatpush1.msra.mxu0 0.0
  %2630 = vmatprep.subr.mxu0 0.0
  %2631 = vmatpush1.msra.mxu0 0.0
  %2632 = vmatprep.subr.mxu0 0.0
  %2633 = vmatpush1.msra.mxu0 0.0
  %2634 = vmatprep.subr.mxu0 0.0
  %2635 = vmatpush1.msra.mxu0 0.0
  %2636 = vmatprep.subr.mxu0 0.0
  %2637 = vmatpush1.msra.mxu0 0.0
  %2638 = vmatprep.subr.mxu0 0.0
  %2639 = vmatpush1.msra.mxu0 0.0
  %2640 = vmatprep.subr.mxu0 0.0
  %2641 = vmatpush1.msra.mxu0 0.0
  %2642 = vmatprep.mubr.f32.mxu0 0.0
  %2643 = vmatmul.mubr.f32.gmra.mrb[0].mxu0 %v2314
  %v2644 = vpop.f32.mrb[0].mxu0
  %v2645 = vadd.f32 %v449, %v2644
  %v2646 = vpop.f32.mrb[0].mxu0
  %2647 = vmatprep.mubr.f32.mxu0 0.0
  %2648 = vmatmul.mubr.f32.gmra.mrb[0].mxu0 %v2317
  %v2649 = vpop.f32.mrb[0].mxu0
  %v2650 = vadd.f32 %v449, %v2649
  %v2651 = vpop.f32.mrb[0].mxu0
  %2652 = vdwg.mxu0
  %v2654 = vsel %vm423, %v2576, 0
  %v2657 = vsel %vm423, %v2577, 0
  %2659 = vmatprep.subr.mxu0 0.0
  %2660 = vmatpush1.msra.mxu0 %v2645
  %2661 = vmatprep.subr.mxu0 0.0
  %2662 = vmatpush1.msra.mxu0 %v2650
  %2663 = vmatprep.subr.mxu0 0.0
  %2664 = vmatpush1.msra.mxu0 0.0
  %2665 = vmatprep.subr.mxu0 0.0
  %2666 = vmatpush1.msra.mxu0 0.0
  %2667 = vmatprep.subr.mxu0 0.0
  %2668 = vmatpush1.msra.mxu0 0.0
  %2669 = vmatprep.subr.mxu0 0.0
  %2670 = vmatpush1.msra.mxu0 0.0
  %2671 = vmatprep.subr.mxu0 0.0
  %2672 = vmatpush1.msra.mxu0 0.0
  %2673 = vmatprep.subr.mxu0 0.0
  %2674 = vmatpush1.msra.mxu0 0.0
  %2675 = vmatprep.subr.mxu0 0.0
  %2676 = vmatpush1.msra.mxu0 0.0
  %2677 = vmatprep.subr.mxu0 0.0
  %2678 = vmatpush1.msra.mxu0 0.0
  %2679 = vmatprep.subr.mxu0 0.0
  %2680 = vmatpush1.msra.mxu0 0.0
  %2681 = vmatprep.subr.mxu0 0.0
  %2682 = vmatpush1.msra.mxu0 0.0
  %2683 = vmatprep.subr.mxu0 0.0
  %2684 = vmatpush1.msra.mxu0 0.0
  %2685 = vmatprep.subr.mxu0 0.0
  %2686 = vmatpush1.msra.mxu0 0.0
  %2687 = vmatprep.subr.mxu0 0.0
  %2688 = vmatpush1.msra.mxu0 0.0
  %2689 = vmatprep.subr.mxu0 0.0
  %2690 = vmatpush1.msra.mxu0 0.0
  %2691 = vmatprep.subr.mxu0 0.0
  %2692 = vmatpush1.msra.mxu0 0.0
  %2693 = vmatprep.subr.mxu0 0.0
  %2694 = vmatpush1.msra.mxu0 0.0
  %2695 = vmatprep.subr.mxu0 0.0
  %2696 = vmatpush1.msra.mxu0 0.0
  %2697 = vmatprep.subr.mxu0 0.0
  %2698 = vmatpush1.msra.mxu0 0.0
  %2699 = vmatprep.subr.mxu0 0.0
  %2700 = vmatpush1.msra.mxu0 0.0
  %2701 = vmatprep.subr.mxu0 0.0
  %2702 = vmatpush1.msra.mxu0 0.0
  %2703 = vmatprep.subr.mxu0 0.0
  %2704 = vmatpush1.msra.mxu0 0.0
  %2705 = vmatprep.subr.mxu0 0.0
  %2706 = vmatpush1.msra.mxu0 0.0
  %2707 = vmatprep.subr.mxu0 0.0
  %2708 = vmatpush1.msra.mxu0 0.0
  %2709 = vmatprep.subr.mxu0 0.0
  %2710 = vmatpush1.msra.mxu0 0.0
  %2711 = vmatprep.subr.mxu0 0.0
  %2712 = vmatpush1.msra.mxu0 0.0
  %2713 = vmatprep.subr.mxu0 0.0
  %2714 = vmatpush1.msra.mxu0 0.0
  %2715 = vmatprep.subr.mxu0 0.0
  %2716 = vmatpush1.msra.mxu0 0.0
  %2717 = vmatprep.subr.mxu0 0.0
  %2718 = vmatpush1.msra.mxu0 0.0
  %2719 = vmatprep.subr.mxu0 0.0
  %2720 = vmatpush1.msra.mxu0 0.0
  %2721 = vmatprep.subr.mxu0 0.0
  %2722 = vmatpush1.msra.mxu0 0.0
  %2723 = vmatprep.mubr.f32.mxu0 0.0
  %2724 = vmatmul.mubr.f32.gmra.mrb[0].mxu0 %v2654
  %v2725 = vpop.f32.mrb[0].mxu0
  %v2726 = vadd.f32 0.0, %v2725
  %v2727 = vpop.f32.mrb[0].mxu0
  %2728 = vmatprep.mubr.f32.mxu0 0.0
  %2729 = vmatmul.mubr.f32.gmra.mrb[0].mxu0 %v2657
  %v2730 = vpop.f32.mrb[0].mxu0
  %v2731 = vadd.f32 0.0, %v2730
  %v2732 = vpop.f32.mrb[0].mxu0
  %2733 = vdwg.mxu0
  %2734 = vmatprep.subr.mxu0 0.0
  %2735 = vmatpush1.msra.mxu0 %v611
  %2736 = vmatprep.subr.mxu0 0.0
  %2737 = vmatpush1.msra.mxu0 %v613
  %2738 = vmatprep.subr.mxu0 0.0
  %2739 = vmatpush1.msra.mxu0 %v615
  %2740 = vmatprep.subr.mxu0 0.0
  %2741 = vmatpush1.msra.mxu0 %v617
  %2742 = vmatprep.subr.mxu0 0.0
  %2743 = vmatpush1.msra.mxu0 0.0
  %2744 = vmatprep.subr.mxu0 0.0
  %2745 = vmatpush1.msra.mxu0 0.0
  %2746 = vmatprep.subr.mxu0 0.0
  %2747 = vmatpush1.msra.mxu0 0.0
  %2748 = vmatprep.subr.mxu0 0.0
  %2749 = vmatpush1.msra.mxu0 0.0
  %2750 = vmatprep.subr.mxu0 0.0
  %2751 = vmatpush1.msra.mxu0 0.0
  %2752 = vmatprep.subr.mxu0 0.0
  %2753 = vmatpush1.msra.mxu0 0.0
  %2754 = vmatprep.subr.mxu0 0.0
  %2755 = vmatpush1.msra.mxu0 0.0
  %2756 = vmatprep.subr.mxu0 0.0
  %2757 = vmatpush1.msra.mxu0 0.0
  %2758 = vmatprep.subr.mxu0 0.0
  %2759 = vmatpush1.msra.mxu0 0.0
  %2760 = vmatprep.subr.mxu0 0.0
  %2761 = vmatpush1.msra.mxu0 0.0
  %2762 = vmatprep.subr.mxu0 0.0
  %2763 = vmatpush1.msra.mxu0 0.0
  %2764 = vmatprep.subr.mxu0 0.0
  %2765 = vmatpush1.msra.mxu0 0.0
  %2766 = vmatprep.subr.mxu0 0.0
  %2767 = vmatpush1.msra.mxu0 0.0
  %2768 = vmatprep.subr.mxu0 0.0
  %2769 = vmatpush1.msra.mxu0 0.0
  %2770 = vmatprep.subr.mxu0 0.0
  %2771 = vmatpush1.msra.mxu0 0.0
  %2772 = vmatprep.subr.mxu0 0.0
  %2773 = vmatpush1.msra.mxu0 0.0
  %2774 = vmatprep.subr.mxu0 0.0
  %2775 = vmatpush1.msra.mxu0 0.0
  %2776 = vmatprep.subr.mxu0 0.0
  %2777 = vmatpush1.msra.mxu0 0.0
  %2778 = vmatprep.subr.mxu0 0.0
  %2779 = vmatpush1.msra.mxu0 0.0
  %2780 = vmatprep.subr.mxu0 0.0
  %2781 = vmatpush1.msra.mxu0 0.0
  %2782 = vmatprep.subr.mxu0 0.0
  %2783 = vmatpush1.msra.mxu0 0.0
  %2784 = vmatprep.subr.mxu0 0.0
  %2785 = vmatpush1.msra.mxu0 0.0
  %2786 = vmatprep.subr.mxu0 0.0
  %2787 = vmatpush1.msra.mxu0 0.0
  %2788 = vmatprep.subr.mxu0 0.0
  %2789 = vmatpush1.msra.mxu0 0.0
  %2790 = vmatprep.subr.mxu0 0.0
  %2791 = vmatpush1.msra.mxu0 0.0
  %2792 = vmatprep.subr.mxu0 0.0
  %2793 = vmatpush1.msra.mxu0 0.0
  %2794 = vmatprep.subr.mxu0 0.0
  %2795 = vmatpush1.msra.mxu0 0.0
  %2796 = vmatprep.subr.mxu0 0.0
  %2797 = vmatpush1.msra.mxu0 0.0
  %2798 = vmatprep.mubr.f32.mxu0 0.0
  %2799 = vmatmul.mubr.f32.gmra.mrb[0].mxu0 %v2314
  %v2800 = vpop.f32.mrb[0].mxu0
  %v2801 = vadd.f32 %v624, %v2800
  %v2802 = vpop.f32.mrb[0].mxu0
  %2803 = vmatprep.mubr.f32.mxu0 0.0
  %2804 = vmatmul.mubr.f32.gmra.mrb[0].mxu0 %v2317
  %v2805 = vpop.f32.mrb[0].mxu0
  %v2806 = vadd.f32 %v624, %v2805
  %v2807 = vpop.f32.mrb[0].mxu0
  %2808 = vdwg.mxu0
  %2809 = vrot.lane.b32.xlu0 %v2386, 120
  %v2810 = vpop.permute.xlu0 %2809
  %2811 = vrot.lane.b32.xlu0 %v2391, 120
  %v2812 = vpop.permute.xlu0 %2811
  %v2814 = vsel %vm335, %v2801, 0
  %v2817 = vsel %vm335, %v2806, 0
  %v2819 = vsel %vm335, %v2810, 0
  %v2821 = vsel %vm335, %v2812, 0
  %2823 = vmatprep.subr.mxu0 0.0
  %2824 = vmatpush1.xpose.msra.mxu0 %v2819
  %2825 = vmatprep.subr.mxu0 0.0
  %2826 = vmatpush1.xpose.msra.mxu0 %v2821
  %2827 = vmatprep.subr.mxu0 0.0
  %2828 = vmatpush1.xpose.msra.mxu0 0.0
  %2829 = vmatprep.subr.mxu0 0.0
  %2830 = vmatpush1.xpose.msra.mxu0 0.0
  %2831 = vmatprep.subr.mxu0 0.0
  %2832 = vmatpush1.xpose.msra.mxu0 0.0
  %2833 = vmatprep.subr.mxu0 0.0
  %2834 = vmatpush1.xpose.msra.mxu0 0.0
  %2835 = vmatprep.subr.mxu0 0.0
  %2836 = vmatpush1.xpose.msra.mxu0 0.0
  %2837 = vmatprep.subr.mxu0 0.0
  %2838 = vmatpush1.xpose.msra.mxu0 0.0
  %2839 = vmatprep.subr.mxu0 0.0
  %2840 = vmatpush1.xpose.msra.mxu0 0.0
  %2841 = vmatprep.subr.mxu0 0.0
  %2842 = vmatpush1.xpose.msra.mxu0 0.0
  %2843 = vmatprep.subr.mxu0 0.0
  %2844 = vmatpush1.xpose.msra.mxu0 0.0
  %2845 = vmatprep.subr.mxu0 0.0
  %2846 = vmatpush1.xpose.msra.mxu0 0.0
  %2847 = vmatprep.subr.mxu0 0.0
  %2848 = vmatpush1.xpose.msra.mxu0 0.0
  %2849 = vmatprep.subr.mxu0 0.0
  %2850 = vmatpush1.xpose.msra.mxu0 0.0
  %2851 = vmatprep.subr.mxu0 0.0
  %2852 = vmatpush1.xpose.msra.mxu0 0.0
  %2853 = vmatprep.subr.mxu0 0.0
  %2854 = vmatpush1.xpose.msra.mxu0 0.0
  %2855 = vmatprep.subr.mxu0 0.0
  %2856 = vmatpush1.xpose.msra.mxu0 0.0
  %2857 = vmatprep.subr.mxu0 0.0
  %2858 = vmatpush1.xpose.msra.mxu0 0.0
  %2859 = vmatprep.subr.mxu0 0.0
  %2860 = vmatpush1.xpose.msra.mxu0 0.0
  %2861 = vmatprep.subr.mxu0 0.0
  %2862 = vmatpush1.xpose.msra.mxu0 0.0
  %2863 = vmatprep.subr.mxu0 0.0
  %2864 = vmatpush1.xpose.msra.mxu0 0.0
  %2865 = vmatprep.subr.mxu0 0.0
  %2866 = vmatpush1.xpose.msra.mxu0 0.0
  %2867 = vmatprep.subr.mxu0 0.0
  %2868 = vmatpush1.xpose.msra.mxu0 0.0
  %2869 = vmatprep.subr.mxu0 0.0
  %2870 = vmatpush1.xpose.msra.mxu0 0.0
  %2871 = vmatprep.subr.mxu0 0.0
  %2872 = vmatpush1.xpose.msra.mxu0 0.0
  %2873 = vmatprep.subr.mxu0 0.0
  %2874 = vmatpush1.xpose.msra.mxu0 0.0
  %2875 = vmatprep.subr.mxu0 0.0
  %2876 = vmatpush1.xpose.msra.mxu0 0.0
  %2877 = vmatprep.subr.mxu0 0.0
  %2878 = vmatpush1.xpose.msra.mxu0 0.0
  %2879 = vmatprep.subr.mxu0 0.0
  %2880 = vmatpush1.xpose.msra.mxu0 0.0
  %2881 = vmatprep.subr.mxu0 0.0
  %2882 = vmatpush1.xpose.msra.mxu0 0.0
  %2883 = vmatprep.subr.mxu0 0.0
  %2884 = vmatpush1.xpose.msra.mxu0 0.0
  %2885 = vmatprep.subr.mxu0 0.0
  %2886 = vmatpush1.xpose.msra.mxu0 0.0
  %2887 = vmatprep.mubr.f32.mxu0 0.0
  %2888 = vmatmul.mubr.f32.gmra.mrb[0].mxu0 %v2814
  %v2889 = vpop.f32.mrb[0].mxu0
  %v2890 = vadd.f32 %v69, %v2889
  %v2891 = vpop.f32.mrb[0].mxu0
  %2892 = vmatprep.mubr.f32.mxu0 0.0
  %2893 = vmatmul.mubr.f32.gmra.mrb[0].mxu0 %v2817
  %v2894 = vpop.f32.mrb[0].mxu0
  %v2895 = vadd.f32 %v70, %v2894
  %v2896 = vpop.f32.mrb[0].mxu0
  %2897 = vdwg.mxu0
  %v2898 = vsel %vm423, %v2890, -inf
  %2899 = vmax.xlane.f32.xlu0 %v2898
  %v2900 = vpop.xlane.xlu0 %2899
  %v2901 = vsel %vm423, %v2895, -inf
  %2902 = vmax.xlane.f32.xlu0 %v2901
  %v2903 = vpop.xlane.xlu0 %2902
  %v2904 = vsub.f32 %v2890, %v2900
  %v2905 = vsub.f32 %v2895, %v2903
  %v2906 = vmul.f32 %v2904, 1.442695
  %v2907 = vpow.pop %v2906
  %v2908 = vmul.f32 %v2905, 1.442695
  %v2909 = vpow.pop %v2908
  %v2910 = vsel %vm423, %v2907, 0.0
  %2911 = vadd.xlane.f32.xlu0 %v2910
  %v2912 = vpop.xlane.xlu0 %2911
  %v2913 = vsel %vm423, %v2909, 0.0
  %2914 = vadd.xlane.f32.xlu0 %v2913
  %v2915 = vpop.xlane.xlu0 %2914
  %v2916 = vrcp.pop %v2912
  %v2917 = vrcp.pop %v2915
  %v2918 = vmul.f32 %v2907, %v2916
  %v2919 = vmul.f32 %v2909, %v2917
  %2920 = vmatprep.subr.mxu0 0.0
  %2921 = vmatpush1.msra.mxu0 %v817
  %2922 = vmatprep.subr.mxu0 0.0
  %2923 = vmatpush1.msra.mxu0 %v819
  %2924 = vmatprep.subr.mxu0 0.0
  %2925 = vmatpush1.msra.mxu0 %v821
  %2926 = vmatprep.subr.mxu0 0.0
  %2927 = vmatpush1.msra.mxu0 %v823
  %2928 = vmatprep.subr.mxu0 0.0
  %2929 = vmatpush1.msra.mxu0 0.0
  %2930 = vmatprep.subr.mxu0 0.0
  %2931 = vmatpush1.msra.mxu0 0.0
  %2932 = vmatprep.subr.mxu0 0.0
  %2933 = vmatpush1.msra.mxu0 0.0
  %2934 = vmatprep.subr.mxu0 0.0
  %2935 = vmatpush1.msra.mxu0 0.0
  %2936 = vmatprep.subr.mxu0 0.0
  %2937 = vmatpush1.msra.mxu0 0.0
  %2938 = vmatprep.subr.mxu0 0.0
  %2939 = vmatpush1.msra.mxu0 0.0
  %2940 = vmatprep.subr.mxu0 0.0
  %2941 = vmatpush1.msra.mxu0 0.0
  %2942 = vmatprep.subr.mxu0 0.0
  %2943 = vmatpush1.msra.mxu0 0.0
  %2944 = vmatprep.subr.mxu0 0.0
  %2945 = vmatpush1.msra.mxu0 0.0
  %2946 = vmatprep.subr.mxu0 0.0
  %2947 = vmatpush1.msra.mxu0 0.0
  %2948 = vmatprep.subr.mxu0 0.0
  %2949 = vmatpush1.msra.mxu0 0.0
  %2950 = vmatprep.subr.mxu0 0.0
  %2951 = vmatpush1.msra.mxu0 0.0
  %2952 = vmatprep.subr.mxu0 0.0
  %2953 = vmatpush1.msra.mxu0 0.0
  %2954 = vmatprep.subr.mxu0 0.0
  %2955 = vmatpush1.msra.mxu0 0.0
  %2956 = vmatprep.subr.mxu0 0.0
  %2957 = vmatpush1.msra.mxu0 0.0
  %2958 = vmatprep.subr.mxu0 0.0
  %2959 = vmatpush1.msra.mxu0 0.0
  %2960 = vmatprep.subr.mxu0 0.0
  %2961 = vmatpush1.msra.mxu0 0.0
  %2962 = vmatprep.subr.mxu0 0.0
  %2963 = vmatpush1.msra.mxu0 0.0
  %2964 = vmatprep.subr.mxu0 0.0
  %2965 = vmatpush1.msra.mxu0 0.0
  %2966 = vmatprep.subr.mxu0 0.0
  %2967 = vmatpush1.msra.mxu0 0.0
  %2968 = vmatprep.subr.mxu0 0.0
  %2969 = vmatpush1.msra.mxu0 0.0
  %2970 = vmatprep.subr.mxu0 0.0
  %2971 = vmatpush1.msra.mxu0 0.0
  %2972 = vmatprep.subr.mxu0 0.0
  %2973 = vmatpush1.msra.mxu0 0.0
  %2974 = vmatprep.subr.mxu0 0.0
  %2975 = vmatpush1.msra.mxu0 0.0
  %2976 = vmatprep.subr.mxu0 0.0
  %2977 = vmatpush1.msra.mxu0 0.0
  %2978 = vmatprep.subr.mxu0 0.0
  %2979 = vmatpush1.msra.mxu0 0.0
  %2980 = vmatprep.subr.mxu0 0.0
  %2981 = vmatpush1.msra.mxu0 0.0
  %2982 = vmatprep.subr.mxu0 0.0
  %2983 = vmatpush1.msra.mxu0 0.0
  %2984 = vmatprep.mubr.f32.mxu0 0.0
  %2985 = vmatmul.mubr.f32.gmra.mrb[0].mxu0 %v2314
  %v2986 = vpop.f32.mrb[0].mxu0
  %v2987 = vadd.f32 %v830, %v2986
  %v2988 = vpop.f32.mrb[0].mxu0
  %2989 = vmatprep.mubr.f32.mxu0 0.0
  %2990 = vmatmul.mubr.f32.gmra.mrb[0].mxu0 %v2317
  %v2991 = vpop.f32.mrb[0].mxu0
  %v2992 = vadd.f32 %v830, %v2991
  %v2993 = vpop.f32.mrb[0].mxu0
  %2994 = vdwg.mxu0
  %v2996 = vsel %vm423, %v2918, 0
  %v2999 = vsel %vm423, %v2919, 0
  %3001 = vmatprep.subr.mxu0 0.0
  %3002 = vmatpush1.msra.mxu0 %v2987
  %3003 = vmatprep.subr.mxu0 0.0
  %3004 = vmatpush1.msra.mxu0 %v2992
  %3005 = vmatprep.subr.mxu0 0.0
  %3006 = vmatpush1.msra.mxu0 0.0
  %3007 = vmatprep.subr.mxu0 0.0
  %3008 = vmatpush1.msra.mxu0 0.0
  %3009 = vmatprep.subr.mxu0 0.0
  %3010 = vmatpush1.msra.mxu0 0.0
  %3011 = vmatprep.subr.mxu0 0.0
  %3012 = vmatpush1.msra.mxu0 0.0
  %3013 = vmatprep.subr.mxu0 0.0
  %3014 = vmatpush1.msra.mxu0 0.0
  %3015 = vmatprep.subr.mxu0 0.0
  %3016 = vmatpush1.msra.mxu0 0.0
  %3017 = vmatprep.subr.mxu0 0.0
  %3018 = vmatpush1.msra.mxu0 0.0
  %3019 = vmatprep.subr.mxu0 0.0
  %3020 = vmatpush1.msra.mxu0 0.0
  %3021 = vmatprep.subr.mxu0 0.0
  %3022 = vmatpush1.msra.mxu0 0.0
  %3023 = vmatprep.subr.mxu0 0.0
  %3024 = vmatpush1.msra.mxu0 0.0
  %3025 = vmatprep.subr.mxu0 0.0
  %3026 = vmatpush1.msra.mxu0 0.0
  %3027 = vmatprep.subr.mxu0 0.0
  %3028 = vmatpush1.msra.mxu0 0.0
  %3029 = vmatprep.subr.mxu0 0.0
  %3030 = vmatpush1.msra.mxu0 0.0
  %3031 = vmatprep.subr.mxu0 0.0
  %3032 = vmatpush1.msra.mxu0 0.0
  %3033 = vmatprep.subr.mxu0 0.0
  %3034 = vmatpush1.msra.mxu0 0.0
  %3035 = vmatprep.subr.mxu0 0.0
  %3036 = vmatpush1.msra.mxu0 0.0
  %3037 = vmatprep.subr.mxu0 0.0
  %3038 = vmatpush1.msra.mxu0 0.0
  %3039 = vmatprep.subr.mxu0 0.0
  %3040 = vmatpush1.msra.mxu0 0.0
  %3041 = vmatprep.subr.mxu0 0.0
  %3042 = vmatpush1.msra.mxu0 0.0
  %3043 = vmatprep.subr.mxu0 0.0
  %3044 = vmatpush1.msra.mxu0 0.0
  %3045 = vmatprep.subr.mxu0 0.0
  %3046 = vmatpush1.msra.mxu0 0.0
  %3047 = vmatprep.subr.mxu0 0.0
  %3048 = vmatpush1.msra.mxu0 0.0
  %3049 = vmatprep.subr.mxu0 0.0
  %3050 = vmatpush1.msra.mxu0 0.0
  %3051 = vmatprep.subr.mxu0 0.0
  %3052 = vmatpush1.msra.mxu0 0.0
  %3053 = vmatprep.subr.mxu0 0.0
  %3054 = vmatpush1.msra.mxu0 0.0
  %3055 = vmatprep.subr.mxu0 0.0
  %3056 = vmatpush1.msra.mxu0 0.0
  %3057 = vmatprep.subr.mxu0 0.0
  %3058 = vmatpush1.msra.mxu0 0.0
  %3059 = vmatprep.subr.mxu0 0.0
  %3060 = vmatpush1.msra.mxu0 0.0
  %3061 = vmatprep.subr.mxu0 0.0
  %3062 = vmatpush1.msra.mxu0 0.0
  %3063 = vmatprep.subr.mxu0 0.0
  %3064 = vmatpush1.msra.mxu0 0.0
  %3065 = vmatprep.mubr.f32.mxu0 0.0
  %3066 = vmatmul.mubr.f32.gmra.mrb[0].mxu0 %v2996
  %v3067 = vpop.f32.mrb[0].mxu0
  %v3068 = vadd.f32 0.0, %v3067
  %v3069 = vpop.f32.mrb[0].mxu0
  %3070 = vmatprep.mubr.f32.mxu0 0.0
  %3071 = vmatmul.mubr.f32.gmra.mrb[0].mxu0 %v2999
  %v3072 = vpop.f32.mrb[0].mxu0
  %v3073 = vadd.f32 0.0, %v3072
  %v3074 = vpop.f32.mrb[0].mxu0
  %3075 = vdwg.mxu0
  %v3077 = vsel %vm335, %v3068, 0
  %v3080 = vsel %vm335, %v3073, 0
  %3082 = vmatprep.subr.mxu0 0.0
  %3083 = vmatpush1.msra.mxu0 %v40
  %3084 = vmatprep.subr.mxu0 0.0
  %3085 = vmatpush1.msra.mxu0 0.0
  %3086 = vmatprep.subr.mxu0 0.0
  %3087 = vmatpush1.msra.mxu0 0.0
  %3088 = vmatprep.subr.mxu0 0.0
  %3089 = vmatpush1.msra.mxu0 0.0
  %3090 = vmatprep.subr.mxu0 0.0
  %3091 = vmatpush1.msra.mxu0 0.0
  %3092 = vmatprep.subr.mxu0 0.0
  %3093 = vmatpush1.msra.mxu0 0.0
  %3094 = vmatprep.subr.mxu0 0.0
  %3095 = vmatpush1.msra.mxu0 0.0
  %3096 = vmatprep.subr.mxu0 0.0
  %3097 = vmatpush1.msra.mxu0 0.0
  %3098 = vmatprep.subr.mxu0 0.0
  %3099 = vmatpush1.msra.mxu0 0.0
  %3100 = vmatprep.subr.mxu0 0.0
  %3101 = vmatpush1.msra.mxu0 0.0
  %3102 = vmatprep.subr.mxu0 0.0
  %3103 = vmatpush1.msra.mxu0 0.0
  %3104 = vmatprep.subr.mxu0 0.0
  %3105 = vmatpush1.msra.mxu0 0.0
  %3106 = vmatprep.subr.mxu0 0.0
  %3107 = vmatpush1.msra.mxu0 0.0
  %3108 = vmatprep.subr.mxu0 0.0
  %3109 = vmatpush1.msra.mxu0 0.0
  %3110 = vmatprep.subr.mxu0 0.0
  %3111 = vmatpush1.msra.mxu0 0.0
  %3112 = vmatprep.subr.mxu0 0.0
  %3113 = vmatpush1.msra.mxu0 0.0
  %3114 = vmatprep.subr.mxu0 0.0
  %3115 = vmatpush1.msra.mxu0 0.0
  %3116 = vmatprep.subr.mxu0 0.0
  %3117 = vmatpush1.msra.mxu0 0.0
  %3118 = vmatprep.subr.mxu0 0.0
  %3119 = vmatpush1.msra.mxu0 0.0
  %3120 = vmatprep.subr.mxu0 0.0
  %3121 = vmatpush1.msra.mxu0 0.0
  %3122 = vmatprep.subr.mxu0 0.0
  %3123 = vmatpush1.msra.mxu0 0.0
  %3124 = vmatprep.subr.mxu0 0.0
  %3125 = vmatpush1.msra.mxu0 0.0
  %3126 = vmatprep.subr.mxu0 0.0
  %3127 = vmatpush1.msra.mxu0 0.0
  %3128 = vmatprep.subr.mxu0 0.0
  %3129 = vmatpush1.msra.mxu0 0.0
  %3130 = vmatprep.subr.mxu0 0.0
  %3131 = vmatpush1.msra.mxu0 0.0
  %3132 = vmatprep.subr.mxu0 0.0
  %3133 = vmatpush1.msra.mxu0 0.0
  %3134 = vmatprep.subr.mxu0 0.0
  %3135 = vmatpush1.msra.mxu0 0.0
  %3136 = vmatprep.subr.mxu0 0.0
  %3137 = vmatpush1.msra.mxu0 0.0
  %3138 = vmatprep.subr.mxu0 0.0
  %3139 = vmatpush1.msra.mxu0 0.0
  %3140 = vmatprep.subr.mxu0 0.0
  %3141 = vmatpush1.msra.mxu0 0.0
  %3142 = vmatprep.subr.mxu0 0.0
  %3143 = vmatpush1.msra.mxu0 0.0
  %3144 = vmatprep.subr.mxu0 0.0
  %3145 = vmatpush1.msra.mxu0 0.0
  %3146 = vmatprep.mubr.f32.mxu0 0.0
  %3147 = vmatmul.mubr.f32.gmra.mrb[0].mxu0 %v3077
  %v3148 = vpop.f32.mrb[0].mxu0
  %v3149 = vadd.f32 0.0, %v3148
  %v3150 = vpop.f32.mrb[0].mxu0
  %3151 = vmatprep.mubr.f32.mxu0 0.0
  %3152 = vmatmul.mubr.f32.gmra.mrb[0].mxu0 %v3080
  %v3153 = vpop.f32.mrb[0].mxu0
  %v3154 = vadd.f32 0.0, %v3153
  %v3155 = vpop.f32.mrb[0].mxu0
  %3156 = vdwg.mxu0
  %v3158 = vsel %vm335, %v2726, 0
  %v3161 = vsel %vm335, %v2731, 0
  %3163 = vmatprep.subr.mxu0 0.0
  %3164 = vmatpush1.msra.mxu0 %v39
  %3165 = vmatprep.subr.mxu0 0.0
  %3166 = vmatpush1.msra.mxu0 0.0
  %3167 = vmatprep.subr.mxu0 0.0
  %3168 = vmatpush1.msra.mxu0 0.0
  %3169 = vmatprep.subr.mxu0 0.0
  %3170 = vmatpush1.msra.mxu0 0.0
  %3171 = vmatprep.subr.mxu0 0.0
  %3172 = vmatpush1.msra.mxu0 0.0
  %3173 = vmatprep.subr.mxu0 0.0
  %3174 = vmatpush1.msra.mxu0 0.0
  %3175 = vmatprep.subr.mxu0 0.0
  %3176 = vmatpush1.msra.mxu0 0.0
  %3177 = vmatprep.subr.mxu0 0.0
  %3178 = vmatpush1.msra.mxu0 0.0
  %3179 = vmatprep.subr.mxu0 0.0
  %3180 = vmatpush1.msra.mxu0 0.0
  %3181 = vmatprep.subr.mxu0 0.0
  %3182 = vmatpush1.msra.mxu0 0.0
  %3183 = vmatprep.subr.mxu0 0.0
  %3184 = vmatpush1.msra.mxu0 0.0
  %3185 = vmatprep.subr.mxu0 0.0
  %3186 = vmatpush1.msra.mxu0 0.0
  %3187 = vmatprep.subr.mxu0 0.0
  %3188 = vmatpush1.msra.mxu0 0.0
  %3189 = vmatprep.subr.mxu0 0.0
  %3190 = vmatpush1.msra.mxu0 0.0
  %3191 = vmatprep.subr.mxu0 0.0
  %3192 = vmatpush1.msra.mxu0 0.0
  %3193 = vmatprep.subr.mxu0 0.0
  %3194 = vmatpush1.msra.mxu0 0.0
  %3195 = vmatprep.subr.mxu0 0.0
  %3196 = vmatpush1.msra.mxu0 0.0
  %3197 = vmatprep.subr.mxu0 0.0
  %3198 = vmatpush1.msra.mxu0 0.0
  %3199 = vmatprep.subr.mxu0 0.0
  %3200 = vmatpush1.msra.mxu0 0.0
  %3201 = vmatprep.subr.mxu0 0.0
  %3202 = vmatpush1.msra.mxu0 0.0
  %3203 = vmatprep.subr.mxu0 0.0
  %3204 = vmatpush1.msra.mxu0 0.0
  %3205 = vmatprep.subr.mxu0 0.0
  %3206 = vmatpush1.msra.mxu0 0.0
  %3207 = vmatprep.subr.mxu0 0.0
  %3208 = vmatpush1.msra.mxu0 0.0
  %3209 = vmatprep.subr.mxu0 0.0
  %3210 = vmatpush1.msra.mxu0 0.0
  %3211 = vmatprep.subr.mxu0 0.0
  %3212 = vmatpush1.msra.mxu0 0.0
  %3213 = vmatprep.subr.mxu0 0.0
  %3214 = vmatpush1.msra.mxu0 0.0
  %3215 = vmatprep.subr.mxu0 0.0
  %3216 = vmatpush1.msra.mxu0 0.0
  %3217 = vmatprep.subr.mxu0 0.0
  %3218 = vmatpush1.msra.mxu0 0.0
  %3219 = vmatprep.subr.mxu0 0.0
  %3220 = vmatpush1.msra.mxu0 0.0
  %3221 = vmatprep.subr.mxu0 0.0
  %3222 = vmatpush1.msra.mxu0 0.0
  %3223 = vmatprep.subr.mxu0 0.0
  %3224 = vmatpush1.msra.mxu0 0.0
  %3225 = vmatprep.subr.mxu0 0.0
  %3226 = vmatpush1.msra.mxu0 0.0
  %3227 = vmatprep.mubr.f32.mxu0 0.0
  %3228 = vmatmul.mubr.f32.gmra.mrb[0].mxu0 %v3158
  %v3229 = vpop.f32.mrb[0].mxu0
  %v3230 = vadd.f32 %v3149, %v3229
  %v3231 = vpop.f32.mrb[0].mxu0
  %3232 = vmatprep.mubr.f32.mxu0 0.0
  %3233 = vmatmul.mubr.f32.gmra.mrb[0].mxu0 %v3161
  %v3234 = vpop.f32.mrb[0].mxu0
  %v3235 = vadd.f32 %v3154, %v3234
  %v3236 = vpop.f32.mrb[0].mxu0
  %3237 = vdwg.mxu0
  %3238 = vmatprep.subr.mxu0 0.0
  %3239 = vmatpush1.msra.mxu0 %v1151
  %3240 = vmatprep.subr.mxu0 0.0
  %3241 = vmatpush1.msra.mxu0 %v1153
  %3242 = vmatprep.subr.mxu0 0.0
  %3243 = vmatpush1.msra.mxu0 %v1155
  %3244 = vmatprep.subr.mxu0 0.0
  %3245 = vmatpush1.msra.mxu0 %v1157
  %3246 = vmatprep.subr.mxu0 0.0
  %3247 = vmatpush1.msra.mxu0 0.0
  %3248 = vmatprep.subr.mxu0 0.0
  %3249 = vmatpush1.msra.mxu0 0.0
  %3250 = vmatprep.subr.mxu0 0.0
  %3251 = vmatpush1.msra.mxu0 0.0
  %3252 = vmatprep.subr.mxu0 0.0
  %3253 = vmatpush1.msra.mxu0 0.0
  %3254 = vmatprep.subr.mxu0 0.0
  %3255 = vmatpush1.msra.mxu0 0.0
  %3256 = vmatprep.subr.mxu0 0.0
  %3257 = vmatpush1.msra.mxu0 0.0
  %3258 = vmatprep.subr.mxu0 0.0
  %3259 = vmatpush1.msra.mxu0 0.0
  %3260 = vmatprep.subr.mxu0 0.0
  %3261 = vmatpush1.msra.mxu0 0.0
  %3262 = vmatprep.subr.mxu0 0.0
  %3263 = vmatpush1.msra.mxu0 0.0
  %3264 = vmatprep.subr.mxu0 0.0
  %3265 = vmatpush1.msra.mxu0 0.0
  %3266 = vmatprep.subr.mxu0 0.0
  %3267 = vmatpush1.msra.mxu0 0.0
  %3268 = vmatprep.subr.mxu0 0.0
  %3269 = vmatpush1.msra.mxu0 0.0
  %3270 = vmatprep.subr.mxu0 0.0
  %3271 = vmatpush1.msra.mxu0 0.0
  %3272 = vmatprep.subr.mxu0 0.0
  %3273 = vmatpush1.msra.mxu0 0.0
  %3274 = vmatprep.subr.mxu0 0.0
  %3275 = vmatpush1.msra.mxu0 0.0
  %3276 = vmatprep.subr.mxu0 0.0
  %3277 = vmatpush1.msra.mxu0 0.0
  %3278 = vmatprep.subr.mxu0 0.0
  %3279 = vmatpush1.msra.mxu0 0.0
  %3280 = vmatprep.subr.mxu0 0.0
  %3281 = vmatpush1.msra.mxu0 0.0
  %3282 = vmatprep.subr.mxu0 0.0
  %3283 = vmatpush1.msra.mxu0 0.0
  %3284 = vmatprep.subr.mxu0 0.0
  %3285 = vmatpush1.msra.mxu0 0.0
  %3286 = vmatprep.subr.mxu0 0.0
  %3287 = vmatpush1.msra.mxu0 0.0
  %3288 = vmatprep.subr.mxu0 0.0
  %3289 = vmatpush1.msra.mxu0 0.0
  %3290 = vmatprep.subr.mxu0 0.0
  %3291 = vmatpush1.msra.mxu0 0.0
  %3292 = vmatprep.subr.mxu0 0.0
  %3293 = vmatpush1.msra.mxu0 0.0
  %3294 = vmatprep.subr.mxu0 0.0
  %3295 = vmatpush1.msra.mxu0 0.0
  %3296 = vmatprep.subr.mxu0 0.0
  %3297 = vmatpush1.msra.mxu0 0.0
  %3298 = vmatprep.subr.mxu0 0.0
  %3299 = vmatpush1.msra.mxu0 0.0
  %3300 = vmatprep.subr.mxu0 0.0
  %3301 = vmatpush1.msra.mxu0 0.0
  %3302 = vmatprep.mubr.f32.mxu0 0.0
  %3303 = vmatmul.mubr.f32.gmra.mrb[0].mxu0 %v2314
  %v3304 = vpop.f32.mrb[0].mxu0
  %v3305 = vadd.f32 %v1163, %v3304
  %v3306 = vpop.f32.mrb[0].mxu0
  %3307 = vmatprep.mubr.f32.mxu0 0.0
  %3308 = vmatmul.mubr.f32.gmra.mrb[0].mxu0 %v2317
  %v3309 = vpop.f32.mrb[0].mxu0
  %v3310 = vadd.f32 %v1163, %v3309
  %v3311 = vpop.f32.mrb[0].mxu0
  %3312 = vdwg.mxu0
  %3313 = vrot.lane.b32.xlu0 %v2386, 112
  %v3314 = vpop.permute.xlu0 %3313
  %3315 = vrot.lane.b32.xlu0 %v2391, 112
  %v3316 = vpop.permute.xlu0 %3315
  %v3318 = vsel %vm335, %v3305, 0
  %v3321 = vsel %vm335, %v3310, 0
  %v3323 = vsel %vm335, %v3314, 0
  %v3325 = vsel %vm335, %v3316, 0
  %3327 = vmatprep.subr.mxu0 0.0
  %3328 = vmatpush1.xpose.msra.mxu0 %v3323
  %3329 = vmatprep.subr.mxu0 0.0
  %3330 = vmatpush1.xpose.msra.mxu0 %v3325
  %3331 = vmatprep.subr.mxu0 0.0
  %3332 = vmatpush1.xpose.msra.mxu0 0.0
  %3333 = vmatprep.subr.mxu0 0.0
  %3334 = vmatpush1.xpose.msra.mxu0 0.0
  %3335 = vmatprep.subr.mxu0 0.0
  %3336 = vmatpush1.xpose.msra.mxu0 0.0
  %3337 = vmatprep.subr.mxu0 0.0
  %3338 = vmatpush1.xpose.msra.mxu0 0.0
  %3339 = vmatprep.subr.mxu0 0.0
  %3340 = vmatpush1.xpose.msra.mxu0 0.0
  %3341 = vmatprep.subr.mxu0 0.0
  %3342 = vmatpush1.xpose.msra.mxu0 0.0
  %3343 = vmatprep.subr.mxu0 0.0
  %3344 = vmatpush1.xpose.msra.mxu0 0.0
  %3345 = vmatprep.subr.mxu0 0.0
  %3346 = vmatpush1.xpose.msra.mxu0 0.0
  %3347 = vmatprep.subr.mxu0 0.0
  %3348 = vmatpush1.xpose.msra.mxu0 0.0
  %3349 = vmatprep.subr.mxu0 0.0
  %3350 = vmatpush1.xpose.msra.mxu0 0.0
  %3351 = vmatprep.subr.mxu0 0.0
  %3352 = vmatpush1.xpose.msra.mxu0 0.0
  %3353 = vmatprep.subr.mxu0 0.0
  %3354 = vmatpush1.xpose.msra.mxu0 0.0
  %3355 = vmatprep.subr.mxu0 0.0
  %3356 = vmatpush1.xpose.msra.mxu0 0.0
  %3357 = vmatprep.subr.mxu0 0.0
  %3358 = vmatpush1.xpose.msra.mxu0 0.0
  %3359 = vmatprep.subr.mxu0 0.0
  %3360 = vmatpush1.xpose.msra.mxu0 0.0
  %3361 = vmatprep.subr.mxu0 0.0
  %3362 = vmatpush1.xpose.msra.mxu0 0.0
  %3363 = vmatprep.subr.mxu0 0.0
  %3364 = vmatpush1.xpose.msra.mxu0 0.0
  %3365 = vmatprep.subr.mxu0 0.0
  %3366 = vmatpush1.xpose.msra.mxu0 0.0
  %3367 = vmatprep.subr.mxu0 0.0
  %3368 = vmatpush1.xpose.msra.mxu0 0.0
  %3369 = vmatprep.subr.mxu0 0.0
  %3370 = vmatpush1.xpose.msra.mxu0 0.0
  %3371 = vmatprep.subr.mxu0 0.0
  %3372 = vmatpush1.xpose.msra.mxu0 0.0
  %3373 = vmatprep.subr.mxu0 0.0
  %3374 = vmatpush1.xpose.msra.mxu0 0.0
  %3375 = vmatprep.subr.mxu0 0.0
  %3376 = vmatpush1.xpose.msra.mxu0 0.0
  %3377 = vmatprep.subr.mxu0 0.0
  %3378 = vmatpush1.xpose.msra.mxu0 0.0
  %3379 = vmatprep.subr.mxu0 0.0
  %3380 = vmatpush1.xpose.msra.mxu0 0.0
  %3381 = vmatprep.subr.mxu0 0.0
  %3382 = vmatpush1.xpose.msra.mxu0 0.0
  %3383 = vmatprep.subr.mxu0 0.0
  %3384 = vmatpush1.xpose.msra.mxu0 0.0
  %3385 = vmatprep.subr.mxu0 0.0
  %3386 = vmatpush1.xpose.msra.mxu0 0.0
  %3387 = vmatprep.subr.mxu0 0.0
  %3388 = vmatpush1.xpose.msra.mxu0 0.0
  %3389 = vmatprep.subr.mxu0 0.0
  %3390 = vmatpush1.xpose.msra.mxu0 0.0
  %3391 = vmatprep.mubr.f32.mxu0 0.0
  %3392 = vmatmul.mubr.f32.gmra.mrb[0].mxu0 %v3318
  %v3393 = vpop.f32.mrb[0].mxu0
  %v3394 = vadd.f32 %v69, %v3393
  %v3395 = vpop.f32.mrb[0].mxu0
  %3396 = vmatprep.mubr.f32.mxu0 0.0
  %3397 = vmatmul.mubr.f32.gmra.mrb[0].mxu0 %v3321
  %v3398 = vpop.f32.mrb[0].mxu0
  %v3399 = vadd.f32 %v70, %v3398
  %v3400 = vpop.f32.mrb[0].mxu0
  %3401 = vdwg.mxu0
  %v3402 = vsel %vm423, %v3394, -inf
  %3403 = vmax.xlane.f32.xlu0 %v3402
  %v3404 = vpop.xlane.xlu0 %3403
  %v3405 = vsel %vm423, %v3399, -inf
  %3406 = vmax.xlane.f32.xlu0 %v3405
  %v3407 = vpop.xlane.xlu0 %3406
  %v3408 = vsub.f32 %v3394, %v3404
  %v3409 = vsub.f32 %v3399, %v3407
  %v3410 = vmul.f32 %v3408, 1.442695
  %v3411 = vpow.pop %v3410
  %v3412 = vmul.f32 %v3409, 1.442695
  %v3413 = vpow.pop %v3412
  %v3414 = vsel %vm423, %v3411, 0.0
  %3415 = vadd.xlane.f32.xlu0 %v3414
  %v3416 = vpop.xlane.xlu0 %3415
  %v3417 = vsel %vm423, %v3413, 0.0
  %3418 = vadd.xlane.f32.xlu0 %v3417
  %v3419 = vpop.xlane.xlu0 %3418
  %v3420 = vrcp.pop %v3416
  %v3421 = vrcp.pop %v3419
  %v3422 = vmul.f32 %v3411, %v3420
  %v3423 = vmul.f32 %v3413, %v3421
  %3424 = vmatprep.subr.mxu0 0.0
  %3425 = vmatpush1.msra.mxu0 %v1352
  %3426 = vmatprep.subr.mxu0 0.0
  %3427 = vmatpush1.msra.mxu0 %v1354
  %3428 = vmatprep.subr.mxu0 0.0
  %3429 = vmatpush1.msra.mxu0 %v1356
  %3430 = vmatprep.subr.mxu0 0.0
  %3431 = vmatpush1.msra.mxu0 %v1358
  %3432 = vmatprep.subr.mxu0 0.0
  %3433 = vmatpush1.msra.mxu0 0.0
  %3434 = vmatprep.subr.mxu0 0.0
  %3435 = vmatpush1.msra.mxu0 0.0
  %3436 = vmatprep.subr.mxu0 0.0
  %3437 = vmatpush1.msra.mxu0 0.0
  %3438 = vmatprep.subr.mxu0 0.0
  %3439 = vmatpush1.msra.mxu0 0.0
  %3440 = vmatprep.subr.mxu0 0.0
  %3441 = vmatpush1.msra.mxu0 0.0
  %3442 = vmatprep.subr.mxu0 0.0
  %3443 = vmatpush1.msra.mxu0 0.0
  %3444 = vmatprep.subr.mxu0 0.0
  %3445 = vmatpush1.msra.mxu0 0.0
  %3446 = vmatprep.subr.mxu0 0.0
  %3447 = vmatpush1.msra.mxu0 0.0
  %3448 = vmatprep.subr.mxu0 0.0
  %3449 = vmatpush1.msra.mxu0 0.0
  %3450 = vmatprep.subr.mxu0 0.0
  %3451 = vmatpush1.msra.mxu0 0.0
  %3452 = vmatprep.subr.mxu0 0.0
  %3453 = vmatpush1.msra.mxu0 0.0
  %3454 = vmatprep.subr.mxu0 0.0
  %3455 = vmatpush1.msra.mxu0 0.0
  %3456 = vmatprep.subr.mxu0 0.0
  %3457 = vmatpush1.msra.mxu0 0.0
  %3458 = vmatprep.subr.mxu0 0.0
  %3459 = vmatpush1.msra.mxu0 0.0
  %3460 = vmatprep.subr.mxu0 0.0
  %3461 = vmatpush1.msra.mxu0 0.0
  %3462 = vmatprep.subr.mxu0 0.0
  %3463 = vmatpush1.msra.mxu0 0.0
  %3464 = vmatprep.subr.mxu0 0.0
  %3465 = vmatpush1.msra.mxu0 0.0
  %3466 = vmatprep.subr.mxu0 0.0
  %3467 = vmatpush1.msra.mxu0 0.0
  %3468 = vmatprep.subr.mxu0 0.0
  %3469 = vmatpush1.msra.mxu0 0.0
  %3470 = vmatprep.subr.mxu0 0.0
  %3471 = vmatpush1.msra.mxu0 0.0
  %3472 = vmatprep.subr.mxu0 0.0
  %3473 = vmatpush1.msra.mxu0 0.0
  %3474 = vmatprep.subr.mxu0 0.0
  %3475 = vmatpush1.msra.mxu0 0.0
  %3476 = vmatprep.subr.mxu0 0.0
  %3477 = vmatpush1.msra.mxu0 0.0
  %3478 = vmatprep.subr.mxu0 0.0
  %3479 = vmatpush1.msra.mxu0 0.0
  %3480 = vmatprep.subr.mxu0 0.0
  %3481 = vmatpush1.msra.mxu0 0.0
  %3482 = vmatprep.subr.mxu0 0.0
  %3483 = vmatpush1.msra.mxu0 0.0
  %3484 = vmatprep.subr.mxu0 0.0
  %3485 = vmatpush1.msra.mxu0 0.0
  %3486 = vmatprep.subr.mxu0 0.0
  %3487 = vmatpush1.msra.mxu0 0.0
  %3488 = vmatprep.mubr.f32.mxu0 0.0
  %3489 = vmatmul.mubr.f32.gmra.mrb[0].mxu0 %v2314
  %v3490 = vpop.f32.mrb[0].mxu0
  %v3491 = vadd.f32 %v1364, %v3490
  %v3492 = vpop.f32.mrb[0].mxu0
  %3493 = vmatprep.mubr.f32.mxu0 0.0
  %3494 = vmatmul.mubr.f32.gmra.mrb[0].mxu0 %v2317
  %v3495 = vpop.f32.mrb[0].mxu0
  %v3496 = vadd.f32 %v1364, %v3495
  %v3497 = vpop.f32.mrb[0].mxu0
  %3498 = vdwg.mxu0
  %v3500 = vsel %vm423, %v3422, 0
  %v3503 = vsel %vm423, %v3423, 0
  %3505 = vmatprep.subr.mxu0 0.0
  %3506 = vmatpush1.msra.mxu0 %v3491
  %3507 = vmatprep.subr.mxu0 0.0
  %3508 = vmatpush1.msra.mxu0 %v3496
  %3509 = vmatprep.subr.mxu0 0.0
  %3510 = vmatpush1.msra.mxu0 0.0
  %3511 = vmatprep.subr.mxu0 0.0
  %3512 = vmatpush1.msra.mxu0 0.0
  %3513 = vmatprep.subr.mxu0 0.0
  %3514 = vmatpush1.msra.mxu0 0.0
  %3515 = vmatprep.subr.mxu0 0.0
  %3516 = vmatpush1.msra.mxu0 0.0
  %3517 = vmatprep.subr.mxu0 0.0
  %3518 = vmatpush1.msra.mxu0 0.0
  %3519 = vmatprep.subr.mxu0 0.0
  %3520 = vmatpush1.msra.mxu0 0.0
  %3521 = vmatprep.subr.mxu0 0.0
  %3522 = vmatpush1.msra.mxu0 0.0
  %3523 = vmatprep.subr.mxu0 0.0
  %3524 = vmatpush1.msra.mxu0 0.0
  %3525 = vmatprep.subr.mxu0 0.0
  %3526 = vmatpush1.msra.mxu0 0.0
  %3527 = vmatprep.subr.mxu0 0.0
  %3528 = vmatpush1.msra.mxu0 0.0
  %3529 = vmatprep.subr.mxu0 0.0
  %3530 = vmatpush1.msra.mxu0 0.0
  %3531 = vmatprep.subr.mxu0 0.0
  %3532 = vmatpush1.msra.mxu0 0.0
  %3533 = vmatprep.subr.mxu0 0.0
  %3534 = vmatpush1.msra.mxu0 0.0
  %3535 = vmatprep.subr.mxu0 0.0
  %3536 = vmatpush1.msra.mxu0 0.0
  %3537 = vmatprep.subr.mxu0 0.0
  %3538 = vmatpush1.msra.mxu0 0.0
  %3539 = vmatprep.subr.mxu0 0.0
  %3540 = vmatpush1.msra.mxu0 0.0
  %3541 = vmatprep.subr.mxu0 0.0
  %3542 = vmatpush1.msra.mxu0 0.0
  %3543 = vmatprep.subr.mxu0 0.0
  %3544 = vmatpush1.msra.mxu0 0.0
  %3545 = vmatprep.subr.mxu0 0.0
  %3546 = vmatpush1.msra.mxu0 0.0
  %3547 = vmatprep.subr.mxu0 0.0
  %3548 = vmatpush1.msra.mxu0 0.0
  %3549 = vmatprep.subr.mxu0 0.0
  %3550 = vmatpush1.msra.mxu0 0.0
  %3551 = vmatprep.subr.mxu0 0.0
  %3552 = vmatpush1.msra.mxu0 0.0
  %3553 = vmatprep.subr.mxu0 0.0
  %3554 = vmatpush1.msra.mxu0 0.0
  %3555 = vmatprep.subr.mxu0 0.0
  %3556 = vmatpush1.msra.mxu0 0.0
  %3557 = vmatprep.subr.mxu0 0.0
  %3558 = vmatpush1.msra.mxu0 0.0
  %3559 = vmatprep.subr.mxu0 0.0
  %3560 = vmatpush1.msra.mxu0 0.0
  %3561 = vmatprep.subr.mxu0 0.0
  %3562 = vmatpush1.msra.mxu0 0.0
  %3563 = vmatprep.subr.mxu0 0.0
  %3564 = vmatpush1.msra.mxu0 0.0
  %3565 = vmatprep.subr.mxu0 0.0
  %3566 = vmatpush1.msra.mxu0 0.0
  %3567 = vmatprep.subr.mxu0 0.0
  %3568 = vmatpush1.msra.mxu0 0.0
  %3569 = vmatprep.mubr.f32.mxu0 0.0
  %3570 = vmatmul.mubr.f32.gmra.mrb[0].mxu0 %v3500
  %v3571 = vpop.f32.mrb[0].mxu0
  %v3572 = vadd.f32 0.0, %v3571
  %v3573 = vpop.f32.mrb[0].mxu0
  %3574 = vmatprep.mubr.f32.mxu0 0.0
  %3575 = vmatmul.mubr.f32.gmra.mrb[0].mxu0 %v3503
  %v3576 = vpop.f32.mrb[0].mxu0
  %v3577 = vadd.f32 0.0, %v3576
  %v3578 = vpop.f32.mrb[0].mxu0
  %3579 = vdwg.mxu0
  %v3581 = vsel %vm335, %v3572, 0
  %v3584 = vsel %vm335, %v3577, 0
  %3586 = vmatprep.subr.mxu0 0.0
  %3587 = vmatpush1.msra.mxu0 %v41
  %3588 = vmatprep.subr.mxu0 0.0
  %3589 = vmatpush1.msra.mxu0 0.0
  %3590 = vmatprep.subr.mxu0 0.0
  %3591 = vmatpush1.msra.mxu0 0.0
  %3592 = vmatprep.subr.mxu0 0.0
  %3593 = vmatpush1.msra.mxu0 0.0
  %3594 = vmatprep.subr.mxu0 0.0
  %3595 = vmatpush1.msra.mxu0 0.0
  %3596 = vmatprep.subr.mxu0 0.0
  %3597 = vmatpush1.msra.mxu0 0.0
  %3598 = vmatprep.subr.mxu0 0.0
  %3599 = vmatpush1.msra.mxu0 0.0
  %3600 = vmatprep.subr.mxu0 0.0
  %3601 = vmatpush1.msra.mxu0 0.0
  %3602 = vmatprep.subr.mxu0 0.0
  %3603 = vmatpush1.msra.mxu0 0.0
  %3604 = vmatprep.subr.mxu0 0.0
  %3605 = vmatpush1.msra.mxu0 0.0
  %3606 = vmatprep.subr.mxu0 0.0
  %3607 = vmatpush1.msra.mxu0 0.0
  %3608 = vmatprep.subr.mxu0 0.0
  %3609 = vmatpush1.msra.mxu0 0.0
  %3610 = vmatprep.subr.mxu0 0.0
  %3611 = vmatpush1.msra.mxu0 0.0
  %3612 = vmatprep.subr.mxu0 0.0
  %3613 = vmatpush1.msra.mxu0 0.0
  %3614 = vmatprep.subr.mxu0 0.0
  %3615 = vmatpush1.msra.mxu0 0.0
  %3616 = vmatprep.subr.mxu0 0.0
  %3617 = vmatpush1.msra.mxu0 0.0
  %3618 = vmatprep.subr.mxu0 0.0
  %3619 = vmatpush1.msra.mxu0 0.0
  %3620 = vmatprep.subr.mxu0 0.0
  %3621 = vmatpush1.msra.mxu0 0.0
  %3622 = vmatprep.subr.mxu0 0.0
  %3623 = vmatpush1.msra.mxu0 0.0
  %3624 = vmatprep.subr.mxu0 0.0
  %3625 = vmatpush1.msra.mxu0 0.0
  %3626 = vmatprep.subr.mxu0 0.0
  %3627 = vmatpush1.msra.mxu0 0.0
  %3628 = vmatprep.subr.mxu0 0.0
  %3629 = vmatpush1.msra.mxu0 0.0
  %3630 = vmatprep.subr.mxu0 0.0
  %3631 = vmatpush1.msra.mxu0 0.0
  %3632 = vmatprep.subr.mxu0 0.0
  %3633 = vmatpush1.msra.mxu0 0.0
  %3634 = vmatprep.subr.mxu0 0.0
  %3635 = vmatpush1.msra.mxu0 0.0
  %3636 = vmatprep.subr.mxu0 0.0
  %3637 = vmatpush1.msra.mxu0 0.0
  %3638 = vmatprep.subr.mxu0 0.0
  %3639 = vmatpush1.msra.mxu0 0.0
  %3640 = vmatprep.subr.mxu0 0.0
  %3641 = vmatpush1.msra.mxu0 0.0
  %3642 = vmatprep.subr.mxu0 0.0
  %3643 = vmatpush1.msra.mxu0 0.0
  %3644 = vmatprep.subr.mxu0 0.0
  %3645 = vmatpush1.msra.mxu0 0.0
  %3646 = vmatprep.subr.mxu0 0.0
  %3647 = vmatpush1.msra.mxu0 0.0
  %3648 = vmatprep.subr.mxu0 0.0
  %3649 = vmatpush1.msra.mxu0 0.0
  %3650 = vmatprep.mubr.f32.mxu0 0.0
  %3651 = vmatmul.mubr.f32.gmra.mrb[0].mxu0 %v3581
  %v3652 = vpop.f32.mrb[0].mxu0
  %v3653 = vadd.f32 0.0, %v3652
  %v3654 = vpop.f32.mrb[0].mxu0
  %3655 = vmatprep.mubr.f32.mxu0 0.0
  %3656 = vmatmul.mubr.f32.gmra.mrb[0].mxu0 %v3584
  %v3657 = vpop.f32.mrb[0].mxu0
  %v3658 = vadd.f32 0.0, %v3657
  %v3659 = vpop.f32.mrb[0].mxu0
  %3660 = vdwg.mxu0
  %v3661 = vadd.f32 %v3230, %v3653
  %v3662 = vadd.f32 %v3235, %v3658
  %3663 = vmatprep.subr.mxu0 0.0
  %3664 = vmatpush1.msra.mxu0 %v1606
  %3665 = vmatprep.subr.mxu0 0.0
  %3666 = vmatpush1.msra.mxu0 %v1608
  %3667 = vmatprep.subr.mxu0 0.0
  %3668 = vmatpush1.msra.mxu0 %v1610
  %3669 = vmatprep.subr.mxu0 0.0
  %3670 = vmatpush1.msra.mxu0 %v1612
  %3671 = vmatprep.subr.mxu0 0.0
  %3672 = vmatpush1.msra.mxu0 0.0
  %3673 = vmatprep.subr.mxu0 0.0
  %3674 = vmatpush1.msra.mxu0 0.0
  %3675 = vmatprep.subr.mxu0 0.0
  %3676 = vmatpush1.msra.mxu0 0.0
  %3677 = vmatprep.subr.mxu0 0.0
  %3678 = vmatpush1.msra.mxu0 0.0
  %3679 = vmatprep.subr.mxu0 0.0
  %3680 = vmatpush1.msra.mxu0 0.0
  %3681 = vmatprep.subr.mxu0 0.0
  %3682 = vmatpush1.msra.mxu0 0.0
  %3683 = vmatprep.subr.mxu0 0.0
  %3684 = vmatpush1.msra.mxu0 0.0
  %3685 = vmatprep.subr.mxu0 0.0
  %3686 = vmatpush1.msra.mxu0 0.0
  %3687 = vmatprep.subr.mxu0 0.0
  %3688 = vmatpush1.msra.mxu0 0.0
  %3689 = vmatprep.subr.mxu0 0.0
  %3690 = vmatpush1.msra.mxu0 0.0
  %3691 = vmatprep.subr.mxu0 0.0
  %3692 = vmatpush1.msra.mxu0 0.0
  %3693 = vmatprep.subr.mxu0 0.0
  %3694 = vmatpush1.msra.mxu0 0.0
  %3695 = vmatprep.subr.mxu0 0.0
  %3696 = vmatpush1.msra.mxu0 0.0
  %3697 = vmatprep.subr.mxu0 0.0
  %3698 = vmatpush1.msra.mxu0 0.0
  %3699 = vmatprep.subr.mxu0 0.0
  %3700 = vmatpush1.msra.mxu0 0.0
  %3701 = vmatprep.subr.mxu0 0.0
  %3702 = vmatpush1.msra.mxu0 0.0
  %3703 = vmatprep.subr.mxu0 0.0
  %3704 = vmatpush1.msra.mxu0 0.0
  %3705 = vmatprep.subr.mxu0 0.0
  %3706 = vmatpush1.msra.mxu0 0.0
  %3707 = vmatprep.subr.mxu0 0.0
  %3708 = vmatpush1.msra.mxu0 0.0
  %3709 = vmatprep.subr.mxu0 0.0
  %3710 = vmatpush1.msra.mxu0 0.0
  %3711 = vmatprep.subr.mxu0 0.0
  %3712 = vmatpush1.msra.mxu0 0.0
  %3713 = vmatprep.subr.mxu0 0.0
  %3714 = vmatpush1.msra.mxu0 0.0
  %3715 = vmatprep.subr.mxu0 0.0
  %3716 = vmatpush1.msra.mxu0 0.0
  %3717 = vmatprep.subr.mxu0 0.0
  %3718 = vmatpush1.msra.mxu0 0.0
  %3719 = vmatprep.subr.mxu0 0.0
  %3720 = vmatpush1.msra.mxu0 0.0
  %3721 = vmatprep.subr.mxu0 0.0
  %3722 = vmatpush1.msra.mxu0 0.0
  %3723 = vmatprep.subr.mxu0 0.0
  %3724 = vmatpush1.msra.mxu0 0.0
  %3725 = vmatprep.subr.mxu0 0.0
  %3726 = vmatpush1.msra.mxu0 0.0
  %3727 = vmatprep.mubr.f32.mxu0 0.0
  %3728 = vmatmul.mubr.f32.gmra.mrb[0].mxu0 %v2314
  %v3729 = vpop.f32.mrb[0].mxu0
  %v3730 = vadd.f32 %v1618, %v3729
  %v3731 = vpop.f32.mrb[0].mxu0
  %3732 = vmatprep.mubr.f32.mxu0 0.0
  %3733 = vmatmul.mubr.f32.gmra.mrb[0].mxu0 %v2317
  %v3734 = vpop.f32.mrb[0].mxu0
  %v3735 = vadd.f32 %v1618, %v3734
  %v3736 = vpop.f32.mrb[0].mxu0
  %3737 = vdwg.mxu0
  %3738 = vrot.lane.b32.xlu0 %v2386, 104
  %v3739 = vpop.permute.xlu0 %3738
  %3740 = vrot.lane.b32.xlu0 %v2391, 104
  %v3741 = vpop.permute.xlu0 %3740
  %v3743 = vsel %vm335, %v3730, 0
  %v3746 = vsel %vm335, %v3735, 0
  %v3748 = vsel %vm335, %v3739, 0
  %v3750 = vsel %vm335, %v3741, 0
  %3752 = vmatprep.subr.mxu0 0.0
  %3753 = vmatpush1.xpose.msra.mxu0 %v3748
  %3754 = vmatprep.subr.mxu0 0.0
  %3755 = vmatpush1.xpose.msra.mxu0 %v3750
  %3756 = vmatprep.subr.mxu0 0.0
  %3757 = vmatpush1.xpose.msra.mxu0 0.0
  %3758 = vmatprep.subr.mxu0 0.0
  %3759 = vmatpush1.xpose.msra.mxu0 0.0
  %3760 = vmatprep.subr.mxu0 0.0
  %3761 = vmatpush1.xpose.msra.mxu0 0.0
  %3762 = vmatprep.subr.mxu0 0.0
  %3763 = vmatpush1.xpose.msra.mxu0 0.0
  %3764 = vmatprep.subr.mxu0 0.0
  %3765 = vmatpush1.xpose.msra.mxu0 0.0
  %3766 = vmatprep.subr.mxu0 0.0
  %3767 = vmatpush1.xpose.msra.mxu0 0.0
  %3768 = vmatprep.subr.mxu0 0.0
  %3769 = vmatpush1.xpose.msra.mxu0 0.0
  %3770 = vmatprep.subr.mxu0 0.0
  %3771 = vmatpush1.xpose.msra.mxu0 0.0
  %3772 = vmatprep.subr.mxu0 0.0
  %3773 = vmatpush1.xpose.msra.mxu0 0.0
  %3774 = vmatprep.subr.mxu0 0.0
  %3775 = vmatpush1.xpose.msra.mxu0 0.0
  %3776 = vmatprep.subr.mxu0 0.0
  %3777 = vmatpush1.xpose.msra.mxu0 0.0
  %3778 = vmatprep.subr.mxu0 0.0
  %3779 = vmatpush1.xpose.msra.mxu0 0.0
  %3780 = vmatprep.subr.mxu0 0.0
  %3781 = vmatpush1.xpose.msra.mxu0 0.0
  %3782 = vmatprep.subr.mxu0 0.0
  %3783 = vmatpush1.xpose.msra.mxu0 0.0
  %3784 = vmatprep.subr.mxu0 0.0
  %3785 = vmatpush1.xpose.msra.mxu0 0.0
  %3786 = vmatprep.subr.mxu0 0.0
  %3787 = vmatpush1.xpose.msra.mxu0 0.0
  %3788 = vmatprep.subr.mxu0 0.0
  %3789 = vmatpush1.xpose.msra.mxu0 0.0
  %3790 = vmatprep.subr.mxu0 0.0
  %3791 = vmatpush1.xpose.msra.mxu0 0.0
  %3792 = vmatprep.subr.mxu0 0.0
  %3793 = vmatpush1.xpose.msra.mxu0 0.0
  %3794 = vmatprep.subr.mxu0 0.0
  %3795 = vmatpush1.xpose.msra.mxu0 0.0
  %3796 = vmatprep.subr.mxu0 0.0
  %3797 = vmatpush1.xpose.msra.mxu0 0.0
  %3798 = vmatprep.subr.mxu0 0.0
  %3799 = vmatpush1.xpose.msra.mxu0 0.0
  %3800 = vmatprep.subr.mxu0 0.0
  %3801 = vmatpush1.xpose.msra.mxu0 0.0
  %3802 = vmatprep.subr.mxu0 0.0
  %3803 = vmatpush1.xpose.msra.mxu0 0.0
  %3804 = vmatprep.subr.mxu0 0.0
  %3805 = vmatpush1.xpose.msra.mxu0 0.0
  %3806 = vmatprep.subr.mxu0 0.0
  %3807 = vmatpush1.xpose.msra.mxu0 0.0
  %3808 = vmatprep.subr.mxu0 0.0
  %3809 = vmatpush1.xpose.msra.mxu0 0.0
  %3810 = vmatprep.subr.mxu0 0.0
  %3811 = vmatpush1.xpose.msra.mxu0 0.0
  %3812 = vmatprep.subr.mxu0 0.0
  %3813 = vmatpush1.xpose.msra.mxu0 0.0
  %3814 = vmatprep.subr.mxu0 0.0
  %3815 = vmatpush1.xpose.msra.mxu0 0.0
  %3816 = vmatprep.mubr.f32.mxu0 0.0
  %3817 = vmatmul.mubr.f32.gmra.mrb[0].mxu0 %v3743
  %v3818 = vpop.f32.mrb[0].mxu0
  %v3819 = vadd.f32 %v69, %v3818
  %v3820 = vpop.f32.mrb[0].mxu0
  %3821 = vmatprep.mubr.f32.mxu0 0.0
  %3822 = vmatmul.mubr.f32.gmra.mrb[0].mxu0 %v3746
  %v3823 = vpop.f32.mrb[0].mxu0
  %v3824 = vadd.f32 %v70, %v3823
  %v3825 = vpop.f32.mrb[0].mxu0
  %3826 = vdwg.mxu0
  %v3827 = vsel %vm423, %v3819, -inf
  %3828 = vmax.xlane.f32.xlu0 %v3827
  %v3829 = vpop.xlane.xlu0 %3828
  %v3830 = vsel %vm423, %v3824, -inf
  %3831 = vmax.xlane.f32.xlu0 %v3830
  %v3832 = vpop.xlane.xlu0 %3831
  %v3833 = vsub.f32 %v3819, %v3829
  %v3834 = vsub.f32 %v3824, %v3832
  %v3835 = vmul.f32 %v3833, 1.442695
  %v3836 = vpow.pop %v3835
  %v3837 = vmul.f32 %v3834, 1.442695
  %v3838 = vpow.pop %v3837
  %v3839 = vsel %vm423, %v3836, 0.0
  %3840 = vadd.xlane.f32.xlu0 %v3839
  %v3841 = vpop.xlane.xlu0 %3840
  %v3842 = vsel %vm423, %v3838, 0.0
  %3843 = vadd.xlane.f32.xlu0 %v3842
  %v3844 = vpop.xlane.xlu0 %3843
  %v3845 = vrcp.pop %v3841
  %v3846 = vrcp.pop %v3844
  %v3847 = vmul.f32 %v3836, %v3845
  %v3848 = vmul.f32 %v3838, %v3846
  %3849 = vmatprep.subr.mxu0 0.0
  %3850 = vmatpush1.msra.mxu0 %v1807
  %3851 = vmatprep.subr.mxu0 0.0
  %3852 = vmatpush1.msra.mxu0 %v1809
  %3853 = vmatprep.subr.mxu0 0.0
  %3854 = vmatpush1.msra.mxu0 %v1811
  %3855 = vmatprep.subr.mxu0 0.0
  %3856 = vmatpush1.msra.mxu0 %v1813
  %3857 = vmatprep.subr.mxu0 0.0
  %3858 = vmatpush1.msra.mxu0 0.0
  %3859 = vmatprep.subr.mxu0 0.0
  %3860 = vmatpush1.msra.mxu0 0.0
  %3861 = vmatprep.subr.mxu0 0.0
  %3862 = vmatpush1.msra.mxu0 0.0
  %3863 = vmatprep.subr.mxu0 0.0
  %3864 = vmatpush1.msra.mxu0 0.0
  %3865 = vmatprep.subr.mxu0 0.0
  %3866 = vmatpush1.msra.mxu0 0.0
  %3867 = vmatprep.subr.mxu0 0.0
  %3868 = vmatpush1.msra.mxu0 0.0
  %3869 = vmatprep.subr.mxu0 0.0
  %3870 = vmatpush1.msra.mxu0 0.0
  %3871 = vmatprep.subr.mxu0 0.0
  %3872 = vmatpush1.msra.mxu0 0.0
  %3873 = vmatprep.subr.mxu0 0.0
  %3874 = vmatpush1.msra.mxu0 0.0
  %3875 = vmatprep.subr.mxu0 0.0
  %3876 = vmatpush1.msra.mxu0 0.0
  %3877 = vmatprep.subr.mxu0 0.0
  %3878 = vmatpush1.msra.mxu0 0.0
  %3879 = vmatprep.subr.mxu0 0.0
  %3880 = vmatpush1.msra.mxu0 0.0
  %3881 = vmatprep.subr.mxu0 0.0
  %3882 = vmatpush1.msra.mxu0 0.0
  %3883 = vmatprep.subr.mxu0 0.0
  %3884 = vmatpush1.msra.mxu0 0.0
  %3885 = vmatprep.subr.mxu0 0.0
  %3886 = vmatpush1.msra.mxu0 0.0
  %3887 = vmatprep.subr.mxu0 0.0
  %3888 = vmatpush1.msra.mxu0 0.0
  %3889 = vmatprep.subr.mxu0 0.0
  %3890 = vmatpush1.msra.mxu0 0.0
  %3891 = vmatprep.subr.mxu0 0.0
  %3892 = vmatpush1.msra.mxu0 0.0
  %3893 = vmatprep.subr.mxu0 0.0
  %3894 = vmatpush1.msra.mxu0 0.0
  %3895 = vmatprep.subr.mxu0 0.0
  %3896 = vmatpush1.msra.mxu0 0.0
  %3897 = vmatprep.subr.mxu0 0.0
  %3898 = vmatpush1.msra.mxu0 0.0
  %3899 = vmatprep.subr.mxu0 0.0
  %3900 = vmatpush1.msra.mxu0 0.0
  %3901 = vmatprep.subr.mxu0 0.0
  %3902 = vmatpush1.msra.mxu0 0.0
  %3903 = vmatprep.subr.mxu0 0.0
  %3904 = vmatpush1.msra.mxu0 0.0
  %3905 = vmatprep.subr.mxu0 0.0
  %3906 = vmatpush1.msra.mxu0 0.0
  %3907 = vmatprep.subr.mxu0 0.0
  %3908 = vmatpush1.msra.mxu0 0.0
  %3909 = vmatprep.subr.mxu0 0.0
  %3910 = vmatpush1.msra.mxu0 0.0
  %3911 = vmatprep.subr.mxu0 0.0
  %3912 = vmatpush1.msra.mxu0 0.0
  %3913 = vmatprep.mubr.f32.mxu0 0.0
  %3914 = vmatmul.mubr.f32.gmra.mrb[0].mxu0 %v2314
  %v3915 = vpop.f32.mrb[0].mxu0
  %v3916 = vadd.f32 %v1819, %v3915
  %v3917 = vpop.f32.mrb[0].mxu0
  %3918 = vmatprep.mubr.f32.mxu0 0.0
  %3919 = vmatmul.mubr.f32.gmra.mrb[0].mxu0 %v2317
  %v3920 = vpop.f32.mrb[0].mxu0
  %v3921 = vadd.f32 %v1819, %v3920
  %v3922 = vpop.f32.mrb[0].mxu0
  %3923 = vdwg.mxu0
  %v3925 = vsel %vm423, %v3847, 0
  %v3928 = vsel %vm423, %v3848, 0
  %3930 = vmatprep.subr.mxu0 0.0
  %3931 = vmatpush1.msra.mxu0 %v3916
  %3932 = vmatprep.subr.mxu0 0.0
  %3933 = vmatpush1.msra.mxu0 %v3921
  %3934 = vmatprep.subr.mxu0 0.0
  %3935 = vmatpush1.msra.mxu0 0.0
  %3936 = vmatprep.subr.mxu0 0.0
  %3937 = vmatpush1.msra.mxu0 0.0
  %3938 = vmatprep.subr.mxu0 0.0
  %3939 = vmatpush1.msra.mxu0 0.0
  %3940 = vmatprep.subr.mxu0 0.0
  %3941 = vmatpush1.msra.mxu0 0.0
  %3942 = vmatprep.subr.mxu0 0.0
  %3943 = vmatpush1.msra.mxu0 0.0
  %3944 = vmatprep.subr.mxu0 0.0
  %3945 = vmatpush1.msra.mxu0 0.0
  %3946 = vmatprep.subr.mxu0 0.0
  %3947 = vmatpush1.msra.mxu0 0.0
  %3948 = vmatprep.subr.mxu0 0.0
  %3949 = vmatpush1.msra.mxu0 0.0
  %3950 = vmatprep.subr.mxu0 0.0
  %3951 = vmatpush1.msra.mxu0 0.0
  %3952 = vmatprep.subr.mxu0 0.0
  %3953 = vmatpush1.msra.mxu0 0.0
  %3954 = vmatprep.subr.mxu0 0.0
  %3955 = vmatpush1.msra.mxu0 0.0
  %3956 = vmatprep.subr.mxu0 0.0
  %3957 = vmatpush1.msra.mxu0 0.0
  %3958 = vmatprep.subr.mxu0 0.0
  %3959 = vmatpush1.msra.mxu0 0.0
  %3960 = vmatprep.subr.mxu0 0.0
  %3961 = vmatpush1.msra.mxu0 0.0
  %3962 = vmatprep.subr.mxu0 0.0
  %3963 = vmatpush1.msra.mxu0 0.0
  %3964 = vmatprep.subr.mxu0 0.0
  %3965 = vmatpush1.msra.mxu0 0.0
  %3966 = vmatprep.subr.mxu0 0.0
  %3967 = vmatpush1.msra.mxu0 0.0
  %3968 = vmatprep.subr.mxu0 0.0
  %3969 = vmatpush1.msra.mxu0 0.0
  %3970 = vmatprep.subr.mxu0 0.0
  %3971 = vmatpush1.msra.mxu0 0.0
  %3972 = vmatprep.subr.mxu0 0.0
  %3973 = vmatpush1.msra.mxu0 0.0
  %3974 = vmatprep.subr.mxu0 0.0
  %3975 = vmatpush1.msra.mxu0 0.0
  %3976 = vmatprep.subr.mxu0 0.0
  %3977 = vmatpush1.msra.mxu0 0.0
  %3978 = vmatprep.subr.mxu0 0.0
  %3979 = vmatpush1.msra.mxu0 0.0
  %3980 = vmatprep.subr.mxu0 0.0
  %3981 = vmatpush1.msra.mxu0 0.0
  %3982 = vmatprep.subr.mxu0 0.0
  %3983 = vmatpush1.msra.mxu0 0.0
  %3984 = vmatprep.subr.mxu0 0.0
  %3985 = vmatpush1.msra.mxu0 0.0
  %3986 = vmatprep.subr.mxu0 0.0
  %3987 = vmatpush1.msra.mxu0 0.0
  %3988 = vmatprep.subr.mxu0 0.0
  %3989 = vmatpush1.msra.mxu0 0.0
  %3990 = vmatprep.subr.mxu0 0.0
  %3991 = vmatpush1.msra.mxu0 0.0
  %3992 = vmatprep.subr.mxu0 0.0
  %3993 = vmatpush1.msra.mxu0 0.0
  %3994 = vmatprep.mubr.f32.mxu0 0.0
  %3995 = vmatmul.mubr.f32.gmra.mrb[0].mxu0 %v3925
  %v3996 = vpop.f32.mrb[0].mxu0
  %v3997 = vadd.f32 0.0, %v3996
  %v3998 = vpop.f32.mrb[0].mxu0
  %3999 = vmatprep.mubr.f32.mxu0 0.0
  %4000 = vmatmul.mubr.f32.gmra.mrb[0].mxu0 %v3928
  %v4001 = vpop.f32.mrb[0].mxu0
  %v4002 = vadd.f32 0.0, %v4001
  %v4003 = vpop.f32.mrb[0].mxu0
  %4004 = vdwg.mxu0
  %v4006 = vsel %vm335, %v3997, 0
  %v4009 = vsel %vm335, %v4002, 0
  %4011 = vmatprep.subr.mxu0 0.0
  %4012 = vmatpush1.msra.mxu0 %v42
  %4013 = vmatprep.subr.mxu0 0.0
  %4014 = vmatpush1.msra.mxu0 0.0
  %4015 = vmatprep.subr.mxu0 0.0
  %4016 = vmatpush1.msra.mxu0 0.0
  %4017 = vmatprep.subr.mxu0 0.0
  %4018 = vmatpush1.msra.mxu0 0.0
  %4019 = vmatprep.subr.mxu0 0.0
  %4020 = vmatpush1.msra.mxu0 0.0
  %4021 = vmatprep.subr.mxu0 0.0
  %4022 = vmatpush1.msra.mxu0 0.0
  %4023 = vmatprep.subr.mxu0 0.0
  %4024 = vmatpush1.msra.mxu0 0.0
  %4025 = vmatprep.subr.mxu0 0.0
  %4026 = vmatpush1.msra.mxu0 0.0
  %4027 = vmatprep.subr.mxu0 0.0
  %4028 = vmatpush1.msra.mxu0 0.0
  %4029 = vmatprep.subr.mxu0 0.0
  %4030 = vmatpush1.msra.mxu0 0.0
  %4031 = vmatprep.subr.mxu0 0.0
  %4032 = vmatpush1.msra.mxu0 0.0
  %4033 = vmatprep.subr.mxu0 0.0
  %4034 = vmatpush1.msra.mxu0 0.0
  %4035 = vmatprep.subr.mxu0 0.0
  %4036 = vmatpush1.msra.mxu0 0.0
  %4037 = vmatprep.subr.mxu0 0.0
  %4038 = vmatpush1.msra.mxu0 0.0
  %4039 = vmatprep.subr.mxu0 0.0
  %4040 = vmatpush1.msra.mxu0 0.0
  %4041 = vmatprep.subr.mxu0 0.0
  %4042 = vmatpush1.msra.mxu0 0.0
  %4043 = vmatprep.subr.mxu0 0.0
  %4044 = vmatpush1.msra.mxu0 0.0
  %4045 = vmatprep.subr.mxu0 0.0
  %4046 = vmatpush1.msra.mxu0 0.0
  %4047 = vmatprep.subr.mxu0 0.0
  %4048 = vmatpush1.msra.mxu0 0.0
  %4049 = vmatprep.subr.mxu0 0.0
  %4050 = vmatpush1.msra.mxu0 0.0
  %4051 = vmatprep.subr.mxu0 0.0
  %4052 = vmatpush1.msra.mxu0 0.0
  %4053 = vmatprep.subr.mxu0 0.0
  %4054 = vmatpush1.msra.mxu0 0.0
  %4055 = vmatprep.subr.mxu0 0.0
  %4056 = vmatpush1.msra.mxu0 0.0
  %4057 = vmatprep.subr.mxu0 0.0
  %4058 = vmatpush1.msra.mxu0 0.0
  %4059 = vmatprep.subr.mxu0 0.0
  %4060 = vmatpush1.msra.mxu0 0.0
  %4061 = vmatprep.subr.mxu0 0.0
  %4062 = vmatpush1.msra.mxu0 0.0
  %4063 = vmatprep.subr.mxu0 0.0
  %4064 = vmatpush1.msra.mxu0 0.0
  %4065 = vmatprep.subr.mxu0 0.0
  %4066 = vmatpush1.msra.mxu0 0.0
  %4067 = vmatprep.subr.mxu0 0.0
  %4068 = vmatpush1.msra.mxu0 0.0
  %4069 = vmatprep.subr.mxu0 0.0
  %4070 = vmatpush1.msra.mxu0 0.0
  %4071 = vmatprep.subr.mxu0 0.0
  %4072 = vmatpush1.msra.mxu0 0.0
  %4073 = vmatprep.subr.mxu0 0.0
  %4074 = vmatpush1.msra.mxu0 0.0
  %4075 = vmatprep.mubr.f32.mxu0 0.0
  %4076 = vmatmul.mubr.f32.gmra.mrb[0].mxu0 %v4006
  %v4077 = vpop.f32.mrb[0].mxu0
  %v4078 = vadd.f32 0.0, %v4077
  %v4079 = vpop.f32.mrb[0].mxu0
  %4080 = vmatprep.mubr.f32.mxu0 0.0
  %4081 = vmatmul.mubr.f32.gmra.mrb[0].mxu0 %v4009
  %v4082 = vpop.f32.mrb[0].mxu0
  %v4083 = vadd.f32 0.0, %v4082
  %v4084 = vpop.f32.mrb[0].mxu0
  %4085 = vdwg.mxu0
  %v4086 = vadd.f32 %v3661, %v4078
  %v4087 = vadd.f32 %v3662, %v4083
  %v4088 = vadd.f32 %v4086, %v2063
  %v4089 = vadd.f32 %v4087, %v2063
  %v4090 = vadd.f32 %v2311, %v4088
  %v4091 = vadd.f32 %v2312, %v4089
  %v4092 = vsel %vm174, %v4090, 0.0
  %4093 = vadd.xlane.f32.xlu0 %v4092
  %v4094 = vpop.xlane.xlu0 %4093
  %v4095 = vsel %vm174, %v4091, 0.0
  %4096 = vadd.xlane.f32.xlu0 %v4095
  %v4097 = vpop.xlane.xlu0 %4096
  %v4098 = vmul.f32 %v4094, %v2074
  %v4099 = vmul.f32 %v4097, %v2074
  %v4100 = vsub.f32 %v4090, %v4098
  %v4101 = vsub.f32 %v4091, %v4099
  %v4102 = vmul.f32 %v4100, %v4100
  %v4103 = vmul.f32 %v4101, %v4101
  %v4104 = vsel %vm174, %v4102, 0.0
  %4105 = vadd.xlane.f32.xlu0 %v4104
  %v4106 = vpop.xlane.xlu0 %4105
  %v4107 = vsel %vm174, %v4103, 0.0
  %4108 = vadd.xlane.f32.xlu0 %v4107
  %v4109 = vpop.xlane.xlu0 %4108
  %v4110 = vmul.f32 %v4106, %v2074
  %v4111 = vmul.f32 %v4109, %v2074
  %v4112 = vadd.f32 %v4110, 1e-05
  %v4113 = vadd.f32 %v4111, 1e-05
  %v4114 = vrsqrt.pop %v4112
  %v4115 = vrsqrt.pop %v4113
  %v4116 = vmul.f32 %v4100, %v4114
  %v4117 = vmul.f32 %v4101, %v4115
  %v4118 = vmul.f32 %v4116, %v2098
  %v4119 = vmul.f32 %v4117, %v2098
  %v4120 = vadd.f32 %v4118, %v2104
  %v4121 = vadd.f32 %v4119, %v2104
  %v4123 = vsel %vm174, %v4120, 0
  %v4126 = vsel %vm174, %v4121, 0
  %4128 = vmatprep.subr.mxu0 0.0
  %4129 = vmatpush1.msra.mxu0 %v59
  %4130 = vmatprep.subr.mxu0 0.0
  %4131 = vmatpush1.msra.mxu0 %v60
  %4132 = vmatprep.subr.mxu0 0.0
  %4133 = vmatpush1.msra.mxu0 %v61
  %4134 = vmatprep.subr.mxu0 0.0
  %4135 = vmatpush1.msra.mxu0 %v62
  %4136 = vmatprep.subr.mxu0 0.0
  %4137 = vmatpush1.msra.mxu0 0.0
  %4138 = vmatprep.subr.mxu0 0.0
  %4139 = vmatpush1.msra.mxu0 0.0
  %4140 = vmatprep.subr.mxu0 0.0
  %4141 = vmatpush1.msra.mxu0 0.0
  %4142 = vmatprep.subr.mxu0 0.0
  %4143 = vmatpush1.msra.mxu0 0.0
  %4144 = vmatprep.subr.mxu0 0.0
  %4145 = vmatpush1.msra.mxu0 0.0
  %4146 = vmatprep.subr.mxu0 0.0
  %4147 = vmatpush1.msra.mxu0 0.0
  %4148 = vmatprep.subr.mxu0 0.0
  %4149 = vmatpush1.msra.mxu0 0.0
  %4150 = vmatprep.subr.mxu0 0.0
  %4151 = vmatpush1.msra.mxu0 0.0
  %4152 = vmatprep.subr.mxu0 0.0
  %4153 = vmatpush1.msra.mxu0 0.0
  %4154 = vmatprep.subr.mxu0 0.0
  %4155 = vmatpush1.msra.mxu0 0.0
  %4156 = vmatprep.subr.mxu0 0.0
  %4157 = vmatpush1.msra.mxu0 0.0
  %4158 = vmatprep.subr.mxu0 0.0
  %4159 = vmatpush1.msra.mxu0 0.0
  %4160 = vmatprep.subr.mxu0 0.0
  %4161 = vmatpush1.msra.mxu0 0.0
  %4162 = vmatprep.subr.mxu0 0.0
  %4163 = vmatpush1.msra.mxu0 0.0
  %4164 = vmatprep.subr.mxu0 0.0
  %4165 = vmatpush1.msra.mxu0 0.0
  %4166 = vmatprep.subr.mxu0 0.0
  %4167 = vmatpush1.msra.mxu0 0.0
  %4168 = vmatprep.subr.mxu0 0.0
  %4169 = vmatpush1.msra.mxu0 0.0
  %4170 = vmatprep.subr.mxu0 0.0
  %4171 = vmatpush1.msra.mxu0 0.0
  %4172 = vmatprep.subr.mxu0 0.0
  %4173 = vmatpush1.msra.mxu0 0.0
  %4174 = vmatprep.subr.mxu0 0.0
  %4175 = vmatpush1.msra.mxu0 0.0
  %4176 = vmatprep.subr.mxu0 0.0
  %4177 = vmatpush1.msra.mxu0 0.0
  %4178 = vmatprep.subr.mxu0 0.0
  %4179 = vmatpush1.msra.mxu0 0.0
  %4180 = vmatprep.subr.mxu0 0.0
  %4181 = vmatpush1.msra.mxu0 0.0
  %4182 = vmatprep.subr.mxu0 0.0
  %4183 = vmatpush1.msra.mxu0 0.0
  %4184 = vmatprep.subr.mxu0 0.0
  %4185 = vmatpush1.msra.mxu0 0.0
  %4186 = vmatprep.subr.mxu0 0.0
  %4187 = vmatpush1.msra.mxu0 0.0
  %4188 = vmatprep.subr.mxu0 0.0
  %4189 = vmatpush1.msra.mxu0 0.0
  %4190 = vmatprep.subr.mxu0 0.0
  %4191 = vmatpush1.msra.mxu0 0.0
  %4192 = vmatprep.mubr.f32.mxu0 0.0
  %4193 = vmatmul.mubr.f32.gmra.mrb[0].mxu0 %v4123
  %v4194 = vpop.f32.mrb[0].mxu0
  %v4195 = vadd.f32 %v2110, %v4194
  %v4196 = vpop.f32.mrb[0].mxu0
  %4197 = vmatprep.mubr.f32.mxu0 0.0
  %4198 = vmatmul.mubr.f32.gmra.mrb[0].mxu0 %v4126
  %v4199 = vpop.f32.mrb[0].mxu0
  %v4200 = vadd.f32 %v2110, %v4199
  %v4201 = vpop.f32.mrb[0].mxu0
  %4202 = vdwg.mxu0
  %v4203 = vmax.f32 %v4195, 0.0
  %v4204 = vmax.f32 %v4200, 0.0
  %4205 = vmatprep.subr.mxu0 0.0
  %4206 = vmatpush1.msra.mxu0 %v43
  %4207 = vmatprep.subr.mxu0 0.0
  %4208 = vmatpush1.msra.mxu0 %v44
  %4209 = vmatprep.subr.mxu0 0.0
  %4210 = vmatpush1.msra.mxu0 %v45
  %4211 = vmatprep.subr.mxu0 0.0
  %4212 = vmatpush1.msra.mxu0 %v46
  %4213 = vmatprep.subr.mxu0 0.0
  %4214 = vmatpush1.msra.mxu0 %v47
  %4215 = vmatprep.subr.mxu0 0.0
  %4216 = vmatpush1.msra.mxu0 %v48
  %4217 = vmatprep.subr.mxu0 0.0
  %4218 = vmatpush1.msra.mxu0 %v49
  %4219 = vmatprep.subr.mxu0 0.0
  %4220 = vmatpush1.msra.mxu0 %v50
  %4221 = vmatprep.subr.mxu0 0.0
  %4222 = vmatpush1.msra.mxu0 %v51
  %4223 = vmatprep.subr.mxu0 0.0
  %4224 = vmatpush1.msra.mxu0 %v52
  %4225 = vmatprep.subr.mxu0 0.0
  %4226 = vmatpush1.msra.mxu0 %v53
  %4227 = vmatprep.subr.mxu0 0.0
  %4228 = vmatpush1.msra.mxu0 %v54
  %4229 = vmatprep.subr.mxu0 0.0
  %4230 = vmatpush1.msra.mxu0 %v55
  %4231 = vmatprep.subr.mxu0 0.0
  %4232 = vmatpush1.msra.mxu0 %v56
  %4233 = vmatprep.subr.mxu0 0.0
  %4234 = vmatpush1.msra.mxu0 %v57
  %4235 = vmatprep.subr.mxu0 0.0
  %4236 = vmatpush1.msra.mxu0 %v58
  %4237 = vmatprep.subr.mxu0 0.0
  %4238 = vmatpush1.msra.mxu0 0.0
  %4239 = vmatprep.subr.mxu0 0.0
  %4240 = vmatpush1.msra.mxu0 0.0
  %4241 = vmatprep.subr.mxu0 0.0
  %4242 = vmatpush1.msra.mxu0 0.0
  %4243 = vmatprep.subr.mxu0 0.0
  %4244 = vmatpush1.msra.mxu0 0.0
  %4245 = vmatprep.subr.mxu0 0.0
  %4246 = vmatpush1.msra.mxu0 0.0
  %4247 = vmatprep.subr.mxu0 0.0
  %4248 = vmatpush1.msra.mxu0 0.0
  %4249 = vmatprep.subr.mxu0 0.0
  %4250 = vmatpush1.msra.mxu0 0.0
  %4251 = vmatprep.subr.mxu0 0.0
  %4252 = vmatpush1.msra.mxu0 0.0
  %4253 = vmatprep.subr.mxu0 0.0
  %4254 = vmatpush1.msra.mxu0 0.0
  %4255 = vmatprep.subr.mxu0 0.0
  %4256 = vmatpush1.msra.mxu0 0.0
  %4257 = vmatprep.subr.mxu0 0.0
  %4258 = vmatpush1.msra.mxu0 0.0
  %4259 = vmatprep.subr.mxu0 0.0
  %4260 = vmatpush1.msra.mxu0 0.0
  %4261 = vmatprep.subr.mxu0 0.0
  %4262 = vmatpush1.msra.mxu0 0.0
  %4263 = vmatprep.subr.mxu0 0.0
  %4264 = vmatpush1.msra.mxu0 0.0
  %4265 = vmatprep.subr.mxu0 0.0
  %4266 = vmatpush1.msra.mxu0 0.0
  %4267 = vmatprep.subr.mxu0 0.0
  %4268 = vmatpush1.msra.mxu0 0.0
  %4269 = vmatprep.mubr.f32.mxu0 0.0
  %4270 = vmatmul.mubr.f32.gmra.mrb[0].mxu0 %v4203
  %v4271 = vpop.f32.mrb[0].mxu0
  %v4272 = vadd.f32 %v2197, %v4271
  %v4273 = vpop.f32.mrb[0].mxu0
  %4274 = vmatprep.mubr.f32.mxu0 0.0
  %4275 = vmatmul.mubr.f32.gmra.mrb[0].mxu0 %v4204
  %v4276 = vpop.f32.mrb[0].mxu0
  %v4277 = vadd.f32 %v2197, %v4276
  %v4278 = vpop.f32.mrb[0].mxu0
  %4279 = vdwg.mxu0
  %v4280 = vadd.f32 %v4120, %v4272
  %v4281 = vadd.f32 %v4121, %v4277
  %v4282 = vsel %vm174, %v4280, 0.0
  %4283 = vadd.xlane.f32.xlu0 %v4282
  %v4284 = vpop.xlane.xlu0 %4283
  %v4285 = vsel %vm174, %v4281, 0.0
  %4286 = vadd.xlane.f32.xlu0 %v4285
  %v4287 = vpop.xlane.xlu0 %4286
  %v4288 = vmul.f32 %v4284, %v2074
  %v4289 = vmul.f32 %v4287, %v2074
  %v4290 = vsub.f32 %v4280, %v4288
  %v4291 = vsub.f32 %v4281, %v4289
  %v4292 = vmul.f32 %v4290, %v4290
  %v4293 = vmul.f32 %v4291, %v4291
  %v4294 = vsel %vm174, %v4292, 0.0
  %4295 = vadd.xlane.f32.xlu0 %v4294
  %v4296 = vpop.xlane.xlu0 %4295
  %v4297 = vsel %vm174, %v4293, 0.0
  %4298 = vadd.xlane.f32.xlu0 %v4297
  %v4299 = vpop.xlane.xlu0 %4298
  %v4300 = vmul.f32 %v4296, %v2074
  %v4301 = vmul.f32 %v4299, %v2074
  %v4302 = vadd.f32 %v4300, 1e-05
  %v4303 = vadd.f32 %v4301, 1e-05
  %v4304 = vrsqrt.pop %v4302
  %v4305 = vrsqrt.pop %v4303
  %v4306 = vmul.f32 %v4290, %v4304
  %v4307 = vmul.f32 %v4291, %v4305
  %v4308 = vmul.f32 %v4306, %v2304
  %v4309 = vmul.f32 %v4307, %v2304
  %v4310 = vadd.f32 %v4308, %v2310
  %v4311 = vadd.f32 %v4309, %v2310
  %v4313 = vsel %vm423, %v71, 0
  %4315 = vmatprep.subr.mxu0 0.0
  %4316 = vmatpush1.msra.mxu0 %v4310
  %4317 = vmatprep.subr.mxu0 0.0
  %4318 = vmatpush1.msra.mxu0 %v4311
  %4319 = vmatprep.subr.mxu0 0.0
  %4320 = vmatpush1.msra.mxu0 0.0
  %4321 = vmatprep.subr.mxu0 0.0
  %4322 = vmatpush1.msra.mxu0 0.0
  %4323 = vmatprep.subr.mxu0 0.0
  %4324 = vmatpush1.msra.mxu0 0.0
  %4325 = vmatprep.subr.mxu0 0.0
  %4326 = vmatpush1.msra.mxu0 0.0
  %4327 = vmatprep.subr.mxu0 0.0
  %4328 = vmatpush1.msra.mxu0 0.0
  %4329 = vmatprep.subr.mxu0 0.0
  %4330 = vmatpush1.msra.mxu0 0.0
  %4331 = vmatprep.subr.mxu0 0.0
  %4332 = vmatpush1.msra.mxu0 0.0
  %4333 = vmatprep.subr.mxu0 0.0
  %4334 = vmatpush1.msra.mxu0 0.0
  %4335 = vmatprep.subr.mxu0 0.0
  %4336 = vmatpush1.msra.mxu0 0.0
  %4337 = vmatprep.subr.mxu0 0.0
  %4338 = vmatpush1.msra.mxu0 0.0
  %4339 = vmatprep.subr.mxu0 0.0
  %4340 = vmatpush1.msra.mxu0 0.0
  %4341 = vmatprep.subr.mxu0 0.0
  %4342 = vmatpush1.msra.mxu0 0.0
  %4343 = vmatprep.subr.mxu0 0.0
  %4344 = vmatpush1.msra.mxu0 0.0
  %4345 = vmatprep.subr.mxu0 0.0
  %4346 = vmatpush1.msra.mxu0 0.0
  %4347 = vmatprep.subr.mxu0 0.0
  %4348 = vmatpush1.msra.mxu0 0.0
  %4349 = vmatprep.subr.mxu0 0.0
  %4350 = vmatpush1.msra.mxu0 0.0
  %4351 = vmatprep.subr.mxu0 0.0
  %4352 = vmatpush1.msra.mxu0 0.0
  %4353 = vmatprep.subr.mxu0 0.0
  %4354 = vmatpush1.msra.mxu0 0.0
  %4355 = vmatprep.subr.mxu0 0.0
  %4356 = vmatpush1.msra.mxu0 0.0
  %4357 = vmatprep.subr.mxu0 0.0
  %4358 = vmatpush1.msra.mxu0 0.0
  %4359 = vmatprep.subr.mxu0 0.0
  %4360 = vmatpush1.msra.mxu0 0.0
  %4361 = vmatprep.subr.mxu0 0.0
  %4362 = vmatpush1.msra.mxu0 0.0
  %4363 = vmatprep.subr.mxu0 0.0
  %4364 = vmatpush1.msra.mxu0 0.0
  %4365 = vmatprep.subr.mxu0 0.0
  %4366 = vmatpush1.msra.mxu0 0.0
  %4367 = vmatprep.subr.mxu0 0.0
  %4368 = vmatpush1.msra.mxu0 0.0
  %4369 = vmatprep.subr.mxu0 0.0
  %4370 = vmatpush1.msra.mxu0 0.0
  %4371 = vmatprep.subr.mxu0 0.0
  %4372 = vmatpush1.msra.mxu0 0.0
  %4373 = vmatprep.subr.mxu0 0.0
  %4374 = vmatpush1.msra.mxu0 0.0
  %4375 = vmatprep.subr.mxu0 0.0
  %4376 = vmatpush1.msra.mxu0 0.0
  %4377 = vmatprep.subr.mxu0 0.0
  %4378 = vmatpush1.msra.mxu0 0.0
  %4379 = vmatprep.mubr.f32.mxu0 0.0
  %4380 = vmatmul.mubr.f32.gmra.mrb[0].mxu0 %v4313
  %v4381 = vpop.f32.mrb[0].mxu0
  %v4382 = vadd.f32 0.0, %v4381
  %v4383 = vpop.f32.mrb[0].mxu0
  %4384 = vdwg.mxu0
  %vm4385 = vcmp.gt.f32.partialorder %v4382, 0.0
  %v4386 = vmin.f32 %v4382, 0.0
  %v4387 = vmul.f32 %v4386, 1.442695
  %v4388 = vpow.pop %v4387
  %v4389 = vsub.f32 %v4388, 1.0
  %v4390 = vmul.f32 %v4389, 1.6732632
  %v4391 = vsel %vm4385, %v4382, %v4390
  %v4392 = vmul.f32 %v4391, 1.050701
  %v4393 = vlaneseq
  %v4394 = vshrl.u32 %v4393, 7
  %v4395 = vsub.s32 2, %v4394
  %v4396 = vrot.slane %v68, %v4395
  %v4398 = vsel %vm174, %v4392, 0
  %4400 = vmatprep.subr.mxu0 0.0
  %4401 = vmatpush1.msra.mxu0 %v63
  %4402 = vmatprep.subr.mxu0 0.0
  %4403 = vmatpush1.msra.mxu0 %v64
  %4404 = vmatprep.subr.mxu0 0.0
  %4405 = vmatpush1.msra.mxu0 %v65
  %4406 = vmatprep.subr.mxu0 0.0
  %4407 = vmatpush1.msra.mxu0 %v66
  %4408 = vmatprep.subr.mxu0 0.0
  %4409 = vmatpush1.msra.mxu0 0.0
  %4410 = vmatprep.subr.mxu0 0.0
  %4411 = vmatpush1.msra.mxu0 0.0
  %4412 = vmatprep.subr.mxu0 0.0
  %4413 = vmatpush1.msra.mxu0 0.0
  %4414 = vmatprep.subr.mxu0 0.0
  %4415 = vmatpush1.msra.mxu0 0.0
  %4416 = vmatprep.subr.mxu0 0.0
  %4417 = vmatpush1.msra.mxu0 0.0
  %4418 = vmatprep.subr.mxu0 0.0
  %4419 = vmatpush1.msra.mxu0 0.0
  %4420 = vmatprep.subr.mxu0 0.0
  %4421 = vmatpush1.msra.mxu0 0.0
  %4422 = vmatprep.subr.mxu0 0.0
  %4423 = vmatpush1.msra.mxu0 0.0
  %4424 = vmatprep.subr.mxu0 0.0
  %4425 = vmatpush1.msra.mxu0 0.0
  %4426 = vmatprep.subr.mxu0 0.0
  %4427 = vmatpush1.msra.mxu0 0.0
  %4428 = vmatprep.subr.mxu0 0.0
  %4429 = vmatpush1.msra.mxu0 0.0
  %4430 = vmatprep.subr.mxu0 0.0
  %4431 = vmatpush1.msra.mxu0 0.0
  %4432 = vmatprep.subr.mxu0 0.0
  %4433 = vmatpush1.msra.mxu0 0.0
  %4434 = vmatprep.subr.mxu0 0.0
  %4435 = vmatpush1.msra.mxu0 0.0
  %4436 = vmatprep.subr.mxu0 0.0
  %4437 = vmatpush1.msra.mxu0 0.0
  %4438 = vmatprep.subr.mxu0 0.0
  %4439 = vmatpush1.msra.mxu0 0.0
  %4440 = vmatprep.subr.mxu0 0.0
  %4441 = vmatpush1.msra.mxu0 0.0
  %4442 = vmatprep.subr.mxu0 0.0
  %4443 = vmatpush1.msra.mxu0 0.0
  %4444 = vmatprep.subr.mxu0 0.0
  %4445 = vmatpush1.msra.mxu0 0.0
  %4446 = vmatprep.subr.mxu0 0.0
  %4447 = vmatpush1.msra.mxu0 0.0
  %4448 = vmatprep.subr.mxu0 0.0
  %4449 = vmatpush1.msra.mxu0 0.0
  %4450 = vmatprep.subr.mxu0 0.0
  %4451 = vmatpush1.msra.mxu0 0.0
  %4452 = vmatprep.subr.mxu0 0.0
  %4453 = vmatpush1.msra.mxu0 0.0
  %4454 = vmatprep.subr.mxu0 0.0
  %4455 = vmatpush1.msra.mxu0 0.0
  %4456 = vmatprep.subr.mxu0 0.0
  %4457 = vmatpush1.msra.mxu0 0.0
  %4458 = vmatprep.subr.mxu0 0.0
  %4459 = vmatpush1.msra.mxu0 0.0
  %4460 = vmatprep.subr.mxu0 0.0
  %4461 = vmatpush1.msra.mxu0 0.0
  %4462 = vmatprep.subr.mxu0 0.0
  %4463 = vmatpush1.msra.mxu0 0.0
  %4464 = vmatprep.mubr.f32.mxu0 0.0
  %4465 = vmatmul.mubr.f32.gmra.mrb[0].mxu0 %v4398
  %v4466 = vpop.f32.mrb[0].mxu0
  %v4467 = vadd.f32 %v4396, %v4466
  %v4468 = vpop.f32.mrb[0].mxu0
  %4469 = vdwg.mxu0
  %4470 = vst [vmem:[%s4] sm:$0xff] %v4467
  // Predicated region
  $region18: #{sentence_classifier_forward.1} parent=0 // pred_check
    _
  $region19: #{sentence_classifier_forward.1} parent=0 // pred_check_branch
    %4472 = sbr.rel (0) target = $region21
  $region20: #{sentence_classifier_forward.1} parent=0 // pred_region
    _
  $region21: #{sentence_classifier_forward.1} parent=0 // pred_fallthru
    _
  // Predicated region
  $region22: #{sentence_classifier_forward.1} parent=0 // pred_check
    _
  $region23: #{sentence_classifier_forward.1} parent=0 // pred_check_branch
    %4474 = sbr.rel (0) target = $region25
  $region24: #{sentence_classifier_forward.1} parent=0 // pred_region
    _
  $region25: #{sentence_classifier_forward.1} parent=0 // pred_fallthru
    _

</llo_original>
